<compile_context>
chip_gen: v6e
topology: v6e:2x2x1
jax: 0.10.0
libtpu: 0.0.40
codegen_flags: <defaults>
</compile_context>

<pallas_src>
import functools

import jax
import jax.numpy as jnp
from jax.experimental import pallas as pl
from jax.experimental.pallas import tpu as pltpu


# ----------------------------------------------------------------------------
# Fused Pallas kernel: 3 x (GCNConv + relu) + Linear head + sigmoid
# ----------------------------------------------------------------------------
def fused_gcn_kernel(adj_ref, h0_ref, w1_ref, b1_ref, w2_ref, b2_ref,
                     w3_ref, b3_ref, wl_ref, bl_ref, out_ref):
    """Whole forward for one graph of the batch (one grid step)."""
    adj = adj_ref[...]                       # [N, N] f32, shared across batch
    h = h0_ref[0]                            # [N, F_in] bf16

    def gcn_layer(h_bf16, w_ref, b_ref):
        # X @ W  (bf16 x bf16 -> f32 acc on the MXU)
        xw = jnp.dot(h_bf16, w_ref[...], preferred_element_type=jnp.float32)
        # A_hat @ (X @ W) + b  (f32 aggregation), then relu in f32
        agg = jnp.dot(adj, xw, preferred_element_type=jnp.float32) + b_ref[...]
        return jnp.maximum(agg, 0.0)         # f32 [N, hidden]

    h = gcn_layer(h, w1_ref, b1_ref)
    h = gcn_layer(h.astype(jnp.bfloat16), w2_ref, b2_ref)
    h = gcn_layer(h.astype(jnp.bfloat16), w3_ref, b3_ref)

    # Head: y = b_lin + sum_n h[n, :] @ W_lin_t[n]  ==  W_lin @ flatten(h) + b.
    # Done node-by-node (N is tiny, static unroll) so no in-kernel reshape of
    # the sublane dim into lanes is needed.
    hb = h.astype(jnp.bfloat16)              # [N, hidden]
    n_nodes = hb.shape[0]
    y = bl_ref[...]                          # [1, P] f32
    for node in range(n_nodes):
        y = y + jnp.dot(hb[node:node + 1, :], wl_ref[node],
                        preferred_element_type=jnp.float32)
    out_ref[0] = 1.0 / (1.0 + jnp.exp(-y))   # sigmoid in f32 (8 outputs: cheap)


def fused_gcn_forward(adj, h0, w1, b1, w2, b2, w3, b3, wl3, bl):
    """adj [N,N] f32, h0 [B,N,F_in] bf16, weights bf16, biases f32 -> [B,1,P] f32."""
    b_sz, n, f_in = h0.shape
    hidden = w1.shape[1]
    p = wl3.shape[2]
    return pl.pallas_call(
        fused_gcn_kernel,
        grid=(b_sz,),
        in_specs=[
            pl.BlockSpec((n, n), lambda b: (0, 0)),            # adj (resident)
            pl.BlockSpec((1, n, f_in), lambda b: (b, 0, 0)),   # h0 per graph
            pl.BlockSpec((f_in, hidden), lambda b: (0, 0)),    # w1
            pl.BlockSpec((1, hidden), lambda b: (0, 0)),       # b1
            pl.BlockSpec((hidden, hidden), lambda b: (0, 0)),  # w2
            pl.BlockSpec((1, hidden), lambda b: (0, 0)),       # b2
            pl.BlockSpec((hidden, hidden), lambda b: (0, 0)),  # w3
            pl.BlockSpec((1, hidden), lambda b: (0, 0)),       # b3
            pl.BlockSpec((n, hidden, p), lambda b: (0, 0, 0)), # head weight
            pl.BlockSpec((1, p), lambda b: (0, 0)),            # head bias
        ],
        out_specs=pl.BlockSpec((1, 1, p), lambda b: (b, 0, 0)),
        out_shape=jax.ShapeDtypeStruct((b_sz, 1, p), jnp.float32),
        compiler_params=pltpu.CompilerParams(
            dimension_semantics=("parallel",)),  # batch axis -> both TCs on v7x
    )(adj, h0, w1, b1, w2, b2, w3, b3, wl3, bl)


# ----------------------------------------------------------------------------
# Glue: normalized adjacency, parameters, forward wrappers
# ----------------------------------------------------------------------------
def build_normalized_adj(edge_index, num_nodes):
    """A_hat = D^{-1/2} (A + I) D^{-1/2}, matching torch_geometric gcn_norm.

    No dedupe of duplicate edges; self loops are added only where missing
    (add_remaining_self_loops semantics).  Built once per graph topology.
    """
    src = edge_index[0]
    dst = edge_index[1]
    a = jnp.zeros((num_nodes, num_nodes), jnp.float32).at[dst, src].add(1.0)
    a = a + jnp.diag(jnp.where(jnp.diagonal(a) == 0.0, 1.0, 0.0))
    deg = a.sum(axis=1)
    d_inv_sqrt = jnp.where(deg > 0.0, 1.0 / jnp.sqrt(deg), 0.0)
    return d_inv_sqrt[:, None] * a * d_inv_sqrt[None, :]


def init_params(key, *, embedding_dim, steps_memorized, hidden, pop_size):
    ks = jax.random.split(key, 9)
    f_in = embedding_dim * steps_memorized
    scale = 0.1
    # nn.Linear(hidden * pop_size, pop_size): torch weight layout [P, hidden*P].
    w_lin = jax.random.normal(ks[7], (pop_size, hidden * pop_size),
                              jnp.float32) * scale
    # Re-layout to [node, feature, out] so the head is a per-node matmul epilogue.
    w_lin3 = jnp.transpose(w_lin.reshape(pop_size, pop_size, hidden), (1, 2, 0))
    params = {
        "emb": jax.random.normal(ks[0], (3, embedding_dim), jnp.float32) * scale,
        "w1": (jax.random.normal(ks[1], (f_in, hidden), jnp.float32)
               * scale).astype(jnp.bfloat16),
        "b1": jax.random.normal(ks[2], (1, hidden), jnp.float32) * scale,
        "w2": (jax.random.normal(ks[3], (hidden, hidden), jnp.float32)
               * scale).astype(jnp.bfloat16),
        "b2": jax.random.normal(ks[4], (1, hidden), jnp.float32) * scale,
        "w3": (jax.random.normal(ks[5], (hidden, hidden), jnp.float32)
               * scale).astype(jnp.bfloat16),
        "b3": jax.random.normal(ks[6], (1, hidden), jnp.float32) * scale,
        "w_lin3": w_lin3.astype(jnp.bfloat16),
        "b_lin": jax.random.normal(ks[8], (1, pop_size), jnp.float32) * scale,
    }
    return params


@jax.jit
def gcn_forward_batched(params, adj, x_labels_batch):
    """B independent forwards of the GCN (same graph topology, same weights)."""
    b_sz, n = x_labels_batch.shape
    # Embedding lookup + view(N, -1)  (tiny XLA glue; one gather per call)
    h0 = jnp.take(params["emb"], x_labels_batch, axis=0).reshape(b_sz, n, -1)
    h0 = h0.astype(jnp.bfloat16)
    out = fused_gcn_forward(adj, h0,
                            params["w1"], params["b1"],
                            params["w2"], params["b2"],
                            params["w3"], params["b3"],
                            params["w_lin3"], params["b_lin"])
    return out.reshape(b_sz, -1)             # [B, pop_size]


def gcn_forward(params, adj, x_labels):
    """Single-graph forward, identical semantics to GCN.forward (eval mode)."""
    return gcn_forward_batched(params, adj, x_labels[None, :])[0]


def gcn_reference(params, adj, x_labels_batch):
    """Pure-JAX reference with the same numerics (bf16 weights, f32 accum)."""
    b_sz, n = x_labels_batch.shape
    h = jnp.take(params["emb"], x_labels_batch, axis=0).reshape(b_sz, n, -1)
    h = h.astype(jnp.bfloat16)
    for wk, bk in (("w1", "b1"), ("w2", "b2"), ("w3", "b3")):
        xw = jnp.einsum("bnf,fh->bnh", h, params[wk],
                        preferred_element_type=jnp.float32)
        agg = jnp.einsum("nm,bmh->bnh", adj, xw,
                         preferred_element_type=jnp.float32) + params[bk]
        h = jnp.maximum(agg, 0.0).astype(jnp.bfloat16)
    y = jnp.einsum("bnf,nfp->bp", h, params["w_lin3"],
                   preferred_element_type=jnp.float32) + params["b_lin"]
    return 1.0 / (1.0 + jnp.exp(-y))


# ----------------------------------------------------------------------------
# Example run
# ----------------------------------------------------------------------------
if __name__ == "__main__":
    POP_SIZE = 8          # number of nodes (== pop_size, required by 'linear' head)
    EMB_DIM = 128         # embedding_dim
    STEPS = 1             # steps_memorized
    HIDDEN = 512          # hard-coded in the module
    BATCH = 4             # independent forwards batched into one kernel call

    key = jax.random.PRNGKey(0)
    k_params, k_labels = jax.random.split(key)

    params = init_params(k_params, embedding_dim=EMB_DIM, steps_memorized=STEPS,
                         hidden=HIDDEN, pop_size=POP_SIZE)

    # data.x: node labels in {0, 1, 2}; a batch of them.
    x_labels = jax.random.randint(k_labels, (BATCH, POP_SIZE), 0, 3,
                                  dtype=jnp.int32)

    # data.edge_index: undirected ring graph, shape [2, 2*POP_SIZE]
    idx = jnp.arange(POP_SIZE, dtype=jnp.int32)
    nxt = (idx + 1) % POP_SIZE
    edge_index = jnp.stack(
        [jnp.concatenate([idx, nxt]), jnp.concatenate([nxt, idx])], axis=0
    )

    # A_hat is built once (edge_index static) and reused for every forward.
    adj = build_normalized_adj(edge_index, POP_SIZE)

    out = gcn_forward_batched(params, adj, x_labels)
    out = jax.block_until_ready(out)

    # Correctness checks against a pure-JAX reference.
    ref = gcn_reference(params, adj, x_labels)
    assert out.shape == (BATCH, POP_SIZE)
    assert bool(jnp.all(jnp.isfinite(out)))
    assert bool(jnp.all((out > 0.0) & (out < 1.0)))
    assert bool(jnp.allclose(out, ref, atol=2e-3, rtol=2e-2))

    # Single-graph path (exact semantics of the torch module's forward).
    single = gcn_forward(params, adj, x_labels[0])
    single = jax.block_until_ready(single)
    assert single.shape == (POP_SIZE,)
    assert bool(jnp.allclose(single, out[0], atol=1e-5))

    print("KERNEL_OK")
</pallas_src>

<mosaic_0001>
module attributes {stable_mosaic.version = 11 : i64} {
  func.func @fused_gcn_kernel(%arg0: i32, %arg1: memref<8x8xf32, #tpu.memory_space<vmem>>, %arg2: memref<1x8x128xbf16, #tpu.memory_space<vmem>>, %arg3: memref<128x512xbf16, #tpu.memory_space<vmem>>, %arg4: memref<1x512xf32, #tpu.memory_space<vmem>>, %arg5: memref<512x512xbf16, #tpu.memory_space<vmem>>, %arg6: memref<1x512xf32, #tpu.memory_space<vmem>>, %arg7: memref<512x512xbf16, #tpu.memory_space<vmem>>, %arg8: memref<1x512xf32, #tpu.memory_space<vmem>>, %arg9: memref<8x512x8xbf16, #tpu.memory_space<vmem>>, %arg10: memref<1x8xf32, #tpu.memory_space<vmem>>, %arg11: memref<1x1x8xf32, #tpu.memory_space<vmem>>) attributes {dimension_semantics = [#tpu.dimension_semantics<parallel>], iteration_bounds = array<i64: 4>, scalar_prefetch = 0 : i64, scratch_operands = 0 : i64, tpu.core_type = #tpu.core_type<tc>, window_params = [{pipeline_mode = #tpu.pipeline_mode<synchronous>, transform_indices = @transform_0, window_bounds = array<i64: 8, 8>}, {transform_indices = @transform_1, window_bounds = array<i64: 1, 8, 128>}, {pipeline_mode = #tpu.pipeline_mode<synchronous>, transform_indices = @transform_2, window_bounds = array<i64: 128, 512>}, {pipeline_mode = #tpu.pipeline_mode<synchronous>, transform_indices = @transform_3, window_bounds = array<i64: 1, 512>}, {pipeline_mode = #tpu.pipeline_mode<synchronous>, transform_indices = @transform_4, window_bounds = array<i64: 512, 512>}, {pipeline_mode = #tpu.pipeline_mode<synchronous>, transform_indices = @transform_5, window_bounds = array<i64: 1, 512>}, {pipeline_mode = #tpu.pipeline_mode<synchronous>, transform_indices = @transform_6, window_bounds = array<i64: 512, 512>}, {pipeline_mode = #tpu.pipeline_mode<synchronous>, transform_indices = @transform_7, window_bounds = array<i64: 1, 512>}, {pipeline_mode = #tpu.pipeline_mode<synchronous>, transform_indices = @transform_8, window_bounds = array<i64: 8, 512, 8>}, {pipeline_mode = #tpu.pipeline_mode<synchronous>, transform_indices = @transform_9, window_bounds = array<i64: 1, 8>}, {transform_indices = @transform_10, window_bounds = array<i64: 1, 1, 8>}]} {
    %c0 = arith.constant 0 : index
    %c0_0 = arith.constant 0 : index
    %0 = vector.load %arg1[%c0, %c0_0] : memref<8x8xf32, #tpu.memory_space<vmem>>, vector<8x8xf32>
    %c0_1 = arith.constant 0 : index
    %c0_2 = arith.constant 0 : index
    %c0_3 = arith.constant 0 : index
    %1 = vector.load %arg2[%c0_1, %c0_2, %c0_3] : memref<1x8x128xbf16, #tpu.memory_space<vmem>>, vector<1x8x128xbf16>
    %2 = vector.shape_cast %1 : vector<1x8x128xbf16> to vector<8x128xbf16>
    %c0_4 = arith.constant 0 : index
    %c0_5 = arith.constant 0 : index
    %3 = vector.load %arg3[%c0_4, %c0_5] : memref<128x512xbf16, #tpu.memory_space<vmem>>, vector<128x512xbf16>
    %cst = arith.constant dense<0.000000e+00> : vector<8x512xf32>
    %4 = tpu.matmul %2, %3, %cst {dimension_numbers = #tpu.dot_dimension_numbers<[1], [0], [0], [1], [0, 0, 1, 1], [], []>} : vector<8x128xbf16>, vector<128x512xbf16>, vector<8x512xf32> -> vector<8x512xf32>
    %cst_6 = arith.constant dense<0.000000e+00> : vector<8x512xf32>
    %5 = tpu.matmul %0, %4, %cst_6 {dimension_numbers = #tpu.dot_dimension_numbers<[1], [0], [0], [1], [0, 0, 1, 1], [], []>} : vector<8x8xf32>, vector<8x512xf32>, vector<8x512xf32> -> vector<8x512xf32>
    %c0_7 = arith.constant 0 : index
    %c0_8 = arith.constant 0 : index
    %6 = vector.load %arg4[%c0_7, %c0_8] : memref<1x512xf32, #tpu.memory_space<vmem>>, vector<1x512xf32>
    %7 = vector.broadcast %6 : vector<1x512xf32> to vector<8x512xf32>
    %8 = arith.addf %5, %7 : vector<8x512xf32>
    %cst_9 = arith.constant 0.000000e+00 : f32
    %9 = vector.broadcast %cst_9 : f32 to vector<8x512xf32>
    %10 = arith.maximumf %8, %9 : vector<8x512xf32>
    %11 = arith.truncf %10 : vector<8x512xf32> to vector<8x512xbf16>
    %c0_10 = arith.constant 0 : index
    %c0_11 = arith.constant 0 : index
    %12 = vector.load %arg5[%c0_10, %c0_11] : memref<512x512xbf16, #tpu.memory_space<vmem>>, vector<512x512xbf16>
    %cst_12 = arith.constant dense<0.000000e+00> : vector<8x512xf32>
    %13 = tpu.matmul %11, %12, %cst_12 {dimension_numbers = #tpu.dot_dimension_numbers<[1], [0], [0], [1], [0, 0, 1, 1], [], []>} : vector<8x512xbf16>, vector<512x512xbf16>, vector<8x512xf32> -> vector<8x512xf32>
    %cst_13 = arith.constant dense<0.000000e+00> : vector<8x512xf32>
    %14 = tpu.matmul %0, %13, %cst_13 {dimension_numbers = #tpu.dot_dimension_numbers<[1], [0], [0], [1], [0, 0, 1, 1], [], []>} : vector<8x8xf32>, vector<8x512xf32>, vector<8x512xf32> -> vector<8x512xf32>
    %c0_14 = arith.constant 0 : index
    %c0_15 = arith.constant 0 : index
    %15 = vector.load %arg6[%c0_14, %c0_15] : memref<1x512xf32, #tpu.memory_space<vmem>>, vector<1x512xf32>
    %16 = vector.broadcast %15 : vector<1x512xf32> to vector<8x512xf32>
    %17 = arith.addf %14, %16 : vector<8x512xf32>
    %cst_16 = arith.constant 0.000000e+00 : f32
    %18 = vector.broadcast %cst_16 : f32 to vector<8x512xf32>
    %19 = arith.maximumf %17, %18 : vector<8x512xf32>
    %20 = arith.truncf %19 : vector<8x512xf32> to vector<8x512xbf16>
    %c0_17 = arith.constant 0 : index
    %c0_18 = arith.constant 0 : index
    %21 = vector.load %arg7[%c0_17, %c0_18] : memref<512x512xbf16, #tpu.memory_space<vmem>>, vector<512x512xbf16>
    %cst_19 = arith.constant dense<0.000000e+00> : vector<8x512xf32>
    %22 = tpu.matmul %20, %21, %cst_19 {dimension_numbers = #tpu.dot_dimension_numbers<[1], [0], [0], [1], [0, 0, 1, 1], [], []>} : vector<8x512xbf16>, vector<512x512xbf16>, vector<8x512xf32> -> vector<8x512xf32>
    %cst_20 = arith.constant dense<0.000000e+00> : vector<8x512xf32>
    %23 = tpu.matmul %0, %22, %cst_20 {dimension_numbers = #tpu.dot_dimension_numbers<[1], [0], [0], [1], [0, 0, 1, 1], [], []>} : vector<8x8xf32>, vector<8x512xf32>, vector<8x512xf32> -> vector<8x512xf32>
    %c0_21 = arith.constant 0 : index
    %c0_22 = arith.constant 0 : index
    %24 = vector.load %arg8[%c0_21, %c0_22] : memref<1x512xf32, #tpu.memory_space<vmem>>, vector<1x512xf32>
    %25 = vector.broadcast %24 : vector<1x512xf32> to vector<8x512xf32>
    %26 = arith.addf %23, %25 : vector<8x512xf32>
    %cst_23 = arith.constant 0.000000e+00 : f32
    %27 = vector.broadcast %cst_23 : f32 to vector<8x512xf32>
    %28 = arith.maximumf %26, %27 : vector<8x512xf32>
    %29 = arith.truncf %28 : vector<8x512xf32> to vector<8x512xbf16>
    %c0_24 = arith.constant 0 : index
    %c0_25 = arith.constant 0 : index
    %30 = vector.load %arg10[%c0_24, %c0_25] : memref<1x8xf32, #tpu.memory_space<vmem>>, vector<1x8xf32>
    %31 = vector.extract_strided_slice %29 {offsets = [0, 0], sizes = [1, 512], strides = [1, 1]} : vector<8x512xbf16> to vector<1x512xbf16>
    %c0_26 = arith.constant 0 : index
    %c0_27 = arith.constant 0 : index
    %c0_28 = arith.constant 0 : index
    %32 = vector.load %arg9[%c0_26, %c0_27, %c0_28] : memref<8x512x8xbf16, #tpu.memory_space<vmem>>, vector<1x512x8xbf16>
    %33 = vector.shape_cast %32 : vector<1x512x8xbf16> to vector<512x8xbf16>
    %cst_29 = arith.constant dense<0.000000e+00> : vector<1x8xf32>
    %34 = tpu.matmul %31, %33, %cst_29 {dimension_numbers = #tpu.dot_dimension_numbers<[1], [0], [0], [1], [0, 0, 1, 1], [], []>} : vector<1x512xbf16>, vector<512x8xbf16>, vector<1x8xf32> -> vector<1x8xf32>
    %35 = arith.addf %30, %34 : vector<1x8xf32>
    %36 = vector.extract_strided_slice %29 {offsets = [1, 0], sizes = [1, 512], strides = [1, 1]} : vector<8x512xbf16> to vector<1x512xbf16>
    %c1 = arith.constant 1 : index
    %c0_30 = arith.constant 0 : index
    %c0_31 = arith.constant 0 : index
    %37 = vector.load %arg9[%c1, %c0_30, %c0_31] : memref<8x512x8xbf16, #tpu.memory_space<vmem>>, vector<1x512x8xbf16>
    %38 = vector.shape_cast %37 : vector<1x512x8xbf16> to vector<512x8xbf16>
    %cst_32 = arith.constant dense<0.000000e+00> : vector<1x8xf32>
    %39 = tpu.matmul %36, %38, %cst_32 {dimension_numbers = #tpu.dot_dimension_numbers<[1], [0], [0], [1], [0, 0, 1, 1], [], []>} : vector<1x512xbf16>, vector<512x8xbf16>, vector<1x8xf32> -> vector<1x8xf32>
    %40 = arith.addf %35, %39 : vector<1x8xf32>
    %41 = vector.extract_strided_slice %29 {offsets = [2, 0], sizes = [1, 512], strides = [1, 1]} : vector<8x512xbf16> to vector<1x512xbf16>
    %c2 = arith.constant 2 : index
    %c0_33 = arith.constant 0 : index
    %c0_34 = arith.constant 0 : index
    %42 = vector.load %arg9[%c2, %c0_33, %c0_34] : memref<8x512x8xbf16, #tpu.memory_space<vmem>>, vector<1x512x8xbf16>
    %43 = vector.shape_cast %42 : vector<1x512x8xbf16> to vector<512x8xbf16>
    %cst_35 = arith.constant dense<0.000000e+00> : vector<1x8xf32>
    %44 = tpu.matmul %41, %43, %cst_35 {dimension_numbers = #tpu.dot_dimension_numbers<[1], [0], [0], [1], [0, 0, 1, 1], [], []>} : vector<1x512xbf16>, vector<512x8xbf16>, vector<1x8xf32> -> vector<1x8xf32>
    %45 = arith.addf %40, %44 : vector<1x8xf32>
    %46 = vector.extract_strided_slice %29 {offsets = [3, 0], sizes = [1, 512], strides = [1, 1]} : vector<8x512xbf16> to vector<1x512xbf16>
    %c3 = arith.constant 3 : index
    %c0_36 = arith.constant 0 : index
    %c0_37 = arith.constant 0 : index
    %47 = vector.load %arg9[%c3, %c0_36, %c0_37] : memref<8x512x8xbf16, #tpu.memory_space<vmem>>, vector<1x512x8xbf16>
    %48 = vector.shape_cast %47 : vector<1x512x8xbf16> to vector<512x8xbf16>
    %cst_38 = arith.constant dense<0.000000e+00> : vector<1x8xf32>
    %49 = tpu.matmul %46, %48, %cst_38 {dimension_numbers = #tpu.dot_dimension_numbers<[1], [0], [0], [1], [0, 0, 1, 1], [], []>} : vector<1x512xbf16>, vector<512x8xbf16>, vector<1x8xf32> -> vector<1x8xf32>
    %50 = arith.addf %45, %49 : vector<1x8xf32>
    %51 = vector.extract_strided_slice %29 {offsets = [4, 0], sizes = [1, 512], strides = [1, 1]} : vector<8x512xbf16> to vector<1x512xbf16>
    %c4 = arith.constant 4 : index
    %c0_39 = arith.constant 0 : index
    %c0_40 = arith.constant 0 : index
    %52 = vector.load %arg9[%c4, %c0_39, %c0_40] : memref<8x512x8xbf16, #tpu.memory_space<vmem>>, vector<1x512x8xbf16>
    %53 = vector.shape_cast %52 : vector<1x512x8xbf16> to vector<512x8xbf16>
    %cst_41 = arith.constant dense<0.000000e+00> : vector<1x8xf32>
    %54 = tpu.matmul %51, %53, %cst_41 {dimension_numbers = #tpu.dot_dimension_numbers<[1], [0], [0], [1], [0, 0, 1, 1], [], []>} : vector<1x512xbf16>, vector<512x8xbf16>, vector<1x8xf32> -> vector<1x8xf32>
    %55 = arith.addf %50, %54 : vector<1x8xf32>
    %56 = vector.extract_strided_slice %29 {offsets = [5, 0], sizes = [1, 512], strides = [1, 1]} : vector<8x512xbf16> to vector<1x512xbf16>
    %c5 = arith.constant 5 : index
    %c0_42 = arith.constant 0 : index
    %c0_43 = arith.constant 0 : index
    %57 = vector.load %arg9[%c5, %c0_42, %c0_43] : memref<8x512x8xbf16, #tpu.memory_space<vmem>>, vector<1x512x8xbf16>
    %58 = vector.shape_cast %57 : vector<1x512x8xbf16> to vector<512x8xbf16>
    %cst_44 = arith.constant dense<0.000000e+00> : vector<1x8xf32>
    %59 = tpu.matmul %56, %58, %cst_44 {dimension_numbers = #tpu.dot_dimension_numbers<[1], [0], [0], [1], [0, 0, 1, 1], [], []>} : vector<1x512xbf16>, vector<512x8xbf16>, vector<1x8xf32> -> vector<1x8xf32>
    %60 = arith.addf %55, %59 : vector<1x8xf32>
    %61 = vector.extract_strided_slice %29 {offsets = [6, 0], sizes = [1, 512], strides = [1, 1]} : vector<8x512xbf16> to vector<1x512xbf16>
    %c6 = arith.constant 6 : index
    %c0_45 = arith.constant 0 : index
    %c0_46 = arith.constant 0 : index
    %62 = vector.load %arg9[%c6, %c0_45, %c0_46] : memref<8x512x8xbf16, #tpu.memory_space<vmem>>, vector<1x512x8xbf16>
    %63 = vector.shape_cast %62 : vector<1x512x8xbf16> to vector<512x8xbf16>
    %cst_47 = arith.constant dense<0.000000e+00> : vector<1x8xf32>
    %64 = tpu.matmul %61, %63, %cst_47 {dimension_numbers = #tpu.dot_dimension_numbers<[1], [0], [0], [1], [0, 0, 1, 1], [], []>} : vector<1x512xbf16>, vector<512x8xbf16>, vector<1x8xf32> -> vector<1x8xf32>
    %65 = arith.addf %60, %64 : vector<1x8xf32>
    %66 = vector.extract_strided_slice %29 {offsets = [7, 0], sizes = [1, 512], strides = [1, 1]} : vector<8x512xbf16> to vector<1x512xbf16>
    %c7 = arith.constant 7 : index
    %c0_48 = arith.constant 0 : index
    %c0_49 = arith.constant 0 : index
    %67 = vector.load %arg9[%c7, %c0_48, %c0_49] : memref<8x512x8xbf16, #tpu.memory_space<vmem>>, vector<1x512x8xbf16>
    %68 = vector.shape_cast %67 : vector<1x512x8xbf16> to vector<512x8xbf16>
    %cst_50 = arith.constant dense<0.000000e+00> : vector<1x8xf32>
    %69 = tpu.matmul %66, %68, %cst_50 {dimension_numbers = #tpu.dot_dimension_numbers<[1], [0], [0], [1], [0, 0, 1, 1], [], []>} : vector<1x512xbf16>, vector<512x8xbf16>, vector<1x8xf32> -> vector<1x8xf32>
    %70 = arith.addf %65, %69 : vector<1x8xf32>
    %cst_51 = arith.constant 0.000000e+00 : f32
    %71 = vector.broadcast %cst_51 : f32 to vector<1x8xf32>
    %72 = arith.subf %71, %70 : vector<1x8xf32>
    %73 = math.exp %72 : vector<1x8xf32>
    %cst_52 = arith.constant 1.000000e+00 : f32
    %74 = vector.broadcast %cst_52 : f32 to vector<1x8xf32>
    %75 = arith.addf %74, %73 : vector<1x8xf32>
    %cst_53 = arith.constant 1.000000e+00 : f32
    %76 = vector.broadcast %cst_53 : f32 to vector<1x8xf32>
    %77 = arith.divf %76, %75 : vector<1x8xf32>
    %c0_54 = arith.constant 0 : index
    %c0_55 = arith.constant 0 : index
    %c0_56 = arith.constant 0 : index
    %78 = vector.load %arg11[%c0_54, %c0_55, %c0_56] : memref<1x1x8xf32, #tpu.memory_space<vmem>>, vector<1x1x8xf32>
    %79 = vector.shape_cast %78 : vector<1x1x8xf32> to vector<1x8xf32>
    %80 = vector.shape_cast %77 : vector<1x8xf32> to vector<1x1x8xf32>
    tpu.vector_store %arg11[%c0_54, %c0_55, %c0_56], %80 {strides = array<i32>} : memref<1x1x8xf32, #tpu.memory_space<vmem>>, vector<1x1x8xf32>,
    return
  }
  func.func @transform_0(%arg0: i32) -> (i32, i32) {
    %c0_i32 = arith.constant 0 : i32
    %c0_i32_0 = arith.constant 0 : i32
    %c0_i32_1 = arith.constant 0 : i32
    return %c0_i32, %c0_i32_0 : i32, i32
  }
  func.func @transform_1(%arg0: i32) -> (i32, i32, i32) {
    %c0_i32 = arith.constant 0 : i32
    %c0_i32_0 = arith.constant 0 : i32
    %c0_i32_1 = arith.constant 0 : i32
    return %arg0, %c0_i32, %c0_i32_0 : i32, i32, i32
  }
  func.func @transform_2(%arg0: i32) -> (i32, i32) {
    %c0_i32 = arith.constant 0 : i32
    %c0_i32_0 = arith.constant 0 : i32
    %c0_i32_1 = arith.constant 0 : i32
    return %c0_i32, %c0_i32_0 : i32, i32
  }
  func.func @transform_3(%arg0: i32) -> (i32, i32) {
    %c0_i32 = arith.constant 0 : i32
    %c0_i32_0 = arith.constant 0 : i32
    %c0_i32_1 = arith.constant 0 : i32
    return %c0_i32, %c0_i32_0 : i32, i32
  }
  func.func @transform_4(%arg0: i32) -> (i32, i32) {
    %c0_i32 = arith.constant 0 : i32
    %c0_i32_0 = arith.constant 0 : i32
    %c0_i32_1 = arith.constant 0 : i32
    return %c0_i32, %c0_i32_0 : i32, i32
  }
  func.func @transform_5(%arg0: i32) -> (i32, i32) {
    %c0_i32 = arith.constant 0 : i32
    %c0_i32_0 = arith.constant 0 : i32
    %c0_i32_1 = arith.constant 0 : i32
    return %c0_i32, %c0_i32_0 : i32, i32
  }
  func.func @transform_6(%arg0: i32) -> (i32, i32) {
    %c0_i32 = arith.constant 0 : i32
    %c0_i32_0 = arith.constant 0 : i32
    %c0_i32_1 = arith.constant 0 : i32
    return %c0_i32, %c0_i32_0 : i32, i32
  }
  func.func @transform_7(%arg0: i32) -> (i32, i32) {
    %c0_i32 = arith.constant 0 : i32
    %c0_i32_0 = arith.constant 0 : i32
    %c0_i32_1 = arith.constant 0 : i32
    return %c0_i32, %c0_i32_0 : i32, i32
  }
  func.func @transform_8(%arg0: i32) -> (i32, i32, i32) {
    %c0_i32 = arith.constant 0 : i32
    %c0_i32_0 = arith.constant 0 : i32
    %c0_i32_1 = arith.constant 0 : i32
    %c0_i32_2 = arith.constant 0 : i32
    return %c0_i32, %c0_i32_0, %c0_i32_1 : i32, i32, i32
  }
  func.func @transform_9(%arg0: i32) -> (i32, i32) {
    %c0_i32 = arith.constant 0 : i32
    %c0_i32_0 = arith.constant 0 : i32
    %c0_i32_1 = arith.constant 0 : i32
    return %c0_i32, %c0_i32_0 : i32, i32
  }
  func.func @transform_10(%arg0: i32) -> (i32, i32, i32) {
    %c0_i32 = arith.constant 0 : i32
    %c0_i32_0 = arith.constant 0 : i32
    %c0_i32_1 = arith.constant 0 : i32
    return %arg0, %c0_i32, %c0_i32_0 : i32, i32, i32
  }
}

</mosaic_0001>

<llo_original>
// kernel: gcn_forward_batched.1
$region0: #{gcn_forward_batched.1}
  #allocation0 [shape = 'u32[]', space=smem, size = 0x4, offset = 0x4, fixed_abs, tag = 'smem constant byte address 0x4 - core index']
  #allocation1 [shape = 'u32[144,128]{1,0:T(1,128)}', space=vmem, size = 0x12000, scoped, tag = 'internal scratch']
  %s0 = inlined_call_operand.vmem [shape: f32[8,8], index: 0, kind: input, shape index: {}]
  %s1 = inlined_call_operand.vmem [shape: bf16[4,8,128], index: 1, kind: input, shape index: {}]
  %s2 = inlined_call_operand.vmem [shape: bf16[128,512], index: 2, kind: input, shape index: {}]
  %s3 = inlined_call_operand.vmem [shape: f32[1,512], index: 3, kind: input, shape index: {}]
  %s4 = inlined_call_operand.vmem [shape: bf16[512,512], index: 4, kind: input, shape index: {}]
  %s5 = inlined_call_operand.vmem [shape: f32[1,512], index: 5, kind: input, shape index: {}]
  %s6 = inlined_call_operand.vmem [shape: bf16[512,512], index: 6, kind: input, shape index: {}]
  %s7 = inlined_call_operand.vmem [shape: f32[1,512], index: 7, kind: input, shape index: {}]
  %s8 = inlined_call_operand.vmem [shape: bf16[8,512,8], index: 8, kind: input, shape index: {}]
  %s9 = inlined_call_operand.vmem [shape: f32[1,8], index: 9, kind: input, shape index: {}]
  %s10 = inlined_call_operand.hbm [shape: f32[4,1,8], index: 10, kind: output, shape index: {}]
  %s11 = sld [smem:[#allocation0]]
  $region73: #{gcn_forward_batched.1} parent=0
    _
  %s13 = ssub.s32 1, %s11
  %s14 = scalar_select 0, %s13, %s11
  $region1: #{gcn_forward_batched.1} parent=0
    #allocation2 [shape = 'u8[1024]{0}', space=vmem, size = 0x400, scoped, tag = 'output window, operand 0']
    #allocation3 [shape = 's32[2]{0}', space=sflag, size = 0x8, scoped, tag = 'scoped memory for gcn_forward_batched.1']
    %15 = vsyncpa [#allocation3], 0
    %s16 = scalar_lea.sflag [#allocation3], 1
    %17 = vsyncpa %s16, 0
    loop: start=0, step=1, limit=6
    $region2: #{gcn_forward_batched.1} parent=1 // loop_pre_header
      _
    $region3: #{gcn_forward_batched.1} parent=1 // loop_header
      %s19 = sphi 0, %s23
      %p20 = scmp.ge.s32.totalorder %s19, 6
      %s27 = sphi 0, %s27
      %s29 = sphi 0, %s27
      %s30 = sphi 0, %s29
      %s44 = sphi 0, %s30
      %s50 = sphi 0, %s52
      %s53 = sphi 0, %s50
      %s54 = sphi 0, %s53
      %s70 = sphi 0, %s54
      %s74 = sphi 0, %s74
      %s76 = sphi 0, %s74
      %s77 = sphi 0, %s76
      %s91 = sphi 0, %s77
      %s95 = sphi 0, %s95
      %s97 = sphi 0, %s95
      %s98 = sphi 0, %s97
      %s112 = sphi 0, %s98
      %s116 = sphi 0, %s116
      %s118 = sphi 0, %s116
      %s119 = sphi 0, %s118
      %s133 = sphi 0, %s119
      %s137 = sphi 0, %s137
      %s139 = sphi 0, %s137
      %s140 = sphi 0, %s139
      %s154 = sphi 0, %s140
      %s158 = sphi 0, %s158
      %s160 = sphi 0, %s158
      %s161 = sphi 0, %s160
      %s175 = sphi 0, %s161
      %s179 = sphi 0, %s179
      %s181 = sphi 0, %s179
      %s182 = sphi 0, %s181
      %s196 = sphi 0, %s182
      %s200 = sphi 0, %s200
      %s202 = sphi 0, %s200
      %s203 = sphi 0, %s202
      %s217 = sphi 0, %s203
      %s221 = sphi 0, %s221
      %s223 = sphi 0, %s221
      %s224 = sphi 0, %s223
      %s238 = sphi 0, %s224
      %s244 = sphi 0, %s246
      %s247 = sphi 0, %s244
      %s248 = sphi 0, %s247
      %s264 = sphi 0, %s248
    $region4: #{gcn_forward_batched.1} parent=1 // loop_header_branch
      %22 = sbr.rel (%p20) target = $region8
    $region5: #{gcn_forward_batched.1} parent=1 // loop_body
      %s24 = ssub.s32 %s19, 1
      %s25 = ssub.s32 %s19, 2
      %s26 = sadd.s32 %s19, 1
      %s28 = sadd.s32 %s27, 1
      %p31 = scmp.eq.s32.totalorder %s19, 3
      %p32 = scmp.ne.s32.totalorder %s27, %s29
      %p33 = scmp.eq.s32.totalorder %s19, 0
      %p34 = por %p32, %p33
      %p35 = scmp.ne.s32.totalorder %s27, %s29
      %p36 = scmp.eq.s32.totalorder %s24, 3
      %p37 = por %p35, %p36
      %p38 = scmp.ne.s32.totalorder %s29, %s30
      %p39 = scmp.eq.s32.totalorder %s24, 0
      %p40 = por %p38, %p39
      %p41 = scmp.ne.s32.totalorder %s29, %s30
      %p42 = scmp.eq.s32.totalorder %s25, 3
      %p43 = por %p41, %p42
      %p45 = scmp.ne.s32.totalorder %s30, %s44
      %p46 = scmp.eq.s32.totalorder %s25, 0
      %p47 = por %p45, %p46
      %s48 = ssub.s32 %s19, %s26
      %p49 = scmp.eq.s32.totalorder %s48, 0
      %s51 = sadd.s32 %s50, 1
      %s52 = scalar_select %p49, %s50, %s51
      %p55 = pneg %p49
      %p56 = scmp.eq.s32.totalorder %s19, 3
      %p57 = por %p55, %p56
      %p58 = scmp.ne.s32.totalorder %s50, %s53
      %p59 = scmp.eq.s32.totalorder %s19, 0
      %p60 = por %p58, %p59
      %p61 = scmp.ne.s32.totalorder %s50, %s53
      %p62 = scmp.eq.s32.totalorder %s24, 3
      %p63 = por %p61, %p62
      %p64 = scmp.ne.s32.totalorder %s53, %s54
      %p65 = scmp.eq.s32.totalorder %s24, 0
      %p66 = por %p64, %p65
      %p67 = scmp.ne.s32.totalorder %s53, %s54
      %p68 = scmp.eq.s32.totalorder %s25, 3
      %p69 = por %p67, %p68
      %p71 = scmp.ne.s32.totalorder %s54, %s70
      %p72 = scmp.eq.s32.totalorder %s25, 0
      %p73 = por %p71, %p72
      %s75 = sadd.s32 %s74, 1
      %p78 = scmp.eq.s32.totalorder %s19, 3
      %p79 = scmp.ne.s32.totalorder %s74, %s76
      %p80 = scmp.eq.s32.totalorder %s19, 0
      %p81 = por %p79, %p80
      %p82 = scmp.ne.s32.totalorder %s74, %s76
      %p83 = scmp.eq.s32.totalorder %s24, 3
      %p84 = por %p82, %p83
      %p85 = scmp.ne.s32.totalorder %s76, %s77
      %p86 = scmp.eq.s32.totalorder %s24, 0
      %p87 = por %p85, %p86
      %p88 = scmp.ne.s32.totalorder %s76, %s77
      %p89 = scmp.eq.s32.totalorder %s25, 3
      %p90 = por %p88, %p89
      %p92 = scmp.ne.s32.totalorder %s77, %s91
      %p93 = scmp.eq.s32.totalorder %s25, 0
      %p94 = por %p92, %p93
      %s96 = sadd.s32 %s95, 1
      %p99 = scmp.eq.s32.totalorder %s19, 3
      %p100 = scmp.ne.s32.totalorder %s95, %s97
      %p101 = scmp.eq.s32.totalorder %s19, 0
      %p102 = por %p100, %p101
      %p103 = scmp.ne.s32.totalorder %s95, %s97
      %p104 = scmp.eq.s32.totalorder %s24, 3
      %p105 = por %p103, %p104
      %p106 = scmp.ne.s32.totalorder %s97, %s98
      %p107 = scmp.eq.s32.totalorder %s24, 0
      %p108 = por %p106, %p107
      %p109 = scmp.ne.s32.totalorder %s97, %s98
      %p110 = scmp.eq.s32.totalorder %s25, 3
      %p111 = por %p109, %p110
      %p113 = scmp.ne.s32.totalorder %s98, %s112
      %p114 = scmp.eq.s32.totalorder %s25, 0
      %p115 = por %p113, %p114
      %s117 = sadd.s32 %s116, 1
      %p120 = scmp.eq.s32.totalorder %s19, 3
      %p121 = scmp.ne.s32.totalorder %s116, %s118
      %p122 = scmp.eq.s32.totalorder %s19, 0
      %p123 = por %p121, %p122
      %p124 = scmp.ne.s32.totalorder %s116, %s118
      %p125 = scmp.eq.s32.totalorder %s24, 3
      %p126 = por %p124, %p125
      %p127 = scmp.ne.s32.totalorder %s118, %s119
      %p128 = scmp.eq.s32.totalorder %s24, 0
      %p129 = por %p127, %p128
      %p130 = scmp.ne.s32.totalorder %s118, %s119
      %p131 = scmp.eq.s32.totalorder %s25, 3
      %p132 = por %p130, %p131
      %p134 = scmp.ne.s32.totalorder %s119, %s133
      %p135 = scmp.eq.s32.totalorder %s25, 0
      %p136 = por %p134, %p135
      %s138 = sadd.s32 %s137, 1
      %p141 = scmp.eq.s32.totalorder %s19, 3
      %p142 = scmp.ne.s32.totalorder %s137, %s139
      %p143 = scmp.eq.s32.totalorder %s19, 0
      %p144 = por %p142, %p143
      %p145 = scmp.ne.s32.totalorder %s137, %s139
      %p146 = scmp.eq.s32.totalorder %s24, 3
      %p147 = por %p145, %p146
      %p148 = scmp.ne.s32.totalorder %s139, %s140
      %p149 = scmp.eq.s32.totalorder %s24, 0
      %p150 = por %p148, %p149
      %p151 = scmp.ne.s32.totalorder %s139, %s140
      %p152 = scmp.eq.s32.totalorder %s25, 3
      %p153 = por %p151, %p152
      %p155 = scmp.ne.s32.totalorder %s140, %s154
      %p156 = scmp.eq.s32.totalorder %s25, 0
      %p157 = por %p155, %p156
      %s159 = sadd.s32 %s158, 1
      %p162 = scmp.eq.s32.totalorder %s19, 3
      %p163 = scmp.ne.s32.totalorder %s158, %s160
      %p164 = scmp.eq.s32.totalorder %s19, 0
      %p165 = por %p163, %p164
      %p166 = scmp.ne.s32.totalorder %s158, %s160
      %p167 = scmp.eq.s32.totalorder %s24, 3
      %p168 = por %p166, %p167
      %p169 = scmp.ne.s32.totalorder %s160, %s161
      %p170 = scmp.eq.s32.totalorder %s24, 0
      %p171 = por %p169, %p170
      %p172 = scmp.ne.s32.totalorder %s160, %s161
      %p173 = scmp.eq.s32.totalorder %s25, 3
      %p174 = por %p172, %p173
      %p176 = scmp.ne.s32.totalorder %s161, %s175
      %p177 = scmp.eq.s32.totalorder %s25, 0
      %p178 = por %p176, %p177
      %s180 = sadd.s32 %s179, 1
      %p183 = scmp.eq.s32.totalorder %s19, 3
      %p184 = scmp.ne.s32.totalorder %s179, %s181
      %p185 = scmp.eq.s32.totalorder %s19, 0
      %p186 = por %p184, %p185
      %p187 = scmp.ne.s32.totalorder %s179, %s181
      %p188 = scmp.eq.s32.totalorder %s24, 3
      %p189 = por %p187, %p188
      %p190 = scmp.ne.s32.totalorder %s181, %s182
      %p191 = scmp.eq.s32.totalorder %s24, 0
      %p192 = por %p190, %p191
      %p193 = scmp.ne.s32.totalorder %s181, %s182
      %p194 = scmp.eq.s32.totalorder %s25, 3
      %p195 = por %p193, %p194
      %p197 = scmp.ne.s32.totalorder %s182, %s196
      %p198 = scmp.eq.s32.totalorder %s25, 0
      %p199 = por %p197, %p198
      %s201 = sadd.s32 %s200, 1
      %p204 = scmp.eq.s32.totalorder %s19, 3
      %p205 = scmp.ne.s32.totalorder %s200, %s202
      %p206 = scmp.eq.s32.totalorder %s19, 0
      %p207 = por %p205, %p206
      %p208 = scmp.ne.s32.totalorder %s200, %s202
      %p209 = scmp.eq.s32.totalorder %s24, 3
      %p210 = por %p208, %p209
      %p211 = scmp.ne.s32.totalorder %s202, %s203
      %p212 = scmp.eq.s32.totalorder %s24, 0
      %p213 = por %p211, %p212
      %p214 = scmp.ne.s32.totalorder %s202, %s203
      %p215 = scmp.eq.s32.totalorder %s25, 3
      %p216 = por %p214, %p215
      %p218 = scmp.ne.s32.totalorder %s203, %s217
      %p219 = scmp.eq.s32.totalorder %s25, 0
      %p220 = por %p218, %p219
      %s222 = sadd.s32 %s221, 1
      %p225 = scmp.eq.s32.totalorder %s19, 3
      %p226 = scmp.ne.s32.totalorder %s221, %s223
      %p227 = scmp.eq.s32.totalorder %s19, 0
      %p228 = por %p226, %p227
      %p229 = scmp.ne.s32.totalorder %s221, %s223
      %p230 = scmp.eq.s32.totalorder %s24, 3
      %p231 = por %p229, %p230
      %p232 = scmp.ne.s32.totalorder %s223, %s224
      %p233 = scmp.eq.s32.totalorder %s24, 0
      %p234 = por %p232, %p233
      %p235 = scmp.ne.s32.totalorder %s223, %s224
      %p236 = scmp.eq.s32.totalorder %s25, 3
      %p237 = por %p235, %p236
      %p239 = scmp.ne.s32.totalorder %s224, %s238
      %p240 = scmp.eq.s32.totalorder %s25, 0
      %p241 = por %p239, %p240
      %s242 = ssub.s32 %s19, %s26
      %p243 = scmp.eq.s32.totalorder %s242, 0
      %s245 = sadd.s32 %s244, 1
      %s246 = scalar_select %p243, %s244, %s245
      %p249 = pneg %p243
      %p250 = scmp.eq.s32.totalorder %s19, 3
      %p251 = por %p249, %p250
      %p252 = scmp.ne.s32.totalorder %s244, %s247
      %p253 = scmp.eq.s32.totalorder %s19, 0
      %p254 = por %p252, %p253
      %p255 = scmp.ne.s32.totalorder %s244, %s247
      %p256 = scmp.eq.s32.totalorder %s24, 3
      %p257 = por %p255, %p256
      %p258 = scmp.ne.s32.totalorder %s247, %s248
      %p259 = scmp.eq.s32.totalorder %s24, 0
      %p260 = por %p258, %p259
      %p261 = scmp.ne.s32.totalorder %s247, %s248
      %p262 = scmp.eq.s32.totalorder %s25, 3
      %p263 = por %p261, %p262
      %p265 = scmp.ne.s32.totalorder %s248, %s264
      %p266 = scmp.eq.s32.totalorder %s25, 0
      %p267 = por %p265, %p266
      %p268 = scmp.le.s32.totalorder 1, %s19
      %p269 = scmp.lt.s32.totalorder %s19, 5
      %p270 = pnand %p268, %p269
      %p271 = pneg %p270
      // Predicated region
      $region9: #{gcn_forward_batched.1} parent=5 // pred_check
        _
      $region10: #{gcn_forward_batched.1} parent=5 // pred_check_branch
        %273 = sbr.rel (%p270) target = $region12
      $region11: #{gcn_forward_batched.1} parent=5 // pred_region
        %s274 = ssub.s32 %s19, 1
        // Predicated region
        $region13: #{gcn_forward_batched.1} parent=11 // pred_check
          %p275 = pneg %p40
        $region14: #{gcn_forward_batched.1} parent=11 // pred_check_branch
          %277 = sbr.rel (%p275) target = $region16
        $region15: #{gcn_forward_batched.1} parent=11 // pred_region
          _
        $region16: #{gcn_forward_batched.1} parent=11 // pred_fallthru
          _
        // Predicated region
        $region17: #{gcn_forward_batched.1} parent=11 // pred_check
          %p278 = pneg %p87
        $region18: #{gcn_forward_batched.1} parent=11 // pred_check_branch
          %280 = sbr.rel (%p278) target = $region20
        $region19: #{gcn_forward_batched.1} parent=11 // pred_region
          _
        $region20: #{gcn_forward_batched.1} parent=11 // pred_fallthru
          _
        // Predicated region
        $region21: #{gcn_forward_batched.1} parent=11 // pred_check
          %p281 = pneg %p108
        $region22: #{gcn_forward_batched.1} parent=11 // pred_check_branch
          %283 = sbr.rel (%p281) target = $region24
        $region23: #{gcn_forward_batched.1} parent=11 // pred_region
          _
        $region24: #{gcn_forward_batched.1} parent=11 // pred_fallthru
          _
        // Predicated region
        $region25: #{gcn_forward_batched.1} parent=11 // pred_check
          %p284 = pneg %p129
        $region26: #{gcn_forward_batched.1} parent=11 // pred_check_branch
          %286 = sbr.rel (%p284) target = $region28
        $region27: #{gcn_forward_batched.1} parent=11 // pred_region
          _
        $region28: #{gcn_forward_batched.1} parent=11 // pred_fallthru
          _
        // Predicated region
        $region29: #{gcn_forward_batched.1} parent=11 // pred_check
          %p287 = pneg %p150
        $region30: #{gcn_forward_batched.1} parent=11 // pred_check_branch
          %289 = sbr.rel (%p287) target = $region32
        $region31: #{gcn_forward_batched.1} parent=11 // pred_region
          _
        $region32: #{gcn_forward_batched.1} parent=11 // pred_fallthru
          _
        // Predicated region
        $region33: #{gcn_forward_batched.1} parent=11 // pred_check
          %p290 = pneg %p171
        $region34: #{gcn_forward_batched.1} parent=11 // pred_check_branch
          %292 = sbr.rel (%p290) target = $region36
        $region35: #{gcn_forward_batched.1} parent=11 // pred_region
          _
        $region36: #{gcn_forward_batched.1} parent=11 // pred_fallthru
          _
        // Predicated region
        $region37: #{gcn_forward_batched.1} parent=11 // pred_check
          %p293 = pneg %p192
        $region38: #{gcn_forward_batched.1} parent=11 // pred_check_branch
          %295 = sbr.rel (%p293) target = $region40
        $region39: #{gcn_forward_batched.1} parent=11 // pred_region
          _
        $region40: #{gcn_forward_batched.1} parent=11 // pred_fallthru
          _
        // Predicated region
        $region41: #{gcn_forward_batched.1} parent=11 // pred_check
          %p296 = pneg %p213
        $region42: #{gcn_forward_batched.1} parent=11 // pred_check_branch
          %298 = sbr.rel (%p296) target = $region44
        $region43: #{gcn_forward_batched.1} parent=11 // pred_region
          _
        $region44: #{gcn_forward_batched.1} parent=11 // pred_fallthru
          _
        // Predicated region
        $region45: #{gcn_forward_batched.1} parent=11 // pred_check
          %p299 = pneg %p234
        $region46: #{gcn_forward_batched.1} parent=11 // pred_check_branch
          %301 = sbr.rel (%p299) target = $region48
        $region47: #{gcn_forward_batched.1} parent=11 // pred_region
          _
        $region48: #{gcn_forward_batched.1} parent=11 // pred_fallthru
          _
      $region12: #{gcn_forward_batched.1} parent=5 // pred_fallthru
        _
      %p302 = scmp.lt.s32.totalorder %s19, 4
      // Predicated region
      $region49: #{gcn_forward_batched.1} parent=5 // pred_check
        %p303 = pneg %p302
      $region50: #{gcn_forward_batched.1} parent=5 // pred_check_branch
        %305 = sbr.rel (%p303) target = $region52
      $region51: #{gcn_forward_batched.1} parent=5 // pred_region
        // Predicated region
        $region53: #{gcn_forward_batched.1} parent=51 // pred_check
          %p306 = pneg %p60
        $region54: #{gcn_forward_batched.1} parent=51 // pred_check_branch
          %308 = sbr.rel (%p306) target = $region56
        $region55: #{gcn_forward_batched.1} parent=51 // pred_region
          %p309 = scmp.lt.s32.totalorder %s19, 3
          %s310 = scalar_select %p309, %s19, 3
          %s311 = smul.addr %s310, 4
          %s312 = scalar_lea.vmem %s1, %s311
        $region56: #{gcn_forward_batched.1} parent=51 // pred_fallthru
          _
      $region52: #{gcn_forward_batched.1} parent=5 // pred_fallthru
        _
      %p313 = scmp.le.s32.totalorder 1, %s19
      %p314 = scmp.lt.s32.totalorder %s19, 5
      %p315 = pnand %p313, %p314
      %p316 = pneg %p315
      // Predicated region
      $region57: #{gcn_forward_batched.1} parent=5 // pred_check
        _
      $region58: #{gcn_forward_batched.1} parent=5 // pred_check_branch
        %318 = sbr.rel (%p315) target = $region60
      $region59: #{gcn_forward_batched.1} parent=5 // pred_region
        %s319 = ssub.s32 %s19, 1
        %p320 = pneg %p40
        %p321 = pneg %p37
        %p322 = scmp.lt.s32.totalorder %s24, 3
        %s323 = scalar_select %p322, %s24, 3
        %s324 = smul.addr %s323, 4
        %s325 = scalar_lea.vmem %s1, %s324
        %p326 = pneg %p66
        %p327 = pneg %p63
        %p328 = pneg %p87
        %p329 = pneg %p84
        %p330 = pneg %p108
        %p331 = pneg %p105
        %p332 = pneg %p129
        %p333 = pneg %p126
        %p334 = pneg %p150
        %p335 = pneg %p147
        %p336 = pneg %p171
        %p337 = pneg %p168
        %p338 = pneg %p192
        %p339 = pneg %p189
        %p340 = pneg %p213
        %p341 = pneg %p210
        %p342 = pneg %p234
        %p343 = pneg %p231
        %p344 = pneg %p260
        %p345 = pneg %p257
        %s346 = sand.u32 %s247, 1
        %s347 = scalar_lea.sflag [#allocation3], %s346
        %s348 = sand.u32 %s247, 1
        %s349 = scalar_lea.vmem [#allocation2], %s348
        %p350 = scmp.lt.s32.totalorder %s24, 3
        %s351 = scalar_select %p350, %s24, 3
        %s352 = smul.addr %s351, 4
        %s353 = scalar_lea.vmem %s1, %s352
        %v355 = vld [vmem:[%s0] sm:$0xff]
        %v356 = vld [vmem:[%s353] sm:$0xf]
        %v357 = vld [vmem:[%s2] sm:$0xff]
        %v358 = vld [vmem:[%s2 + $0x8] sm:$0xff]
        %v359 = vld [vmem:[%s2 + $0x10] sm:$0xff]
        %v360 = vld [vmem:[%s2 + $0x18] sm:$0xff]
        %v361 = vld [vmem:[%s2 + $0x20] sm:$0xff]
        %v362 = vld [vmem:[%s2 + $0x28] sm:$0xff]
        %v363 = vld [vmem:[%s2 + $0x30] sm:$0xff]
        %v364 = vld [vmem:[%s2 + $0x38] sm:$0xff]
        %v365 = vld [vmem:[%s2 + $0x40] sm:$0xff]
        %v366 = vld [vmem:[%s2 + $0x48] sm:$0xff]
        %v367 = vld [vmem:[%s2 + $0x50] sm:$0xff]
        %v368 = vld [vmem:[%s2 + $0x58] sm:$0xff]
        %v369 = vld [vmem:[%s2 + $0x60] sm:$0xff]
        %v370 = vld [vmem:[%s2 + $0x68] sm:$0xff]
        %v371 = vld [vmem:[%s2 + $0x70] sm:$0xff]
        %v372 = vld [vmem:[%s2 + $0x78] sm:$0xff]
        %v373 = vld [vmem:[%s2 + $0x80] sm:$0xff]
        %v374 = vld [vmem:[%s2 + $0x88] sm:$0xff]
        %v375 = vld [vmem:[%s2 + $0x90] sm:$0xff]
        %v376 = vld [vmem:[%s2 + $0x98] sm:$0xff]
        %v377 = vld [vmem:[%s2 + $0xa0] sm:$0xff]
        %v378 = vld [vmem:[%s2 + $0xa8] sm:$0xff]
        %v379 = vld [vmem:[%s2 + $0xb0] sm:$0xff]
        %v380 = vld [vmem:[%s2 + $0xb8] sm:$0xff]
        %v381 = vld [vmem:[%s2 + $0xc0] sm:$0xff]
        %v382 = vld [vmem:[%s2 + $0xc8] sm:$0xff]
        %v383 = vld [vmem:[%s2 + $0xd0] sm:$0xff]
        %v384 = vld [vmem:[%s2 + $0xd8] sm:$0xff]
        %v385 = vld [vmem:[%s2 + $0xe0] sm:$0xff]
        %v386 = vld [vmem:[%s2 + $0xe8] sm:$0xff]
        %v387 = vld [vmem:[%s2 + $0xf0] sm:$0xff]
        %v388 = vld [vmem:[%s2 + $0xf8] sm:$0xff]
        %v421 = vunpack.c.l.b16 %v357
        %v422 = vunpack.c.h.b16 %v357
        %v423 = vunpack.c.l.b16 %v358
        %v424 = vunpack.c.h.b16 %v358
        %v425 = vunpack.c.l.b16 %v359
        %v426 = vunpack.c.h.b16 %v359
        %v427 = vunpack.c.l.b16 %v360
        %v428 = vunpack.c.h.b16 %v360
        %v429 = vunpack.c.l.b16 %v361
        %v430 = vunpack.c.h.b16 %v361
        %v431 = vunpack.c.l.b16 %v362
        %v432 = vunpack.c.h.b16 %v362
        %v433 = vunpack.c.l.b16 %v363
        %v434 = vunpack.c.h.b16 %v363
        %v435 = vunpack.c.l.b16 %v364
        %v436 = vunpack.c.h.b16 %v364
        %v437 = vunpack.c.l.b16 %v365
        %v438 = vunpack.c.h.b16 %v365
        %v439 = vunpack.c.l.b16 %v366
        %v440 = vunpack.c.h.b16 %v366
        %v441 = vunpack.c.l.b16 %v367
        %v442 = vunpack.c.h.b16 %v367
        %v443 = vunpack.c.l.b16 %v368
        %v444 = vunpack.c.h.b16 %v368
        %v445 = vunpack.c.l.b16 %v369
        %v446 = vunpack.c.h.b16 %v369
        %v447 = vunpack.c.l.b16 %v370
        %v448 = vunpack.c.h.b16 %v370
        %v449 = vunpack.c.l.b16 %v371
        %v450 = vunpack.c.h.b16 %v371
        %v451 = vunpack.c.l.b16 %v372
        %v452 = vunpack.c.h.b16 %v372
        %v453 = vunpack.c.l.b16 %v373
        %v454 = vunpack.c.h.b16 %v373
        %v455 = vunpack.c.l.b16 %v374
        %v456 = vunpack.c.h.b16 %v374
        %v457 = vunpack.c.l.b16 %v375
        %v458 = vunpack.c.h.b16 %v375
        %v459 = vunpack.c.l.b16 %v376
        %v460 = vunpack.c.h.b16 %v376
        %v461 = vunpack.c.l.b16 %v377
        %v462 = vunpack.c.h.b16 %v377
        %v463 = vunpack.c.l.b16 %v378
        %v464 = vunpack.c.h.b16 %v378
        %v465 = vunpack.c.l.b16 %v379
        %v466 = vunpack.c.h.b16 %v379
        %v467 = vunpack.c.l.b16 %v380
        %v468 = vunpack.c.h.b16 %v380
        %v469 = vunpack.c.l.b16 %v381
        %v470 = vunpack.c.h.b16 %v381
        %v471 = vunpack.c.l.b16 %v382
        %v472 = vunpack.c.h.b16 %v382
        %v473 = vunpack.c.l.b16 %v383
        %v474 = vunpack.c.h.b16 %v383
        %v475 = vunpack.c.l.b16 %v384
        %v476 = vunpack.c.h.b16 %v384
        %v477 = vunpack.c.l.b16 %v385
        %v478 = vunpack.c.h.b16 %v385
        %v479 = vunpack.c.l.b16 %v386
        %v480 = vunpack.c.h.b16 %v386
        %v481 = vunpack.c.l.b16 %v387
        %v482 = vunpack.c.h.b16 %v387
        %v483 = vunpack.c.l.b16 %v388
        %v484 = vunpack.c.h.b16 %v388
        %v485 = vpack.c.b16 %v425, %v421
        %v486 = vpack.c.b16 %v426, %v422
        %v487 = vpack.c.b16 %v427, %v423
        %v488 = vpack.c.b16 %v428, %v424
        %v489 = vpack.c.b16 %v433, %v429
        %v490 = vpack.c.b16 %v434, %v430
        %v491 = vpack.c.b16 %v435, %v431
        %v492 = vpack.c.b16 %v436, %v432
        %v493 = vpack.c.b16 %v441, %v437
        %v494 = vpack.c.b16 %v442, %v438
        %v495 = vpack.c.b16 %v443, %v439
        %v496 = vpack.c.b16 %v444, %v440
        %v497 = vpack.c.b16 %v449, %v445
        %v498 = vpack.c.b16 %v450, %v446
        %v499 = vpack.c.b16 %v451, %v447
        %v500 = vpack.c.b16 %v452, %v448
        %v501 = vpack.c.b16 %v457, %v453
        %v502 = vpack.c.b16 %v458, %v454
        %v503 = vpack.c.b16 %v459, %v455
        %v504 = vpack.c.b16 %v460, %v456
        %v505 = vpack.c.b16 %v465, %v461
        %v506 = vpack.c.b16 %v466, %v462
        %v507 = vpack.c.b16 %v467, %v463
        %v508 = vpack.c.b16 %v468, %v464
        %v509 = vpack.c.b16 %v473, %v469
        %v510 = vpack.c.b16 %v474, %v470
        %v511 = vpack.c.b16 %v475, %v471
        %v512 = vpack.c.b16 %v476, %v472
        %v513 = vpack.c.b16 %v481, %v477
        %v514 = vpack.c.b16 %v482, %v478
        %v515 = vpack.c.b16 %v483, %v479
        %v516 = vpack.c.b16 %v484, %v480
        %549 = vmatprep.subr.bf16.mxu0 %v514
        %550 = vmatpush1.bf16.msra.mxu0 %v513
        %551 = vmatprep.subr.bf16.mxu0 %v510
        %552 = vmatpush1.bf16.msra.mxu0 %v509
        %553 = vmatprep.subr.bf16.mxu0 %v506
        %554 = vmatpush1.bf16.msra.mxu0 %v505
        %555 = vmatprep.subr.bf16.mxu0 %v502
        %556 = vmatpush1.bf16.msra.mxu0 %v501
        %557 = vmatprep.subr.bf16.mxu0 %v498
        %558 = vmatpush1.bf16.msra.mxu0 %v497
        %559 = vmatprep.subr.bf16.mxu0 %v494
        %560 = vmatpush1.bf16.msra.mxu0 %v493
        %561 = vmatprep.subr.bf16.mxu0 %v490
        %562 = vmatpush1.bf16.msra.mxu0 %v489
        %563 = vmatprep.subr.bf16.mxu0 %v486
        %564 = vmatpush1.bf16.msra.mxu0 %v485
        %565 = vmatprep.subr.bf16.mxu0 0
        %566 = vmatpush2.bf16.msra.mxu0 0
        %567 = vmatprep.subr.bf16.mxu0 0
        %568 = vmatpush2.bf16.msra.mxu0 0
        %569 = vmatprep.subr.bf16.mxu0 0
        %570 = vmatpush2.bf16.msra.mxu0 0
        %571 = vmatprep.subr.bf16.mxu0 0
        %572 = vmatpush2.bf16.msra.mxu0 0
        %573 = vmatprep.subr.bf16.mxu0 0
        %574 = vmatpush2.bf16.msra.mxu0 0
        %575 = vmatprep.subr.bf16.mxu0 0
        %576 = vmatpush2.bf16.msra.mxu0 0
        %577 = vmatprep.subr.bf16.mxu0 0
        %578 = vmatpush2.bf16.msra.mxu0 0
        %579 = vmatprep.subr.bf16.mxu0 0
        %580 = vmatpush2.bf16.msra.mxu0 0
        %581 = vmatprep.mubr.bf16.mxu0 0
        %582 = vmatmul.mubr.bf16.gmra.mxu0 %v356
        %v583 = vpop.f32.mrf.mxu0
        %v584 = vadd.f32 0.0, %v583
        %v585 = vpop.f32.mrf.mxu0
        %v586 = vadd.f32 0.0, %v585
        %v587 = vpop.f32.mrf.mxu0
        %v588 = vpop.f32.mrf.mxu0
        %589 = vdwg.mxu0
        %590 = vmatprep.subr.bf16.mxu0 %v516
        %591 = vmatpush1.bf16.msra.mxu0 %v515
        %592 = vmatprep.subr.bf16.mxu0 %v512
        %593 = vmatpush1.bf16.msra.mxu0 %v511
        %594 = vmatprep.subr.bf16.mxu0 %v508
        %595 = vmatpush1.bf16.msra.mxu0 %v507
        %596 = vmatprep.subr.bf16.mxu0 %v504
        %597 = vmatpush1.bf16.msra.mxu0 %v503
        %598 = vmatprep.subr.bf16.mxu0 %v500
        %599 = vmatpush1.bf16.msra.mxu0 %v499
        %600 = vmatprep.subr.bf16.mxu0 %v496
        %601 = vmatpush1.bf16.msra.mxu0 %v495
        %602 = vmatprep.subr.bf16.mxu0 %v492
        %603 = vmatpush1.bf16.msra.mxu0 %v491
        %604 = vmatprep.subr.bf16.mxu0 %v488
        %605 = vmatpush1.bf16.msra.mxu0 %v487
        %606 = vmatprep.subr.bf16.mxu0 0
        %607 = vmatpush2.bf16.msra.mxu0 0
        %608 = vmatprep.subr.bf16.mxu0 0
        %609 = vmatpush2.bf16.msra.mxu0 0
        %610 = vmatprep.subr.bf16.mxu0 0
        %611 = vmatpush2.bf16.msra.mxu0 0
        %612 = vmatprep.subr.bf16.mxu0 0
        %613 = vmatpush2.bf16.msra.mxu0 0
        %614 = vmatprep.subr.bf16.mxu0 0
        %615 = vmatpush2.bf16.msra.mxu0 0
        %616 = vmatprep.subr.bf16.mxu0 0
        %617 = vmatpush2.bf16.msra.mxu0 0
        %618 = vmatprep.subr.bf16.mxu0 0
        %619 = vmatpush2.bf16.msra.mxu0 0
        %620 = vmatprep.subr.bf16.mxu0 0
        %621 = vmatpush2.bf16.msra.mxu0 0
        %622 = vmatprep.mubr.bf16.mxu0 0
        %623 = vmatmul.mubr.bf16.gmra.mxu0 %v356
        %v624 = vpop.f32.mrf.mxu0
        %v625 = vadd.f32 0.0, %v624
        %v626 = vpop.f32.mrf.mxu0
        %v627 = vadd.f32 0.0, %v626
        %v628 = vpop.f32.mrf.mxu0
        %v629 = vpop.f32.mrf.mxu0
        %630 = vdwg.mxu0
        %v631 = vld [vmem:[%s3] sm:$0xf]
        %v633 = vlaneseq
        %v634 = vshrl.u32 %v633, 7
        %v635 = vsub.s32 0, %v634
        %v636 = vrot.slane %v631, %v635
        %v637 = vlaneseq
        %v638 = vshrl.u32 %v637, 7
        %v639 = vsub.s32 1, %v638
        %v640 = vrot.slane %v631, %v639
        %v641 = vlaneseq
        %v642 = vshrl.u32 %v641, 7
        %v643 = vsub.s32 2, %v642
        %v644 = vrot.slane %v631, %v643
        %v645 = vlaneseq
        %v646 = vshrl.u32 %v645, 7
        %v647 = vsub.s32 3, %v646
        %v648 = vrot.slane %v631, %v647
        %vm653 = vcmask 64512
        %v655 = vsel %vm653, %v355, 0
        %657 = vmatprep.subr.mxu0 0.0
        %658 = vmatpush1.msra.mxu0 0.0
        %659 = vmatprep.subr.mxu0 0.0
        %660 = vmatpush1.msra.mxu0 0.0
        %661 = vmatprep.subr.mxu0 0.0
        %662 = vmatpush1.msra.mxu0 0.0
        %663 = vmatprep.subr.mxu0 0.0
        %664 = vmatpush1.msra.mxu0 0.0
        %665 = vmatprep.subr.mxu0 0.0
        %666 = vmatpush1.msra.mxu0 0.0
        %667 = vmatprep.subr.mxu0 0.0
        %668 = vmatpush1.msra.mxu0 0.0
        %669 = vmatprep.subr.mxu0 0.0
        %670 = vmatpush1.msra.mxu0 0.0
        %671 = vmatprep.subr.mxu0 0.0
        %672 = vmatpush1.msra.mxu0 0.0
        %673 = vmatprep.subr.mxu0 0.0
        %674 = vmatpush1.msra.mxu0 0.0
        %675 = vmatprep.subr.mxu0 0.0
        %676 = vmatpush1.msra.mxu0 0.0
        %677 = vmatprep.subr.mxu0 0.0
        %678 = vmatpush1.msra.mxu0 0.0
        %679 = vmatprep.subr.mxu0 0.0
        %680 = vmatpush1.msra.mxu0 0.0
        %681 = vmatprep.subr.mxu0 0.0
        %682 = vmatpush1.msra.mxu0 0.0
        %683 = vmatprep.subr.mxu0 0.0
        %684 = vmatpush1.msra.mxu0 0.0
        %685 = vmatprep.subr.mxu0 0.0
        %686 = vmatpush1.msra.mxu0 0.0
        %687 = vmatprep.subr.mxu0 %v586
        %688 = vmatpush1.msra.mxu0 %v584
        %689 = vmatprep.subr.mxu0 0.0
        %690 = vmatpush2.msra.mxu0 0.0
        %691 = vmatprep.subr.mxu0 0.0
        %692 = vmatpush2.msra.mxu0 0.0
        %693 = vmatprep.subr.mxu0 0.0
        %694 = vmatpush2.msra.mxu0 0.0
        %695 = vmatprep.subr.mxu0 0.0
        %696 = vmatpush2.msra.mxu0 0.0
        %697 = vmatprep.subr.mxu0 0.0
        %698 = vmatpush2.msra.mxu0 0.0
        %699 = vmatprep.subr.mxu0 0.0
        %700 = vmatpush2.msra.mxu0 0.0
        %701 = vmatprep.subr.mxu0 0.0
        %702 = vmatpush2.msra.mxu0 0.0
        %703 = vmatprep.subr.mxu0 0.0
        %704 = vmatpush2.msra.mxu0 0.0
        %705 = vmatprep.subr.mxu0 0.0
        %706 = vmatpush2.msra.mxu0 0.0
        %707 = vmatprep.subr.mxu0 0.0
        %708 = vmatpush2.msra.mxu0 0.0
        %709 = vmatprep.subr.mxu0 0.0
        %710 = vmatpush2.msra.mxu0 0.0
        %711 = vmatprep.subr.mxu0 0.0
        %712 = vmatpush2.msra.mxu0 0.0
        %713 = vmatprep.subr.mxu0 0.0
        %714 = vmatpush2.msra.mxu0 0.0
        %715 = vmatprep.subr.mxu0 0.0
        %716 = vmatpush2.msra.mxu0 0.0
        %717 = vmatprep.subr.mxu0 0.0
        %718 = vmatpush2.msra.mxu0 0.0
        %719 = vmatprep.subr.mxu0 0.0
        %720 = vmatpush2.msra.mxu0 0.0
        %721 = vmatprep.mubr.f32.mxu0 0.0
        %722 = vmatmul.mubr.f32.gmra.mxu0 %v655
        %v723 = vpop.f32.mrf.mxu0
        %v724 = vadd.f32 %v636, %v723
        %v725 = vpop.f32.mrf.mxu0
        %v726 = vadd.f32 %v640, %v725
        %727 = vdwg.mxu0
        %728 = vmatprep.subr.mxu0 0.0
        %729 = vmatpush1.msra.mxu0 0.0
        %730 = vmatprep.subr.mxu0 0.0
        %731 = vmatpush1.msra.mxu0 0.0
        %732 = vmatprep.subr.mxu0 0.0
        %733 = vmatpush1.msra.mxu0 0.0
        %734 = vmatprep.subr.mxu0 0.0
        %735 = vmatpush1.msra.mxu0 0.0
        %736 = vmatprep.subr.mxu0 0.0
        %737 = vmatpush1.msra.mxu0 0.0
        %738 = vmatprep.subr.mxu0 0.0
        %739 = vmatpush1.msra.mxu0 0.0
        %740 = vmatprep.subr.mxu0 0.0
        %741 = vmatpush1.msra.mxu0 0.0
        %742 = vmatprep.subr.mxu0 0.0
        %743 = vmatpush1.msra.mxu0 0.0
        %744 = vmatprep.subr.mxu0 0.0
        %745 = vmatpush1.msra.mxu0 0.0
        %746 = vmatprep.subr.mxu0 0.0
        %747 = vmatpush1.msra.mxu0 0.0
        %748 = vmatprep.subr.mxu0 0.0
        %749 = vmatpush1.msra.mxu0 0.0
        %750 = vmatprep.subr.mxu0 0.0
        %751 = vmatpush1.msra.mxu0 0.0
        %752 = vmatprep.subr.mxu0 0.0
        %753 = vmatpush1.msra.mxu0 0.0
        %754 = vmatprep.subr.mxu0 0.0
        %755 = vmatpush1.msra.mxu0 0.0
        %756 = vmatprep.subr.mxu0 0.0
        %757 = vmatpush1.msra.mxu0 0.0
        %758 = vmatprep.subr.mxu0 %v627
        %759 = vmatpush1.msra.mxu0 %v625
        %760 = vmatprep.subr.mxu0 0.0
        %761 = vmatpush2.msra.mxu0 0.0
        %762 = vmatprep.subr.mxu0 0.0
        %763 = vmatpush2.msra.mxu0 0.0
        %764 = vmatprep.subr.mxu0 0.0
        %765 = vmatpush2.msra.mxu0 0.0
        %766 = vmatprep.subr.mxu0 0.0
        %767 = vmatpush2.msra.mxu0 0.0
        %768 = vmatprep.subr.mxu0 0.0
        %769 = vmatpush2.msra.mxu0 0.0
        %770 = vmatprep.subr.mxu0 0.0
        %771 = vmatpush2.msra.mxu0 0.0
        %772 = vmatprep.subr.mxu0 0.0
        %773 = vmatpush2.msra.mxu0 0.0
        %774 = vmatprep.subr.mxu0 0.0
        %775 = vmatpush2.msra.mxu0 0.0
        %776 = vmatprep.subr.mxu0 0.0
        %777 = vmatpush2.msra.mxu0 0.0
        %778 = vmatprep.subr.mxu0 0.0
        %779 = vmatpush2.msra.mxu0 0.0
        %780 = vmatprep.subr.mxu0 0.0
        %781 = vmatpush2.msra.mxu0 0.0
        %782 = vmatprep.subr.mxu0 0.0
        %783 = vmatpush2.msra.mxu0 0.0
        %784 = vmatprep.subr.mxu0 0.0
        %785 = vmatpush2.msra.mxu0 0.0
        %786 = vmatprep.subr.mxu0 0.0
        %787 = vmatpush2.msra.mxu0 0.0
        %788 = vmatprep.subr.mxu0 0.0
        %789 = vmatpush2.msra.mxu0 0.0
        %790 = vmatprep.subr.mxu0 0.0
        %791 = vmatpush2.msra.mxu0 0.0
        %792 = vmatprep.mubr.f32.mxu0 0.0
        %793 = vmatmul.mubr.f32.gmra.mxu0 %v655
        %v794 = vpop.f32.mrf.mxu0
        %v795 = vadd.f32 %v644, %v794
        %v796 = vpop.f32.mrf.mxu0
        %v797 = vadd.f32 %v648, %v796
        %798 = vdwg.mxu0
        %v799 = vmax.f32 %v724, 0.0
        %v800 = vmax.f32 %v726, 0.0
        %v801 = vmax.f32 %v795, 0.0
        %v802 = vmax.f32 %v797, 0.0
        %v803 = vpack.c.bf16 %v799, %v799
        %v804 = vpack.c.bf16 %v800, %v800
        %v805 = vpack.c.bf16 %v801, %v801
        %v806 = vpack.c.bf16 %v802, %v802
        %v807 = vld [vmem:[%s4] sm:$0xff]
        %v808 = vld [vmem:[%s4 + $0x8] sm:$0xff]
        %v809 = vld [vmem:[%s4 + $0x10] sm:$0xff]
        %v810 = vld [vmem:[%s4 + $0x18] sm:$0xff]
        %v811 = vld [vmem:[%s4 + $0x20] sm:$0xff]
        %v812 = vld [vmem:[%s4 + $0x28] sm:$0xff]
        %v813 = vld [vmem:[%s4 + $0x30] sm:$0xff]
        %v814 = vld [vmem:[%s4 + $0x38] sm:$0xff]
        %v815 = vld [vmem:[%s4 + $0x40] sm:$0xff]
        %v816 = vld [vmem:[%s4 + $0x48] sm:$0xff]
        %v817 = vld [vmem:[%s4 + $0x50] sm:$0xff]
        %v818 = vld [vmem:[%s4 + $0x58] sm:$0xff]
        %v819 = vld [vmem:[%s4 + $0x60] sm:$0xff]
        %v820 = vld [vmem:[%s4 + $0x68] sm:$0xff]
        %v821 = vld [vmem:[%s4 + $0x70] sm:$0xff]
        %v822 = vld [vmem:[%s4 + $0x78] sm:$0xff]
        %v823 = vld [vmem:[%s4 + $0x80] sm:$0xff]
        %v824 = vld [vmem:[%s4 + $0x88] sm:$0xff]
        %v825 = vld [vmem:[%s4 + $0x90] sm:$0xff]
        %v826 = vld [vmem:[%s4 + $0x98] sm:$0xff]
        %v827 = vld [vmem:[%s4 + $0xa0] sm:$0xff]
        %v828 = vld [vmem:[%s4 + $0xa8] sm:$0xff]
        %v829 = vld [vmem:[%s4 + $0xb0] sm:$0xff]
        %v830 = vld [vmem:[%s4 + $0xb8] sm:$0xff]
        %v831 = vld [vmem:[%s4 + $0xc0] sm:$0xff]
        %v832 = vld [vmem:[%s4 + $0xc8] sm:$0xff]
        %v833 = vld [vmem:[%s4 + $0xd0] sm:$0xff]
        %v834 = vld [vmem:[%s4 + $0xd8] sm:$0xff]
        %v835 = vld [vmem:[%s4 + $0xe0] sm:$0xff]
        %v836 = vld [vmem:[%s4 + $0xe8] sm:$0xff]
        %v837 = vld [vmem:[%s4 + $0xf0] sm:$0xff]
        %v838 = vld [vmem:[%s4 + $0xf8] sm:$0xff]
        %v839 = vld [vmem:[%s4 + $0x100] sm:$0xff]
        %v840 = vld [vmem:[%s4 + $0x108] sm:$0xff]
        %v841 = vld [vmem:[%s4 + $0x110] sm:$0xff]
        %v842 = vld [vmem:[%s4 + $0x118] sm:$0xff]
        %v843 = vld [vmem:[%s4 + $0x120] sm:$0xff]
        %v844 = vld [vmem:[%s4 + $0x128] sm:$0xff]
        %v845 = vld [vmem:[%s4 + $0x130] sm:$0xff]
        %v846 = vld [vmem:[%s4 + $0x138] sm:$0xff]
        %v847 = vld [vmem:[%s4 + $0x140] sm:$0xff]
        %v848 = vld [vmem:[%s4 + $0x148] sm:$0xff]
        %v849 = vld [vmem:[%s4 + $0x150] sm:$0xff]
        %v850 = vld [vmem:[%s4 + $0x158] sm:$0xff]
        %v851 = vld [vmem:[%s4 + $0x160] sm:$0xff]
        %v852 = vld [vmem:[%s4 + $0x168] sm:$0xff]
        %v853 = vld [vmem:[%s4 + $0x170] sm:$0xff]
        %v854 = vld [vmem:[%s4 + $0x178] sm:$0xff]
        %v855 = vld [vmem:[%s4 + $0x180] sm:$0xff]
        %v856 = vld [vmem:[%s4 + $0x188] sm:$0xff]
        %v857 = vld [vmem:[%s4 + $0x190] sm:$0xff]
        %v858 = vld [vmem:[%s4 + $0x198] sm:$0xff]
        %v859 = vld [vmem:[%s4 + $0x1a0] sm:$0xff]
        %v860 = vld [vmem:[%s4 + $0x1a8] sm:$0xff]
        %v861 = vld [vmem:[%s4 + $0x1b0] sm:$0xff]
        %v862 = vld [vmem:[%s4 + $0x1b8] sm:$0xff]
        %v863 = vld [vmem:[%s4 + $0x1c0] sm:$0xff]
        %v864 = vld [vmem:[%s4 + $0x1c8] sm:$0xff]
        %v865 = vld [vmem:[%s4 + $0x1d0] sm:$0xff]
        %v866 = vld [vmem:[%s4 + $0x1d8] sm:$0xff]
        %v867 = vld [vmem:[%s4 + $0x1e0] sm:$0xff]
        %v868 = vld [vmem:[%s4 + $0x1e8] sm:$0xff]
        %v869 = vld [vmem:[%s4 + $0x1f0] sm:$0xff]
        %v870 = vld [vmem:[%s4 + $0x1f8] sm:$0xff]
        %v871 = vld [vmem:[%s4 + $0x200] sm:$0xff]
        %v872 = vld [vmem:[%s4 + $0x208] sm:$0xff]
        %v873 = vld [vmem:[%s4 + $0x210] sm:$0xff]
        %v874 = vld [vmem:[%s4 + $0x218] sm:$0xff]
        %v875 = vld [vmem:[%s4 + $0x220] sm:$0xff]
        %v876 = vld [vmem:[%s4 + $0x228] sm:$0xff]
        %v877 = vld [vmem:[%s4 + $0x230] sm:$0xff]
        %v878 = vld [vmem:[%s4 + $0x238] sm:$0xff]
        %v879 = vld [vmem:[%s4 + $0x240] sm:$0xff]
        %v880 = vld [vmem:[%s4 + $0x248] sm:$0xff]
        %v881 = vld [vmem:[%s4 + $0x250] sm:$0xff]
        %v882 = vld [vmem:[%s4 + $0x258] sm:$0xff]
        %v883 = vld [vmem:[%s4 + $0x260] sm:$0xff]
        %v884 = vld [vmem:[%s4 + $0x268] sm:$0xff]
        %v885 = vld [vmem:[%s4 + $0x270] sm:$0xff]
        %v886 = vld [vmem:[%s4 + $0x278] sm:$0xff]
        %v887 = vld [vmem:[%s4 + $0x280] sm:$0xff]
        %v888 = vld [vmem:[%s4 + $0x288] sm:$0xff]
        %v889 = vld [vmem:[%s4 + $0x290] sm:$0xff]
        %v890 = vld [vmem:[%s4 + $0x298] sm:$0xff]
        %v891 = vld [vmem:[%s4 + $0x2a0] sm:$0xff]
        %v892 = vld [vmem:[%s4 + $0x2a8] sm:$0xff]
        %v893 = vld [vmem:[%s4 + $0x2b0] sm:$0xff]
        %v894 = vld [vmem:[%s4 + $0x2b8] sm:$0xff]
        %v895 = vld [vmem:[%s4 + $0x2c0] sm:$0xff]
        %v896 = vld [vmem:[%s4 + $0x2c8] sm:$0xff]
        %v897 = vld [vmem:[%s4 + $0x2d0] sm:$0xff]
        %v898 = vld [vmem:[%s4 + $0x2d8] sm:$0xff]
        %v899 = vld [vmem:[%s4 + $0x2e0] sm:$0xff]
        %v900 = vld [vmem:[%s4 + $0x2e8] sm:$0xff]
        %v901 = vld [vmem:[%s4 + $0x2f0] sm:$0xff]
        %v902 = vld [vmem:[%s4 + $0x2f8] sm:$0xff]
        %v903 = vld [vmem:[%s4 + $0x300] sm:$0xff]
        %v904 = vld [vmem:[%s4 + $0x308] sm:$0xff]
        %v905 = vld [vmem:[%s4 + $0x310] sm:$0xff]
        %v906 = vld [vmem:[%s4 + $0x318] sm:$0xff]
        %v907 = vld [vmem:[%s4 + $0x320] sm:$0xff]
        %v908 = vld [vmem:[%s4 + $0x328] sm:$0xff]
        %v909 = vld [vmem:[%s4 + $0x330] sm:$0xff]
        %v910 = vld [vmem:[%s4 + $0x338] sm:$0xff]
        %v911 = vld [vmem:[%s4 + $0x340] sm:$0xff]
        %v912 = vld [vmem:[%s4 + $0x348] sm:$0xff]
        %v913 = vld [vmem:[%s4 + $0x350] sm:$0xff]
        %v914 = vld [vmem:[%s4 + $0x358] sm:$0xff]
        %v915 = vld [vmem:[%s4 + $0x360] sm:$0xff]
        %v916 = vld [vmem:[%s4 + $0x368] sm:$0xff]
        %v917 = vld [vmem:[%s4 + $0x370] sm:$0xff]
        %v918 = vld [vmem:[%s4 + $0x378] sm:$0xff]
        %v919 = vld [vmem:[%s4 + $0x380] sm:$0xff]
        %v920 = vld [vmem:[%s4 + $0x388] sm:$0xff]
        %v921 = vld [vmem:[%s4 + $0x390] sm:$0xff]
        %v922 = vld [vmem:[%s4 + $0x398] sm:$0xff]
        %v923 = vld [vmem:[%s4 + $0x3a0] sm:$0xff]
        %v924 = vld [vmem:[%s4 + $0x3a8] sm:$0xff]
        %v925 = vld [vmem:[%s4 + $0x3b0] sm:$0xff]
        %v926 = vld [vmem:[%s4 + $0x3b8] sm:$0xff]
        %v927 = vld [vmem:[%s4 + $0x3c0] sm:$0xff]
        %v928 = vld [vmem:[%s4 + $0x3c8] sm:$0xff]
        %v929 = vld [vmem:[%s4 + $0x3d0] sm:$0xff]
        %v930 = vld [vmem:[%s4 + $0x3d8] sm:$0xff]
        %v931 = vld [vmem:[%s4 + $0x3e0] sm:$0xff]
        %v932 = vld [vmem:[%s4 + $0x3e8] sm:$0xff]
        %v933 = vld [vmem:[%s4 + $0x3f0] sm:$0xff]
        %v934 = vld [vmem:[%s4 + $0x3f8] sm:$0xff]
        %v1063 = vunpack.c.l.b16 %v807
        %v1064 = vunpack.c.h.b16 %v807
        %v1065 = vunpack.c.l.b16 %v808
        %v1066 = vunpack.c.h.b16 %v808
        %v1067 = vunpack.c.l.b16 %v809
        %v1068 = vunpack.c.h.b16 %v809
        %v1069 = vunpack.c.l.b16 %v810
        %v1070 = vunpack.c.h.b16 %v810
        %v1071 = vunpack.c.l.b16 %v811
        %v1072 = vunpack.c.h.b16 %v811
        %v1073 = vunpack.c.l.b16 %v812
        %v1074 = vunpack.c.h.b16 %v812
        %v1075 = vunpack.c.l.b16 %v813
        %v1076 = vunpack.c.h.b16 %v813
        %v1077 = vunpack.c.l.b16 %v814
        %v1078 = vunpack.c.h.b16 %v814
        %v1079 = vunpack.c.l.b16 %v815
        %v1080 = vunpack.c.h.b16 %v815
        %v1081 = vunpack.c.l.b16 %v816
        %v1082 = vunpack.c.h.b16 %v816
        %v1083 = vunpack.c.l.b16 %v817
        %v1084 = vunpack.c.h.b16 %v817
        %v1085 = vunpack.c.l.b16 %v818
        %v1086 = vunpack.c.h.b16 %v818
        %v1087 = vunpack.c.l.b16 %v819
        %v1088 = vunpack.c.h.b16 %v819
        %v1089 = vunpack.c.l.b16 %v820
        %v1090 = vunpack.c.h.b16 %v820
        %v1091 = vunpack.c.l.b16 %v821
        %v1092 = vunpack.c.h.b16 %v821
        %v1093 = vunpack.c.l.b16 %v822
        %v1094 = vunpack.c.h.b16 %v822
        %v1095 = vunpack.c.l.b16 %v823
        %v1096 = vunpack.c.h.b16 %v823
        %v1097 = vunpack.c.l.b16 %v824
        %v1098 = vunpack.c.h.b16 %v824
        %v1099 = vunpack.c.l.b16 %v825
        %v1100 = vunpack.c.h.b16 %v825
        %v1101 = vunpack.c.l.b16 %v826
        %v1102 = vunpack.c.h.b16 %v826
        %v1103 = vunpack.c.l.b16 %v827
        %v1104 = vunpack.c.h.b16 %v827
        %v1105 = vunpack.c.l.b16 %v828
        %v1106 = vunpack.c.h.b16 %v828
        %v1107 = vunpack.c.l.b16 %v829
        %v1108 = vunpack.c.h.b16 %v829
        %v1109 = vunpack.c.l.b16 %v830
        %v1110 = vunpack.c.h.b16 %v830
        %v1111 = vunpack.c.l.b16 %v831
        %v1112 = vunpack.c.h.b16 %v831
        %v1113 = vunpack.c.l.b16 %v832
        %v1114 = vunpack.c.h.b16 %v832
        %v1115 = vunpack.c.l.b16 %v833
        %v1116 = vunpack.c.h.b16 %v833
        %v1117 = vunpack.c.l.b16 %v834
        %v1118 = vunpack.c.h.b16 %v834
        %v1119 = vunpack.c.l.b16 %v835
        %v1120 = vunpack.c.h.b16 %v835
        %v1121 = vunpack.c.l.b16 %v836
        %v1122 = vunpack.c.h.b16 %v836
        %v1123 = vunpack.c.l.b16 %v837
        %v1124 = vunpack.c.h.b16 %v837
        %v1125 = vunpack.c.l.b16 %v838
        %v1126 = vunpack.c.h.b16 %v838
        %v1127 = vunpack.c.l.b16 %v839
        %v1128 = vunpack.c.h.b16 %v839
        %v1129 = vunpack.c.l.b16 %v840
        %v1130 = vunpack.c.h.b16 %v840
        %v1131 = vunpack.c.l.b16 %v841
        %v1132 = vunpack.c.h.b16 %v841
        %v1133 = vunpack.c.l.b16 %v842
        %v1134 = vunpack.c.h.b16 %v842
        %v1135 = vunpack.c.l.b16 %v843
        %v1136 = vunpack.c.h.b16 %v843
        %v1137 = vunpack.c.l.b16 %v844
        %v1138 = vunpack.c.h.b16 %v844
        %v1139 = vunpack.c.l.b16 %v845
        %v1140 = vunpack.c.h.b16 %v845
        %v1141 = vunpack.c.l.b16 %v846
        %v1142 = vunpack.c.h.b16 %v846
        %v1143 = vunpack.c.l.b16 %v847
        %v1144 = vunpack.c.h.b16 %v847
        %v1145 = vunpack.c.l.b16 %v848
        %v1146 = vunpack.c.h.b16 %v848
        %v1147 = vunpack.c.l.b16 %v849
        %v1148 = vunpack.c.h.b16 %v849
        %v1149 = vunpack.c.l.b16 %v850
        %v1150 = vunpack.c.h.b16 %v850
        %v1151 = vunpack.c.l.b16 %v851
        %v1152 = vunpack.c.h.b16 %v851
        %v1153 = vunpack.c.l.b16 %v852
        %v1154 = vunpack.c.h.b16 %v852
        %v1155 = vunpack.c.l.b16 %v853
        %v1156 = vunpack.c.h.b16 %v853
        %v1157 = vunpack.c.l.b16 %v854
        %v1158 = vunpack.c.h.b16 %v854
        %v1159 = vunpack.c.l.b16 %v855
        %v1160 = vunpack.c.h.b16 %v855
        %v1161 = vunpack.c.l.b16 %v856
        %v1162 = vunpack.c.h.b16 %v856
        %v1163 = vunpack.c.l.b16 %v857
        %v1164 = vunpack.c.h.b16 %v857
        %v1165 = vunpack.c.l.b16 %v858
        %v1166 = vunpack.c.h.b16 %v858
        %v1167 = vunpack.c.l.b16 %v859
        %v1168 = vunpack.c.h.b16 %v859
        %v1169 = vunpack.c.l.b16 %v860
        %v1170 = vunpack.c.h.b16 %v860
        %v1171 = vunpack.c.l.b16 %v861
        %v1172 = vunpack.c.h.b16 %v861
        %v1173 = vunpack.c.l.b16 %v862
        %v1174 = vunpack.c.h.b16 %v862
        %v1175 = vunpack.c.l.b16 %v863
        %v1176 = vunpack.c.h.b16 %v863
        %v1177 = vunpack.c.l.b16 %v864
        %v1178 = vunpack.c.h.b16 %v864
        %v1179 = vunpack.c.l.b16 %v865
        %v1180 = vunpack.c.h.b16 %v865
        %v1181 = vunpack.c.l.b16 %v866
        %v1182 = vunpack.c.h.b16 %v866
        %v1183 = vunpack.c.l.b16 %v867
        %v1184 = vunpack.c.h.b16 %v867
        %v1185 = vunpack.c.l.b16 %v868
        %v1186 = vunpack.c.h.b16 %v868
        %v1187 = vunpack.c.l.b16 %v869
        %v1188 = vunpack.c.h.b16 %v869
        %v1189 = vunpack.c.l.b16 %v870
        %v1190 = vunpack.c.h.b16 %v870
        %v1191 = vunpack.c.l.b16 %v871
        %v1192 = vunpack.c.h.b16 %v871
        %v1193 = vunpack.c.l.b16 %v872
        %v1194 = vunpack.c.h.b16 %v872
        %v1195 = vunpack.c.l.b16 %v873
        %v1196 = vunpack.c.h.b16 %v873
        %v1197 = vunpack.c.l.b16 %v874
        %v1198 = vunpack.c.h.b16 %v874
        %v1199 = vunpack.c.l.b16 %v875
        %v1200 = vunpack.c.h.b16 %v875
        %v1201 = vunpack.c.l.b16 %v876
        %v1202 = vunpack.c.h.b16 %v876
        %v1203 = vunpack.c.l.b16 %v877
        %v1204 = vunpack.c.h.b16 %v877
        %v1205 = vunpack.c.l.b16 %v878
        %v1206 = vunpack.c.h.b16 %v878
        %v1207 = vunpack.c.l.b16 %v879
        %v1208 = vunpack.c.h.b16 %v879
        %v1209 = vunpack.c.l.b16 %v880
        %v1210 = vunpack.c.h.b16 %v880
        %v1211 = vunpack.c.l.b16 %v881
        %v1212 = vunpack.c.h.b16 %v881
        %v1213 = vunpack.c.l.b16 %v882
        %v1214 = vunpack.c.h.b16 %v882
        %v1215 = vunpack.c.l.b16 %v883
        %v1216 = vunpack.c.h.b16 %v883
        %v1217 = vunpack.c.l.b16 %v884
        %v1218 = vunpack.c.h.b16 %v884
        %v1219 = vunpack.c.l.b16 %v885
        %v1220 = vunpack.c.h.b16 %v885
        %v1221 = vunpack.c.l.b16 %v886
        %v1222 = vunpack.c.h.b16 %v886
        %v1223 = vunpack.c.l.b16 %v887
        %v1224 = vunpack.c.h.b16 %v887
        %v1225 = vunpack.c.l.b16 %v888
        %v1226 = vunpack.c.h.b16 %v888
        %v1227 = vunpack.c.l.b16 %v889
        %v1228 = vunpack.c.h.b16 %v889
        %v1229 = vunpack.c.l.b16 %v890
        %v1230 = vunpack.c.h.b16 %v890
        %v1231 = vunpack.c.l.b16 %v891
        %v1232 = vunpack.c.h.b16 %v891
        %v1233 = vunpack.c.l.b16 %v892
        %v1234 = vunpack.c.h.b16 %v892
        %v1235 = vunpack.c.l.b16 %v893
        %v1236 = vunpack.c.h.b16 %v893
        %v1237 = vunpack.c.l.b16 %v894
        %v1238 = vunpack.c.h.b16 %v894
        %v1239 = vunpack.c.l.b16 %v895
        %v1240 = vunpack.c.h.b16 %v895
        %v1241 = vunpack.c.l.b16 %v896
        %v1242 = vunpack.c.h.b16 %v896
        %v1243 = vunpack.c.l.b16 %v897
        %v1244 = vunpack.c.h.b16 %v897
        %v1245 = vunpack.c.l.b16 %v898
        %v1246 = vunpack.c.h.b16 %v898
        %v1247 = vunpack.c.l.b16 %v899
        %v1248 = vunpack.c.h.b16 %v899
        %v1249 = vunpack.c.l.b16 %v900
        %v1250 = vunpack.c.h.b16 %v900
        %v1251 = vunpack.c.l.b16 %v901
        %v1252 = vunpack.c.h.b16 %v901
        %v1253 = vunpack.c.l.b16 %v902
        %v1254 = vunpack.c.h.b16 %v902
        %v1255 = vunpack.c.l.b16 %v903
        %v1256 = vunpack.c.h.b16 %v903
        %v1257 = vunpack.c.l.b16 %v904
        %v1258 = vunpack.c.h.b16 %v904
        %v1259 = vunpack.c.l.b16 %v905
        %v1260 = vunpack.c.h.b16 %v905
        %v1261 = vunpack.c.l.b16 %v906
        %v1262 = vunpack.c.h.b16 %v906
        %v1263 = vunpack.c.l.b16 %v907
        %v1264 = vunpack.c.h.b16 %v907
        %v1265 = vunpack.c.l.b16 %v908
        %v1266 = vunpack.c.h.b16 %v908
        %v1267 = vunpack.c.l.b16 %v909
        %v1268 = vunpack.c.h.b16 %v909
        %v1269 = vunpack.c.l.b16 %v910
        %v1270 = vunpack.c.h.b16 %v910
        %v1271 = vunpack.c.l.b16 %v911
        %v1272 = vunpack.c.h.b16 %v911
        %v1273 = vunpack.c.l.b16 %v912
        %v1274 = vunpack.c.h.b16 %v912
        %v1275 = vunpack.c.l.b16 %v913
        %v1276 = vunpack.c.h.b16 %v913
        %v1277 = vunpack.c.l.b16 %v914
        %v1278 = vunpack.c.h.b16 %v914
        %v1279 = vunpack.c.l.b16 %v915
        %v1280 = vunpack.c.h.b16 %v915
        %v1281 = vunpack.c.l.b16 %v916
        %v1282 = vunpack.c.h.b16 %v916
        %v1283 = vunpack.c.l.b16 %v917
        %v1284 = vunpack.c.h.b16 %v917
        %v1285 = vunpack.c.l.b16 %v918
        %v1286 = vunpack.c.h.b16 %v918
        %v1287 = vunpack.c.l.b16 %v919
        %v1288 = vunpack.c.h.b16 %v919
        %v1289 = vunpack.c.l.b16 %v920
        %v1290 = vunpack.c.h.b16 %v920
        %v1291 = vunpack.c.l.b16 %v921
        %v1292 = vunpack.c.h.b16 %v921
        %v1293 = vunpack.c.l.b16 %v922
        %v1294 = vunpack.c.h.b16 %v922
        %v1295 = vunpack.c.l.b16 %v923
        %v1296 = vunpack.c.h.b16 %v923
        %v1297 = vunpack.c.l.b16 %v924
        %v1298 = vunpack.c.h.b16 %v924
        %v1299 = vunpack.c.l.b16 %v925
        %v1300 = vunpack.c.h.b16 %v925
        %v1301 = vunpack.c.l.b16 %v926
        %v1302 = vunpack.c.h.b16 %v926
        %v1303 = vunpack.c.l.b16 %v927
        %v1304 = vunpack.c.h.b16 %v927
        %v1305 = vunpack.c.l.b16 %v928
        %v1306 = vunpack.c.h.b16 %v928
        %v1307 = vunpack.c.l.b16 %v929
        %v1308 = vunpack.c.h.b16 %v929
        %v1309 = vunpack.c.l.b16 %v930
        %v1310 = vunpack.c.h.b16 %v930
        %v1311 = vunpack.c.l.b16 %v931
        %v1312 = vunpack.c.h.b16 %v931
        %v1313 = vunpack.c.l.b16 %v932
        %v1314 = vunpack.c.h.b16 %v932
        %v1315 = vunpack.c.l.b16 %v933
        %v1316 = vunpack.c.h.b16 %v933
        %v1317 = vunpack.c.l.b16 %v934
        %v1318 = vunpack.c.h.b16 %v934
        %v1319 = vpack.c.b16 %v1067, %v1063
        %v1320 = vpack.c.b16 %v1068, %v1064
        %v1321 = vpack.c.b16 %v1069, %v1065
        %v1322 = vpack.c.b16 %v1070, %v1066
        %v1323 = vpack.c.b16 %v1075, %v1071
        %v1324 = vpack.c.b16 %v1076, %v1072
        %v1325 = vpack.c.b16 %v1077, %v1073
        %v1326 = vpack.c.b16 %v1078, %v1074
        %v1327 = vpack.c.b16 %v1083, %v1079
        %v1328 = vpack.c.b16 %v1084, %v1080
        %v1329 = vpack.c.b16 %v1085, %v1081
        %v1330 = vpack.c.b16 %v1086, %v1082
        %v1331 = vpack.c.b16 %v1091, %v1087
        %v1332 = vpack.c.b16 %v1092, %v1088
        %v1333 = vpack.c.b16 %v1093, %v1089
        %v1334 = vpack.c.b16 %v1094, %v1090
        %v1335 = vpack.c.b16 %v1099, %v1095
        %v1336 = vpack.c.b16 %v1100, %v1096
        %v1337 = vpack.c.b16 %v1101, %v1097
        %v1338 = vpack.c.b16 %v1102, %v1098
        %v1339 = vpack.c.b16 %v1107, %v1103
        %v1340 = vpack.c.b16 %v1108, %v1104
        %v1341 = vpack.c.b16 %v1109, %v1105
        %v1342 = vpack.c.b16 %v1110, %v1106
        %v1343 = vpack.c.b16 %v1115, %v1111
        %v1344 = vpack.c.b16 %v1116, %v1112
        %v1345 = vpack.c.b16 %v1117, %v1113
        %v1346 = vpack.c.b16 %v1118, %v1114
        %v1347 = vpack.c.b16 %v1123, %v1119
        %v1348 = vpack.c.b16 %v1124, %v1120
        %v1349 = vpack.c.b16 %v1125, %v1121
        %v1350 = vpack.c.b16 %v1126, %v1122
        %v1351 = vpack.c.b16 %v1131, %v1127
        %v1352 = vpack.c.b16 %v1132, %v1128
        %v1353 = vpack.c.b16 %v1133, %v1129
        %v1354 = vpack.c.b16 %v1134, %v1130
        %v1355 = vpack.c.b16 %v1139, %v1135
        %v1356 = vpack.c.b16 %v1140, %v1136
        %v1357 = vpack.c.b16 %v1141, %v1137
        %v1358 = vpack.c.b16 %v1142, %v1138
        %v1359 = vpack.c.b16 %v1147, %v1143
        %v1360 = vpack.c.b16 %v1148, %v1144
        %v1361 = vpack.c.b16 %v1149, %v1145
        %v1362 = vpack.c.b16 %v1150, %v1146
        %v1363 = vpack.c.b16 %v1155, %v1151
        %v1364 = vpack.c.b16 %v1156, %v1152
        %v1365 = vpack.c.b16 %v1157, %v1153
        %v1366 = vpack.c.b16 %v1158, %v1154
        %v1367 = vpack.c.b16 %v1163, %v1159
        %v1368 = vpack.c.b16 %v1164, %v1160
        %v1369 = vpack.c.b16 %v1165, %v1161
        %v1370 = vpack.c.b16 %v1166, %v1162
        %v1371 = vpack.c.b16 %v1171, %v1167
        %v1372 = vpack.c.b16 %v1172, %v1168
        %v1373 = vpack.c.b16 %v1173, %v1169
        %v1374 = vpack.c.b16 %v1174, %v1170
        %v1375 = vpack.c.b16 %v1179, %v1175
        %v1376 = vpack.c.b16 %v1180, %v1176
        %v1377 = vpack.c.b16 %v1181, %v1177
        %v1378 = vpack.c.b16 %v1182, %v1178
        %v1379 = vpack.c.b16 %v1187, %v1183
        %v1380 = vpack.c.b16 %v1188, %v1184
        %v1381 = vpack.c.b16 %v1189, %v1185
        %v1382 = vpack.c.b16 %v1190, %v1186
        %v1383 = vpack.c.b16 %v1195, %v1191
        %v1384 = vpack.c.b16 %v1196, %v1192
        %v1385 = vpack.c.b16 %v1197, %v1193
        %v1386 = vpack.c.b16 %v1198, %v1194
        %v1387 = vpack.c.b16 %v1203, %v1199
        %v1388 = vpack.c.b16 %v1204, %v1200
        %v1389 = vpack.c.b16 %v1205, %v1201
        %v1390 = vpack.c.b16 %v1206, %v1202
        %v1391 = vpack.c.b16 %v1211, %v1207
        %v1392 = vpack.c.b16 %v1212, %v1208
        %v1393 = vpack.c.b16 %v1213, %v1209
        %v1394 = vpack.c.b16 %v1214, %v1210
        %v1395 = vpack.c.b16 %v1219, %v1215
        %v1396 = vpack.c.b16 %v1220, %v1216
        %v1397 = vpack.c.b16 %v1221, %v1217
        %v1398 = vpack.c.b16 %v1222, %v1218
        %v1399 = vpack.c.b16 %v1227, %v1223
        %v1400 = vpack.c.b16 %v1228, %v1224
        %v1401 = vpack.c.b16 %v1229, %v1225
        %v1402 = vpack.c.b16 %v1230, %v1226
        %v1403 = vpack.c.b16 %v1235, %v1231
        %v1404 = vpack.c.b16 %v1236, %v1232
        %v1405 = vpack.c.b16 %v1237, %v1233
        %v1406 = vpack.c.b16 %v1238, %v1234
        %v1407 = vpack.c.b16 %v1243, %v1239
        %v1408 = vpack.c.b16 %v1244, %v1240
        %v1409 = vpack.c.b16 %v1245, %v1241
        %v1410 = vpack.c.b16 %v1246, %v1242
        %v1411 = vpack.c.b16 %v1251, %v1247
        %v1412 = vpack.c.b16 %v1252, %v1248
        %v1413 = vpack.c.b16 %v1253, %v1249
        %v1414 = vpack.c.b16 %v1254, %v1250
        %v1415 = vpack.c.b16 %v1259, %v1255
        %v1416 = vpack.c.b16 %v1260, %v1256
        %v1417 = vpack.c.b16 %v1261, %v1257
        %v1418 = vpack.c.b16 %v1262, %v1258
        %v1419 = vpack.c.b16 %v1267, %v1263
        %v1420 = vpack.c.b16 %v1268, %v1264
        %v1421 = vpack.c.b16 %v1269, %v1265
        %v1422 = vpack.c.b16 %v1270, %v1266
        %v1423 = vpack.c.b16 %v1275, %v1271
        %v1424 = vpack.c.b16 %v1276, %v1272
        %v1425 = vpack.c.b16 %v1277, %v1273
        %v1426 = vpack.c.b16 %v1278, %v1274
        %v1427 = vpack.c.b16 %v1283, %v1279
        %v1428 = vpack.c.b16 %v1284, %v1280
        %v1429 = vpack.c.b16 %v1285, %v1281
        %v1430 = vpack.c.b16 %v1286, %v1282
        %v1431 = vpack.c.b16 %v1291, %v1287
        %v1432 = vpack.c.b16 %v1292, %v1288
        %v1433 = vpack.c.b16 %v1293, %v1289
        %v1434 = vpack.c.b16 %v1294, %v1290
        %v1435 = vpack.c.b16 %v1299, %v1295
        %v1436 = vpack.c.b16 %v1300, %v1296
        %v1437 = vpack.c.b16 %v1301, %v1297
        %v1438 = vpack.c.b16 %v1302, %v1298
        %v1439 = vpack.c.b16 %v1307, %v1303
        %v1440 = vpack.c.b16 %v1308, %v1304
        %v1441 = vpack.c.b16 %v1309, %v1305
        %v1442 = vpack.c.b16 %v1310, %v1306
        %v1443 = vpack.c.b16 %v1315, %v1311
        %v1444 = vpack.c.b16 %v1316, %v1312
        %v1445 = vpack.c.b16 %v1317, %v1313
        %v1446 = vpack.c.b16 %v1318, %v1314
        %1575 = vmatprep.subr.bf16.mxu0 %v1348
        %1576 = vmatpush1.bf16.msra.mxu0 %v1347
        %1577 = vmatprep.subr.bf16.mxu0 %v1344
        %1578 = vmatpush1.bf16.msra.mxu0 %v1343
        %1579 = vmatprep.subr.bf16.mxu0 %v1340
        %1580 = vmatpush1.bf16.msra.mxu0 %v1339
        %1581 = vmatprep.subr.bf16.mxu0 %v1336
        %1582 = vmatpush1.bf16.msra.mxu0 %v1335
        %1583 = vmatprep.subr.bf16.mxu0 %v1332
        %1584 = vmatpush1.bf16.msra.mxu0 %v1331
        %1585 = vmatprep.subr.bf16.mxu0 %v1328
        %1586 = vmatpush1.bf16.msra.mxu0 %v1327
        %1587 = vmatprep.subr.bf16.mxu0 %v1324
        %1588 = vmatpush1.bf16.msra.mxu0 %v1323
        %1589 = vmatprep.subr.bf16.mxu0 %v1320
        %1590 = vmatpush1.bf16.msra.mxu0 %v1319
        %1591 = vmatprep.subr.bf16.mxu0 %v1380
        %1592 = vmatpush2.bf16.msra.mxu0 %v1379
        %1593 = vmatprep.subr.bf16.mxu0 %v1376
        %1594 = vmatpush2.bf16.msra.mxu0 %v1375
        %1595 = vmatprep.subr.bf16.mxu0 %v1372
        %1596 = vmatpush2.bf16.msra.mxu0 %v1371
        %1597 = vmatprep.subr.bf16.mxu0 %v1368
        %1598 = vmatpush2.bf16.msra.mxu0 %v1367
        %1599 = vmatprep.subr.bf16.mxu0 %v1364
        %1600 = vmatpush2.bf16.msra.mxu0 %v1363
        %1601 = vmatprep.subr.bf16.mxu0 %v1360
        %1602 = vmatpush2.bf16.msra.mxu0 %v1359
        %1603 = vmatprep.subr.bf16.mxu0 %v1356
        %1604 = vmatpush2.bf16.msra.mxu0 %v1355
        %1605 = vmatprep.subr.bf16.mxu0 %v1352
        %1606 = vmatpush2.bf16.msra.mxu0 %v1351
        %1607 = vmatprep.mubr.bf16.mxu0 %v804
        %1608 = vmatmul.mubr.bf16.gmra.mxu0 %v803
        %v1609 = vpop.f32.mrf.mxu0
        %v1610 = vadd.f32 0.0, %v1609
        %v1611 = vpop.f32.mrf.mxu0
        %v1612 = vadd.f32 0.0, %v1611
        %v1613 = vpop.f32.mrf.mxu0
        %v1614 = vpop.f32.mrf.mxu0
        %1615 = vdwg.mxu0
        %1616 = vmatprep.subr.bf16.mxu0 %v1412
        %1617 = vmatpush1.bf16.msra.mxu0 %v1411
        %1618 = vmatprep.subr.bf16.mxu0 %v1408
        %1619 = vmatpush1.bf16.msra.mxu0 %v1407
        %1620 = vmatprep.subr.bf16.mxu0 %v1404
        %1621 = vmatpush1.bf16.msra.mxu0 %v1403
        %1622 = vmatprep.subr.bf16.mxu0 %v1400
        %1623 = vmatpush1.bf16.msra.mxu0 %v1399
        %1624 = vmatprep.subr.bf16.mxu0 %v1396
        %1625 = vmatpush1.bf16.msra.mxu0 %v1395
        %1626 = vmatprep.subr.bf16.mxu0 %v1392
        %1627 = vmatpush1.bf16.msra.mxu0 %v1391
        %1628 = vmatprep.subr.bf16.mxu0 %v1388
        %1629 = vmatpush1.bf16.msra.mxu0 %v1387
        %1630 = vmatprep.subr.bf16.mxu0 %v1384
        %1631 = vmatpush1.bf16.msra.mxu0 %v1383
        %1632 = vmatprep.subr.bf16.mxu0 %v1444
        %1633 = vmatpush2.bf16.msra.mxu0 %v1443
        %1634 = vmatprep.subr.bf16.mxu0 %v1440
        %1635 = vmatpush2.bf16.msra.mxu0 %v1439
        %1636 = vmatprep.subr.bf16.mxu0 %v1436
        %1637 = vmatpush2.bf16.msra.mxu0 %v1435
        %1638 = vmatprep.subr.bf16.mxu0 %v1432
        %1639 = vmatpush2.bf16.msra.mxu0 %v1431
        %1640 = vmatprep.subr.bf16.mxu0 %v1428
        %1641 = vmatpush2.bf16.msra.mxu0 %v1427
        %1642 = vmatprep.subr.bf16.mxu0 %v1424
        %1643 = vmatpush2.bf16.msra.mxu0 %v1423
        %1644 = vmatprep.subr.bf16.mxu0 %v1420
        %1645 = vmatpush2.bf16.msra.mxu0 %v1419
        %1646 = vmatprep.subr.bf16.mxu0 %v1416
        %1647 = vmatpush2.bf16.msra.mxu0 %v1415
        %1648 = vmatprep.mubr.bf16.mxu0 %v806
        %1649 = vmatmul.mubr.bf16.gmra.mxu0 %v805
        %v1650 = vpop.f32.mrf.mxu0
        %v1651 = vadd.f32 %v1610, %v1650
        %v1652 = vpop.f32.mrf.mxu0
        %v1653 = vadd.f32 %v1612, %v1652
        %v1654 = vpop.f32.mrf.mxu0
        %v1655 = vpop.f32.mrf.mxu0
        %1656 = vdwg.mxu0
        %1657 = vmatprep.subr.bf16.mxu0 %v1350
        %1658 = vmatpush1.bf16.msra.mxu0 %v1349
        %1659 = vmatprep.subr.bf16.mxu0 %v1346
        %1660 = vmatpush1.bf16.msra.mxu0 %v1345
        %1661 = vmatprep.subr.bf16.mxu0 %v1342
        %1662 = vmatpush1.bf16.msra.mxu0 %v1341
        %1663 = vmatprep.subr.bf16.mxu0 %v1338
        %1664 = vmatpush1.bf16.msra.mxu0 %v1337
        %1665 = vmatprep.subr.bf16.mxu0 %v1334
        %1666 = vmatpush1.bf16.msra.mxu0 %v1333
        %1667 = vmatprep.subr.bf16.mxu0 %v1330
        %1668 = vmatpush1.bf16.msra.mxu0 %v1329
        %1669 = vmatprep.subr.bf16.mxu0 %v1326
        %1670 = vmatpush1.bf16.msra.mxu0 %v1325
        %1671 = vmatprep.subr.bf16.mxu0 %v1322
        %1672 = vmatpush1.bf16.msra.mxu0 %v1321
        %1673 = vmatprep.subr.bf16.mxu0 %v1382
        %1674 = vmatpush2.bf16.msra.mxu0 %v1381
        %1675 = vmatprep.subr.bf16.mxu0 %v1378
        %1676 = vmatpush2.bf16.msra.mxu0 %v1377
        %1677 = vmatprep.subr.bf16.mxu0 %v1374
        %1678 = vmatpush2.bf16.msra.mxu0 %v1373
        %1679 = vmatprep.subr.bf16.mxu0 %v1370
        %1680 = vmatpush2.bf16.msra.mxu0 %v1369
        %1681 = vmatprep.subr.bf16.mxu0 %v1366
        %1682 = vmatpush2.bf16.msra.mxu0 %v1365
        %1683 = vmatprep.subr.bf16.mxu0 %v1362
        %1684 = vmatpush2.bf16.msra.mxu0 %v1361
        %1685 = vmatprep.subr.bf16.mxu0 %v1358
        %1686 = vmatpush2.bf16.msra.mxu0 %v1357
        %1687 = vmatprep.subr.bf16.mxu0 %v1354
        %1688 = vmatpush2.bf16.msra.mxu0 %v1353
        %1689 = vmatprep.mubr.bf16.mxu0 %v804
        %1690 = vmatmul.mubr.bf16.gmra.mxu0 %v803
        %v1691 = vpop.f32.mrf.mxu0
        %v1692 = vadd.f32 0.0, %v1691
        %v1693 = vpop.f32.mrf.mxu0
        %v1694 = vadd.f32 0.0, %v1693
        %v1695 = vpop.f32.mrf.mxu0
        %v1696 = vpop.f32.mrf.mxu0
        %1697 = vdwg.mxu0
        %1698 = vmatprep.subr.bf16.mxu0 %v1414
        %1699 = vmatpush1.bf16.msra.mxu0 %v1413
        %1700 = vmatprep.subr.bf16.mxu0 %v1410
        %1701 = vmatpush1.bf16.msra.mxu0 %v1409
        %1702 = vmatprep.subr.bf16.mxu0 %v1406
        %1703 = vmatpush1.bf16.msra.mxu0 %v1405
        %1704 = vmatprep.subr.bf16.mxu0 %v1402
        %1705 = vmatpush1.bf16.msra.mxu0 %v1401
        %1706 = vmatprep.subr.bf16.mxu0 %v1398
        %1707 = vmatpush1.bf16.msra.mxu0 %v1397
        %1708 = vmatprep.subr.bf16.mxu0 %v1394
        %1709 = vmatpush1.bf16.msra.mxu0 %v1393
        %1710 = vmatprep.subr.bf16.mxu0 %v1390
        %1711 = vmatpush1.bf16.msra.mxu0 %v1389
        %1712 = vmatprep.subr.bf16.mxu0 %v1386
        %1713 = vmatpush1.bf16.msra.mxu0 %v1385
        %1714 = vmatprep.subr.bf16.mxu0 %v1446
        %1715 = vmatpush2.bf16.msra.mxu0 %v1445
        %1716 = vmatprep.subr.bf16.mxu0 %v1442
        %1717 = vmatpush2.bf16.msra.mxu0 %v1441
        %1718 = vmatprep.subr.bf16.mxu0 %v1438
        %1719 = vmatpush2.bf16.msra.mxu0 %v1437
        %1720 = vmatprep.subr.bf16.mxu0 %v1434
        %1721 = vmatpush2.bf16.msra.mxu0 %v1433
        %1722 = vmatprep.subr.bf16.mxu0 %v1430
        %1723 = vmatpush2.bf16.msra.mxu0 %v1429
        %1724 = vmatprep.subr.bf16.mxu0 %v1426
        %1725 = vmatpush2.bf16.msra.mxu0 %v1425
        %1726 = vmatprep.subr.bf16.mxu0 %v1422
        %1727 = vmatpush2.bf16.msra.mxu0 %v1421
        %1728 = vmatprep.subr.bf16.mxu0 %v1418
        %1729 = vmatpush2.bf16.msra.mxu0 %v1417
        %1730 = vmatprep.mubr.bf16.mxu0 %v806
        %1731 = vmatmul.mubr.bf16.gmra.mxu0 %v805
        %v1732 = vpop.f32.mrf.mxu0
        %v1733 = vadd.f32 %v1692, %v1732
        %v1734 = vpop.f32.mrf.mxu0
        %v1735 = vadd.f32 %v1694, %v1734
        %v1736 = vpop.f32.mrf.mxu0
        %v1737 = vpop.f32.mrf.mxu0
        %1738 = vdwg.mxu0
        %v1739 = vld [vmem:[%s5] sm:$0xf]
        %v1741 = vlaneseq
        %v1742 = vshrl.u32 %v1741, 7
        %v1743 = vsub.s32 0, %v1742
        %v1744 = vrot.slane %v1739, %v1743
        %v1745 = vlaneseq
        %v1746 = vshrl.u32 %v1745, 7
        %v1747 = vsub.s32 1, %v1746
        %v1748 = vrot.slane %v1739, %v1747
        %v1749 = vlaneseq
        %v1750 = vshrl.u32 %v1749, 7
        %v1751 = vsub.s32 2, %v1750
        %v1752 = vrot.slane %v1739, %v1751
        %v1753 = vlaneseq
        %v1754 = vshrl.u32 %v1753, 7
        %v1755 = vsub.s32 3, %v1754
        %v1756 = vrot.slane %v1739, %v1755
        %1761 = vmatprep.subr.mxu0 0.0
        %1762 = vmatpush1.msra.mxu0 0.0
        %1763 = vmatprep.subr.mxu0 0.0
        %1764 = vmatpush1.msra.mxu0 0.0
        %1765 = vmatprep.subr.mxu0 0.0
        %1766 = vmatpush1.msra.mxu0 0.0
        %1767 = vmatprep.subr.mxu0 0.0
        %1768 = vmatpush1.msra.mxu0 0.0
        %1769 = vmatprep.subr.mxu0 0.0
        %1770 = vmatpush1.msra.mxu0 0.0
        %1771 = vmatprep.subr.mxu0 0.0
        %1772 = vmatpush1.msra.mxu0 0.0
        %1773 = vmatprep.subr.mxu0 0.0
        %1774 = vmatpush1.msra.mxu0 0.0
        %1775 = vmatprep.subr.mxu0 0.0
        %1776 = vmatpush1.msra.mxu0 0.0
        %1777 = vmatprep.subr.mxu0 0.0
        %1778 = vmatpush1.msra.mxu0 0.0
        %1779 = vmatprep.subr.mxu0 0.0
        %1780 = vmatpush1.msra.mxu0 0.0
        %1781 = vmatprep.subr.mxu0 0.0
        %1782 = vmatpush1.msra.mxu0 0.0
        %1783 = vmatprep.subr.mxu0 0.0
        %1784 = vmatpush1.msra.mxu0 0.0
        %1785 = vmatprep.subr.mxu0 0.0
        %1786 = vmatpush1.msra.mxu0 0.0
        %1787 = vmatprep.subr.mxu0 0.0
        %1788 = vmatpush1.msra.mxu0 0.0
        %1789 = vmatprep.subr.mxu0 0.0
        %1790 = vmatpush1.msra.mxu0 0.0
        %1791 = vmatprep.subr.mxu0 %v1653
        %1792 = vmatpush1.msra.mxu0 %v1651
        %1793 = vmatprep.subr.mxu0 0.0
        %1794 = vmatpush2.msra.mxu0 0.0
        %1795 = vmatprep.subr.mxu0 0.0
        %1796 = vmatpush2.msra.mxu0 0.0
        %1797 = vmatprep.subr.mxu0 0.0
        %1798 = vmatpush2.msra.mxu0 0.0
        %1799 = vmatprep.subr.mxu0 0.0
        %1800 = vmatpush2.msra.mxu0 0.0
        %1801 = vmatprep.subr.mxu0 0.0
        %1802 = vmatpush2.msra.mxu0 0.0
        %1803 = vmatprep.subr.mxu0 0.0
        %1804 = vmatpush2.msra.mxu0 0.0
        %1805 = vmatprep.subr.mxu0 0.0
        %1806 = vmatpush2.msra.mxu0 0.0
        %1807 = vmatprep.subr.mxu0 0.0
        %1808 = vmatpush2.msra.mxu0 0.0
        %1809 = vmatprep.subr.mxu0 0.0
        %1810 = vmatpush2.msra.mxu0 0.0
        %1811 = vmatprep.subr.mxu0 0.0
        %1812 = vmatpush2.msra.mxu0 0.0
        %1813 = vmatprep.subr.mxu0 0.0
        %1814 = vmatpush2.msra.mxu0 0.0
        %1815 = vmatprep.subr.mxu0 0.0
        %1816 = vmatpush2.msra.mxu0 0.0
        %1817 = vmatprep.subr.mxu0 0.0
        %1818 = vmatpush2.msra.mxu0 0.0
        %1819 = vmatprep.subr.mxu0 0.0
        %1820 = vmatpush2.msra.mxu0 0.0
        %1821 = vmatprep.subr.mxu0 0.0
        %1822 = vmatpush2.msra.mxu0 0.0
        %1823 = vmatprep.subr.mxu0 0.0
        %1824 = vmatpush2.msra.mxu0 0.0
        %1825 = vmatprep.mubr.f32.mxu0 0.0
        %1826 = vmatmul.mubr.f32.gmra.mxu0 %v655
        %v1827 = vpop.f32.mrf.mxu0
        %v1828 = vadd.f32 %v1744, %v1827
        %v1829 = vpop.f32.mrf.mxu0
        %v1830 = vadd.f32 %v1748, %v1829
        %1831 = vdwg.mxu0
        %1832 = vmatprep.subr.mxu0 0.0
        %1833 = vmatpush1.msra.mxu0 0.0
        %1834 = vmatprep.subr.mxu0 0.0
        %1835 = vmatpush1.msra.mxu0 0.0
        %1836 = vmatprep.subr.mxu0 0.0
        %1837 = vmatpush1.msra.mxu0 0.0
        %1838 = vmatprep.subr.mxu0 0.0
        %1839 = vmatpush1.msra.mxu0 0.0
        %1840 = vmatprep.subr.mxu0 0.0
        %1841 = vmatpush1.msra.mxu0 0.0
        %1842 = vmatprep.subr.mxu0 0.0
        %1843 = vmatpush1.msra.mxu0 0.0
        %1844 = vmatprep.subr.mxu0 0.0
        %1845 = vmatpush1.msra.mxu0 0.0
        %1846 = vmatprep.subr.mxu0 0.0
        %1847 = vmatpush1.msra.mxu0 0.0
        %1848 = vmatprep.subr.mxu0 0.0
        %1849 = vmatpush1.msra.mxu0 0.0
        %1850 = vmatprep.subr.mxu0 0.0
        %1851 = vmatpush1.msra.mxu0 0.0
        %1852 = vmatprep.subr.mxu0 0.0
        %1853 = vmatpush1.msra.mxu0 0.0
        %1854 = vmatprep.subr.mxu0 0.0
        %1855 = vmatpush1.msra.mxu0 0.0
        %1856 = vmatprep.subr.mxu0 0.0
        %1857 = vmatpush1.msra.mxu0 0.0
        %1858 = vmatprep.subr.mxu0 0.0
        %1859 = vmatpush1.msra.mxu0 0.0
        %1860 = vmatprep.subr.mxu0 0.0
        %1861 = vmatpush1.msra.mxu0 0.0
        %1862 = vmatprep.subr.mxu0 %v1735
        %1863 = vmatpush1.msra.mxu0 %v1733
        %1864 = vmatprep.subr.mxu0 0.0
        %1865 = vmatpush2.msra.mxu0 0.0
        %1866 = vmatprep.subr.mxu0 0.0
        %1867 = vmatpush2.msra.mxu0 0.0
        %1868 = vmatprep.subr.mxu0 0.0
        %1869 = vmatpush2.msra.mxu0 0.0
        %1870 = vmatprep.subr.mxu0 0.0
        %1871 = vmatpush2.msra.mxu0 0.0
        %1872 = vmatprep.subr.mxu0 0.0
        %1873 = vmatpush2.msra.mxu0 0.0
        %1874 = vmatprep.subr.mxu0 0.0
        %1875 = vmatpush2.msra.mxu0 0.0
        %1876 = vmatprep.subr.mxu0 0.0
        %1877 = vmatpush2.msra.mxu0 0.0
        %1878 = vmatprep.subr.mxu0 0.0
        %1879 = vmatpush2.msra.mxu0 0.0
        %1880 = vmatprep.subr.mxu0 0.0
        %1881 = vmatpush2.msra.mxu0 0.0
        %1882 = vmatprep.subr.mxu0 0.0
        %1883 = vmatpush2.msra.mxu0 0.0
        %1884 = vmatprep.subr.mxu0 0.0
        %1885 = vmatpush2.msra.mxu0 0.0
        %1886 = vmatprep.subr.mxu0 0.0
        %1887 = vmatpush2.msra.mxu0 0.0
        %1888 = vmatprep.subr.mxu0 0.0
        %1889 = vmatpush2.msra.mxu0 0.0
        %1890 = vmatprep.subr.mxu0 0.0
        %1891 = vmatpush2.msra.mxu0 0.0
        %1892 = vmatprep.subr.mxu0 0.0
        %1893 = vmatpush2.msra.mxu0 0.0
        %1894 = vmatprep.subr.mxu0 0.0
        %1895 = vmatpush2.msra.mxu0 0.0
        %1896 = vmatprep.mubr.f32.mxu0 0.0
        %1897 = vmatmul.mubr.f32.gmra.mxu0 %v655
        %v1898 = vpop.f32.mrf.mxu0
        %v1899 = vadd.f32 %v1752, %v1898
        %v1900 = vpop.f32.mrf.mxu0
        %v1901 = vadd.f32 %v1756, %v1900
        %1902 = vdwg.mxu0
        %v1903 = vmax.f32 %v1828, 0.0
        %v1904 = vmax.f32 %v1830, 0.0
        %v1905 = vmax.f32 %v1899, 0.0
        %v1906 = vmax.f32 %v1901, 0.0
        %v1907 = vpack.c.bf16 %v1903, %v1903
        %v1908 = vpack.c.bf16 %v1904, %v1904
        %v1909 = vpack.c.bf16 %v1905, %v1905
        %v1910 = vpack.c.bf16 %v1906, %v1906
        %v1911 = vld [vmem:[%s6] sm:$0xff]
        %v1912 = vld [vmem:[%s6 + $0x8] sm:$0xff]
        %v1913 = vld [vmem:[%s6 + $0x10] sm:$0xff]
        %v1914 = vld [vmem:[%s6 + $0x18] sm:$0xff]
        %v1915 = vld [vmem:[%s6 + $0x20] sm:$0xff]
        %v1916 = vld [vmem:[%s6 + $0x28] sm:$0xff]
        %v1917 = vld [vmem:[%s6 + $0x30] sm:$0xff]
        %v1918 = vld [vmem:[%s6 + $0x38] sm:$0xff]
        %v1919 = vld [vmem:[%s6 + $0x40] sm:$0xff]
        %v1920 = vld [vmem:[%s6 + $0x48] sm:$0xff]
        %v1921 = vld [vmem:[%s6 + $0x50] sm:$0xff]
        %v1922 = vld [vmem:[%s6 + $0x58] sm:$0xff]
        %v1923 = vld [vmem:[%s6 + $0x60] sm:$0xff]
        %v1924 = vld [vmem:[%s6 + $0x68] sm:$0xff]
        %v1925 = vld [vmem:[%s6 + $0x70] sm:$0xff]
        %v1926 = vld [vmem:[%s6 + $0x78] sm:$0xff]
        %v1927 = vld [vmem:[%s6 + $0x80] sm:$0xff]
        %v1928 = vld [vmem:[%s6 + $0x88] sm:$0xff]
        %v1929 = vld [vmem:[%s6 + $0x90] sm:$0xff]
        %v1930 = vld [vmem:[%s6 + $0x98] sm:$0xff]
        %v1931 = vld [vmem:[%s6 + $0xa0] sm:$0xff]
        %v1932 = vld [vmem:[%s6 + $0xa8] sm:$0xff]
        %v1933 = vld [vmem:[%s6 + $0xb0] sm:$0xff]
        %v1934 = vld [vmem:[%s6 + $0xb8] sm:$0xff]
        %v1935 = vld [vmem:[%s6 + $0xc0] sm:$0xff]
        %v1936 = vld [vmem:[%s6 + $0xc8] sm:$0xff]
        %v1937 = vld [vmem:[%s6 + $0xd0] sm:$0xff]
        %v1938 = vld [vmem:[%s6 + $0xd8] sm:$0xff]
        %v1939 = vld [vmem:[%s6 + $0xe0] sm:$0xff]
        %v1940 = vld [vmem:[%s6 + $0xe8] sm:$0xff]
        %v1941 = vld [vmem:[%s6 + $0xf0] sm:$0xff]
        %v1942 = vld [vmem:[%s6 + $0xf8] sm:$0xff]
        %v1943 = vld [vmem:[%s6 + $0x100] sm:$0xff]
        %v1944 = vld [vmem:[%s6 + $0x108] sm:$0xff]
        %v1945 = vld [vmem:[%s6 + $0x110] sm:$0xff]
        %v1946 = vld [vmem:[%s6 + $0x118] sm:$0xff]
        %v1947 = vld [vmem:[%s6 + $0x120] sm:$0xff]
        %v1948 = vld [vmem:[%s6 + $0x128] sm:$0xff]
        %v1949 = vld [vmem:[%s6 + $0x130] sm:$0xff]
        %v1950 = vld [vmem:[%s6 + $0x138] sm:$0xff]
        %v1951 = vld [vmem:[%s6 + $0x140] sm:$0xff]
        %v1952 = vld [vmem:[%s6 + $0x148] sm:$0xff]
        %v1953 = vld [vmem:[%s6 + $0x150] sm:$0xff]
        %v1954 = vld [vmem:[%s6 + $0x158] sm:$0xff]
        %v1955 = vld [vmem:[%s6 + $0x160] sm:$0xff]
        %v1956 = vld [vmem:[%s6 + $0x168] sm:$0xff]
        %v1957 = vld [vmem:[%s6 + $0x170] sm:$0xff]
        %v1958 = vld [vmem:[%s6 + $0x178] sm:$0xff]
        %v1959 = vld [vmem:[%s6 + $0x180] sm:$0xff]
        %v1960 = vld [vmem:[%s6 + $0x188] sm:$0xff]
        %v1961 = vld [vmem:[%s6 + $0x190] sm:$0xff]
        %v1962 = vld [vmem:[%s6 + $0x198] sm:$0xff]
        %v1963 = vld [vmem:[%s6 + $0x1a0] sm:$0xff]
        %v1964 = vld [vmem:[%s6 + $0x1a8] sm:$0xff]
        %v1965 = vld [vmem:[%s6 + $0x1b0] sm:$0xff]
        %v1966 = vld [vmem:[%s6 + $0x1b8] sm:$0xff]
        %v1967 = vld [vmem:[%s6 + $0x1c0] sm:$0xff]
        %v1968 = vld [vmem:[%s6 + $0x1c8] sm:$0xff]
        %v1969 = vld [vmem:[%s6 + $0x1d0] sm:$0xff]
        %v1970 = vld [vmem:[%s6 + $0x1d8] sm:$0xff]
        %v1971 = vld [vmem:[%s6 + $0x1e0] sm:$0xff]
        %v1972 = vld [vmem:[%s6 + $0x1e8] sm:$0xff]
        %v1973 = vld [vmem:[%s6 + $0x1f0] sm:$0xff]
        %v1974 = vld [vmem:[%s6 + $0x1f8] sm:$0xff]
        %v1975 = vld [vmem:[%s6 + $0x200] sm:$0xff]
        %v1976 = vld [vmem:[%s6 + $0x208] sm:$0xff]
        %v1977 = vld [vmem:[%s6 + $0x210] sm:$0xff]
        %v1978 = vld [vmem:[%s6 + $0x218] sm:$0xff]
        %v1979 = vld [vmem:[%s6 + $0x220] sm:$0xff]
        %v1980 = vld [vmem:[%s6 + $0x228] sm:$0xff]
        %v1981 = vld [vmem:[%s6 + $0x230] sm:$0xff]
        %v1982 = vld [vmem:[%s6 + $0x238] sm:$0xff]
        %v1983 = vld [vmem:[%s6 + $0x240] sm:$0xff]
        %v1984 = vld [vmem:[%s6 + $0x248] sm:$0xff]
        %v1985 = vld [vmem:[%s6 + $0x250] sm:$0xff]
        %v1986 = vld [vmem:[%s6 + $0x258] sm:$0xff]
        %v1987 = vld [vmem:[%s6 + $0x260] sm:$0xff]
        %v1988 = vld [vmem:[%s6 + $0x268] sm:$0xff]
        %v1989 = vld [vmem:[%s6 + $0x270] sm:$0xff]
        %v1990 = vld [vmem:[%s6 + $0x278] sm:$0xff]
        %v1991 = vld [vmem:[%s6 + $0x280] sm:$0xff]
        %v1992 = vld [vmem:[%s6 + $0x288] sm:$0xff]
        %v1993 = vld [vmem:[%s6 + $0x290] sm:$0xff]
        %v1994 = vld [vmem:[%s6 + $0x298] sm:$0xff]
        %v1995 = vld [vmem:[%s6 + $0x2a0] sm:$0xff]
        %v1996 = vld [vmem:[%s6 + $0x2a8] sm:$0xff]
        %v1997 = vld [vmem:[%s6 + $0x2b0] sm:$0xff]
        %v1998 = vld [vmem:[%s6 + $0x2b8] sm:$0xff]
        %v1999 = vld [vmem:[%s6 + $0x2c0] sm:$0xff]
        %v2000 = vld [vmem:[%s6 + $0x2c8] sm:$0xff]
        %v2001 = vld [vmem:[%s6 + $0x2d0] sm:$0xff]
        %v2002 = vld [vmem:[%s6 + $0x2d8] sm:$0xff]
        %v2003 = vld [vmem:[%s6 + $0x2e0] sm:$0xff]
        %v2004 = vld [vmem:[%s6 + $0x2e8] sm:$0xff]
        %v2005 = vld [vmem:[%s6 + $0x2f0] sm:$0xff]
        %v2006 = vld [vmem:[%s6 + $0x2f8] sm:$0xff]
        %v2007 = vld [vmem:[%s6 + $0x300] sm:$0xff]
        %v2008 = vld [vmem:[%s6 + $0x308] sm:$0xff]
        %v2009 = vld [vmem:[%s6 + $0x310] sm:$0xff]
        %v2010 = vld [vmem:[%s6 + $0x318] sm:$0xff]
        %v2011 = vld [vmem:[%s6 + $0x320] sm:$0xff]
        %v2012 = vld [vmem:[%s6 + $0x328] sm:$0xff]
        %v2013 = vld [vmem:[%s6 + $0x330] sm:$0xff]
        %v2014 = vld [vmem:[%s6 + $0x338] sm:$0xff]
        %v2015 = vld [vmem:[%s6 + $0x340] sm:$0xff]
        %v2016 = vld [vmem:[%s6 + $0x348] sm:$0xff]
        %v2017 = vld [vmem:[%s6 + $0x350] sm:$0xff]
        %v2018 = vld [vmem:[%s6 + $0x358] sm:$0xff]
        %v2019 = vld [vmem:[%s6 + $0x360] sm:$0xff]
        %v2020 = vld [vmem:[%s6 + $0x368] sm:$0xff]
        %v2021 = vld [vmem:[%s6 + $0x370] sm:$0xff]
        %v2022 = vld [vmem:[%s6 + $0x378] sm:$0xff]
        %v2023 = vld [vmem:[%s6 + $0x380] sm:$0xff]
        %v2024 = vld [vmem:[%s6 + $0x388] sm:$0xff]
        %v2025 = vld [vmem:[%s6 + $0x390] sm:$0xff]
        %v2026 = vld [vmem:[%s6 + $0x398] sm:$0xff]
        %v2027 = vld [vmem:[%s6 + $0x3a0] sm:$0xff]
        %v2028 = vld [vmem:[%s6 + $0x3a8] sm:$0xff]
        %v2029 = vld [vmem:[%s6 + $0x3b0] sm:$0xff]
        %v2030 = vld [vmem:[%s6 + $0x3b8] sm:$0xff]
        %v2031 = vld [vmem:[%s6 + $0x3c0] sm:$0xff]
        %v2032 = vld [vmem:[%s6 + $0x3c8] sm:$0xff]
        %v2033 = vld [vmem:[%s6 + $0x3d0] sm:$0xff]
        %v2034 = vld [vmem:[%s6 + $0x3d8] sm:$0xff]
        %v2035 = vld [vmem:[%s6 + $0x3e0] sm:$0xff]
        %v2036 = vld [vmem:[%s6 + $0x3e8] sm:$0xff]
        %v2037 = vld [vmem:[%s6 + $0x3f0] sm:$0xff]
        %v2038 = vld [vmem:[%s6 + $0x3f8] sm:$0xff]
        %v2167 = vunpack.c.l.b16 %v1911
        %v2168 = vunpack.c.h.b16 %v1911
        %v2169 = vunpack.c.l.b16 %v1912
        %v2170 = vunpack.c.h.b16 %v1912
        %v2171 = vunpack.c.l.b16 %v1913
        %v2172 = vunpack.c.h.b16 %v1913
        %v2173 = vunpack.c.l.b16 %v1914
        %v2174 = vunpack.c.h.b16 %v1914
        %v2175 = vunpack.c.l.b16 %v1915
        %v2176 = vunpack.c.h.b16 %v1915
        %v2177 = vunpack.c.l.b16 %v1916
        %v2178 = vunpack.c.h.b16 %v1916
        %v2179 = vunpack.c.l.b16 %v1917
        %v2180 = vunpack.c.h.b16 %v1917
        %v2181 = vunpack.c.l.b16 %v1918
        %v2182 = vunpack.c.h.b16 %v1918
        %v2183 = vunpack.c.l.b16 %v1919
        %v2184 = vunpack.c.h.b16 %v1919
        %v2185 = vunpack.c.l.b16 %v1920
        %v2186 = vunpack.c.h.b16 %v1920
        %v2187 = vunpack.c.l.b16 %v1921
        %v2188 = vunpack.c.h.b16 %v1921
        %v2189 = vunpack.c.l.b16 %v1922
        %v2190 = vunpack.c.h.b16 %v1922
        %v2191 = vunpack.c.l.b16 %v1923
        %v2192 = vunpack.c.h.b16 %v1923
        %v2193 = vunpack.c.l.b16 %v1924
        %v2194 = vunpack.c.h.b16 %v1924
        %v2195 = vunpack.c.l.b16 %v1925
        %v2196 = vunpack.c.h.b16 %v1925
        %v2197 = vunpack.c.l.b16 %v1926
        %v2198 = vunpack.c.h.b16 %v1926
        %v2199 = vunpack.c.l.b16 %v1927
        %v2200 = vunpack.c.h.b16 %v1927
        %v2201 = vunpack.c.l.b16 %v1928
        %v2202 = vunpack.c.h.b16 %v1928
        %v2203 = vunpack.c.l.b16 %v1929
        %v2204 = vunpack.c.h.b16 %v1929
        %v2205 = vunpack.c.l.b16 %v1930
        %v2206 = vunpack.c.h.b16 %v1930
        %v2207 = vunpack.c.l.b16 %v1931
        %v2208 = vunpack.c.h.b16 %v1931
        %v2209 = vunpack.c.l.b16 %v1932
        %v2210 = vunpack.c.h.b16 %v1932
        %v2211 = vunpack.c.l.b16 %v1933
        %v2212 = vunpack.c.h.b16 %v1933
        %v2213 = vunpack.c.l.b16 %v1934
        %v2214 = vunpack.c.h.b16 %v1934
        %v2215 = vunpack.c.l.b16 %v1935
        %v2216 = vunpack.c.h.b16 %v1935
        %v2217 = vunpack.c.l.b16 %v1936
        %v2218 = vunpack.c.h.b16 %v1936
        %v2219 = vunpack.c.l.b16 %v1937
        %v2220 = vunpack.c.h.b16 %v1937
        %v2221 = vunpack.c.l.b16 %v1938
        %v2222 = vunpack.c.h.b16 %v1938
        %v2223 = vunpack.c.l.b16 %v1939
        %v2224 = vunpack.c.h.b16 %v1939
        %v2225 = vunpack.c.l.b16 %v1940
        %v2226 = vunpack.c.h.b16 %v1940
        %v2227 = vunpack.c.l.b16 %v1941
        %v2228 = vunpack.c.h.b16 %v1941
        %v2229 = vunpack.c.l.b16 %v1942
        %v2230 = vunpack.c.h.b16 %v1942
        %v2231 = vunpack.c.l.b16 %v1943
        %v2232 = vunpack.c.h.b16 %v1943
        %v2233 = vunpack.c.l.b16 %v1944
        %v2234 = vunpack.c.h.b16 %v1944
        %v2235 = vunpack.c.l.b16 %v1945
        %v2236 = vunpack.c.h.b16 %v1945
        %v2237 = vunpack.c.l.b16 %v1946
        %v2238 = vunpack.c.h.b16 %v1946
        %v2239 = vunpack.c.l.b16 %v1947
        %v2240 = vunpack.c.h.b16 %v1947
        %v2241 = vunpack.c.l.b16 %v1948
        %v2242 = vunpack.c.h.b16 %v1948
        %v2243 = vunpack.c.l.b16 %v1949
        %v2244 = vunpack.c.h.b16 %v1949
        %v2245 = vunpack.c.l.b16 %v1950
        %v2246 = vunpack.c.h.b16 %v1950
        %v2247 = vunpack.c.l.b16 %v1951
        %v2248 = vunpack.c.h.b16 %v1951
        %v2249 = vunpack.c.l.b16 %v1952
        %v2250 = vunpack.c.h.b16 %v1952
        %v2251 = vunpack.c.l.b16 %v1953
        %v2252 = vunpack.c.h.b16 %v1953
        %v2253 = vunpack.c.l.b16 %v1954
        %v2254 = vunpack.c.h.b16 %v1954
        %v2255 = vunpack.c.l.b16 %v1955
        %v2256 = vunpack.c.h.b16 %v1955
        %v2257 = vunpack.c.l.b16 %v1956
        %v2258 = vunpack.c.h.b16 %v1956
        %v2259 = vunpack.c.l.b16 %v1957
        %v2260 = vunpack.c.h.b16 %v1957
        %v2261 = vunpack.c.l.b16 %v1958
        %v2262 = vunpack.c.h.b16 %v1958
        %v2263 = vunpack.c.l.b16 %v1959
        %v2264 = vunpack.c.h.b16 %v1959
        %v2265 = vunpack.c.l.b16 %v1960
        %v2266 = vunpack.c.h.b16 %v1960
        %v2267 = vunpack.c.l.b16 %v1961
        %v2268 = vunpack.c.h.b16 %v1961
        %v2269 = vunpack.c.l.b16 %v1962
        %v2270 = vunpack.c.h.b16 %v1962
        %v2271 = vunpack.c.l.b16 %v1963
        %v2272 = vunpack.c.h.b16 %v1963
        %v2273 = vunpack.c.l.b16 %v1964
        %v2274 = vunpack.c.h.b16 %v1964
        %v2275 = vunpack.c.l.b16 %v1965
        %v2276 = vunpack.c.h.b16 %v1965
        %v2277 = vunpack.c.l.b16 %v1966
        %v2278 = vunpack.c.h.b16 %v1966
        %v2279 = vunpack.c.l.b16 %v1967
        %v2280 = vunpack.c.h.b16 %v1967
        %v2281 = vunpack.c.l.b16 %v1968
        %v2282 = vunpack.c.h.b16 %v1968
        %v2283 = vunpack.c.l.b16 %v1969
        %v2284 = vunpack.c.h.b16 %v1969
        %v2285 = vunpack.c.l.b16 %v1970
        %v2286 = vunpack.c.h.b16 %v1970
        %v2287 = vunpack.c.l.b16 %v1971
        %v2288 = vunpack.c.h.b16 %v1971
        %v2289 = vunpack.c.l.b16 %v1972
        %v2290 = vunpack.c.h.b16 %v1972
        %v2291 = vunpack.c.l.b16 %v1973
        %v2292 = vunpack.c.h.b16 %v1973
        %v2293 = vunpack.c.l.b16 %v1974
        %v2294 = vunpack.c.h.b16 %v1974
        %v2295 = vunpack.c.l.b16 %v1975
        %v2296 = vunpack.c.h.b16 %v1975
        %v2297 = vunpack.c.l.b16 %v1976
        %v2298 = vunpack.c.h.b16 %v1976
        %v2299 = vunpack.c.l.b16 %v1977
        %v2300 = vunpack.c.h.b16 %v1977
        %v2301 = vunpack.c.l.b16 %v1978
        %v2302 = vunpack.c.h.b16 %v1978
        %v2303 = vunpack.c.l.b16 %v1979
        %v2304 = vunpack.c.h.b16 %v1979
        %v2305 = vunpack.c.l.b16 %v1980
        %v2306 = vunpack.c.h.b16 %v1980
        %v2307 = vunpack.c.l.b16 %v1981
        %v2308 = vunpack.c.h.b16 %v1981
        %v2309 = vunpack.c.l.b16 %v1982
        %v2310 = vunpack.c.h.b16 %v1982
        %v2311 = vunpack.c.l.b16 %v1983
        %v2312 = vunpack.c.h.b16 %v1983
        %v2313 = vunpack.c.l.b16 %v1984
        %v2314 = vunpack.c.h.b16 %v1984
        %v2315 = vunpack.c.l.b16 %v1985
        %v2316 = vunpack.c.h.b16 %v1985
        %v2317 = vunpack.c.l.b16 %v1986
        %v2318 = vunpack.c.h.b16 %v1986
        %v2319 = vunpack.c.l.b16 %v1987
        %v2320 = vunpack.c.h.b16 %v1987
        %v2321 = vunpack.c.l.b16 %v1988
        %v2322 = vunpack.c.h.b16 %v1988
        %v2323 = vunpack.c.l.b16 %v1989
        %v2324 = vunpack.c.h.b16 %v1989
        %v2325 = vunpack.c.l.b16 %v1990
        %v2326 = vunpack.c.h.b16 %v1990
        %v2327 = vunpack.c.l.b16 %v1991
        %v2328 = vunpack.c.h.b16 %v1991
        %v2329 = vunpack.c.l.b16 %v1992
        %v2330 = vunpack.c.h.b16 %v1992
        %v2331 = vunpack.c.l.b16 %v1993
        %v2332 = vunpack.c.h.b16 %v1993
        %v2333 = vunpack.c.l.b16 %v1994
        %v2334 = vunpack.c.h.b16 %v1994
        %v2335 = vunpack.c.l.b16 %v1995
        %v2336 = vunpack.c.h.b16 %v1995
        %v2337 = vunpack.c.l.b16 %v1996
        %v2338 = vunpack.c.h.b16 %v1996
        %v2339 = vunpack.c.l.b16 %v1997
        %v2340 = vunpack.c.h.b16 %v1997
        %v2341 = vunpack.c.l.b16 %v1998
        %v2342 = vunpack.c.h.b16 %v1998
        %v2343 = vunpack.c.l.b16 %v1999
        %v2344 = vunpack.c.h.b16 %v1999
        %v2345 = vunpack.c.l.b16 %v2000
        %v2346 = vunpack.c.h.b16 %v2000
        %v2347 = vunpack.c.l.b16 %v2001
        %v2348 = vunpack.c.h.b16 %v2001
        %v2349 = vunpack.c.l.b16 %v2002
        %v2350 = vunpack.c.h.b16 %v2002
        %v2351 = vunpack.c.l.b16 %v2003
        %v2352 = vunpack.c.h.b16 %v2003
        %v2353 = vunpack.c.l.b16 %v2004
        %v2354 = vunpack.c.h.b16 %v2004
        %v2355 = vunpack.c.l.b16 %v2005
        %v2356 = vunpack.c.h.b16 %v2005
        %v2357 = vunpack.c.l.b16 %v2006
        %v2358 = vunpack.c.h.b16 %v2006
        %v2359 = vunpack.c.l.b16 %v2007
        %v2360 = vunpack.c.h.b16 %v2007
        %v2361 = vunpack.c.l.b16 %v2008
        %v2362 = vunpack.c.h.b16 %v2008
        %v2363 = vunpack.c.l.b16 %v2009
        %v2364 = vunpack.c.h.b16 %v2009
        %v2365 = vunpack.c.l.b16 %v2010
        %v2366 = vunpack.c.h.b16 %v2010
        %v2367 = vunpack.c.l.b16 %v2011
        %v2368 = vunpack.c.h.b16 %v2011
        %v2369 = vunpack.c.l.b16 %v2012
        %v2370 = vunpack.c.h.b16 %v2012
        %v2371 = vunpack.c.l.b16 %v2013
        %v2372 = vunpack.c.h.b16 %v2013
        %v2373 = vunpack.c.l.b16 %v2014
        %v2374 = vunpack.c.h.b16 %v2014
        %v2375 = vunpack.c.l.b16 %v2015
        %v2376 = vunpack.c.h.b16 %v2015
        %v2377 = vunpack.c.l.b16 %v2016
        %v2378 = vunpack.c.h.b16 %v2016
        %v2379 = vunpack.c.l.b16 %v2017
        %v2380 = vunpack.c.h.b16 %v2017
        %v2381 = vunpack.c.l.b16 %v2018
        %v2382 = vunpack.c.h.b16 %v2018
        %v2383 = vunpack.c.l.b16 %v2019
        %v2384 = vunpack.c.h.b16 %v2019
        %v2385 = vunpack.c.l.b16 %v2020
        %v2386 = vunpack.c.h.b16 %v2020
        %v2387 = vunpack.c.l.b16 %v2021
        %v2388 = vunpack.c.h.b16 %v2021
        %v2389 = vunpack.c.l.b16 %v2022
        %v2390 = vunpack.c.h.b16 %v2022
        %v2391 = vunpack.c.l.b16 %v2023
        %v2392 = vunpack.c.h.b16 %v2023
        %v2393 = vunpack.c.l.b16 %v2024
        %v2394 = vunpack.c.h.b16 %v2024
        %v2395 = vunpack.c.l.b16 %v2025
        %v2396 = vunpack.c.h.b16 %v2025
        %v2397 = vunpack.c.l.b16 %v2026
        %v2398 = vunpack.c.h.b16 %v2026
        %v2399 = vunpack.c.l.b16 %v2027
        %v2400 = vunpack.c.h.b16 %v2027
        %v2401 = vunpack.c.l.b16 %v2028
        %v2402 = vunpack.c.h.b16 %v2028
        %v2403 = vunpack.c.l.b16 %v2029
        %v2404 = vunpack.c.h.b16 %v2029
        %v2405 = vunpack.c.l.b16 %v2030
        %v2406 = vunpack.c.h.b16 %v2030
        %v2407 = vunpack.c.l.b16 %v2031
        %v2408 = vunpack.c.h.b16 %v2031
        %v2409 = vunpack.c.l.b16 %v2032
        %v2410 = vunpack.c.h.b16 %v2032
        %v2411 = vunpack.c.l.b16 %v2033
        %v2412 = vunpack.c.h.b16 %v2033
        %v2413 = vunpack.c.l.b16 %v2034
        %v2414 = vunpack.c.h.b16 %v2034
        %v2415 = vunpack.c.l.b16 %v2035
        %v2416 = vunpack.c.h.b16 %v2035
        %v2417 = vunpack.c.l.b16 %v2036
        %v2418 = vunpack.c.h.b16 %v2036
        %v2419 = vunpack.c.l.b16 %v2037
        %v2420 = vunpack.c.h.b16 %v2037
        %v2421 = vunpack.c.l.b16 %v2038
        %v2422 = vunpack.c.h.b16 %v2038
        %v2423 = vpack.c.b16 %v2171, %v2167
        %v2424 = vpack.c.b16 %v2172, %v2168
        %v2425 = vpack.c.b16 %v2173, %v2169
        %v2426 = vpack.c.b16 %v2174, %v2170
        %v2427 = vpack.c.b16 %v2179, %v2175
        %v2428 = vpack.c.b16 %v2180, %v2176
        %v2429 = vpack.c.b16 %v2181, %v2177
        %v2430 = vpack.c.b16 %v2182, %v2178
        %v2431 = vpack.c.b16 %v2187, %v2183
        %v2432 = vpack.c.b16 %v2188, %v2184
        %v2433 = vpack.c.b16 %v2189, %v2185
        %v2434 = vpack.c.b16 %v2190, %v2186
        %v2435 = vpack.c.b16 %v2195, %v2191
        %v2436 = vpack.c.b16 %v2196, %v2192
        %v2437 = vpack.c.b16 %v2197, %v2193
        %v2438 = vpack.c.b16 %v2198, %v2194
        %v2439 = vpack.c.b16 %v2203, %v2199
        %v2440 = vpack.c.b16 %v2204, %v2200
        %v2441 = vpack.c.b16 %v2205, %v2201
        %v2442 = vpack.c.b16 %v2206, %v2202
        %v2443 = vpack.c.b16 %v2211, %v2207
        %v2444 = vpack.c.b16 %v2212, %v2208
        %v2445 = vpack.c.b16 %v2213, %v2209
        %v2446 = vpack.c.b16 %v2214, %v2210
        %v2447 = vpack.c.b16 %v2219, %v2215
        %v2448 = vpack.c.b16 %v2220, %v2216
        %v2449 = vpack.c.b16 %v2221, %v2217
        %v2450 = vpack.c.b16 %v2222, %v2218
        %v2451 = vpack.c.b16 %v2227, %v2223
        %v2452 = vpack.c.b16 %v2228, %v2224
        %v2453 = vpack.c.b16 %v2229, %v2225
        %v2454 = vpack.c.b16 %v2230, %v2226
        %v2455 = vpack.c.b16 %v2235, %v2231
        %v2456 = vpack.c.b16 %v2236, %v2232
        %v2457 = vpack.c.b16 %v2237, %v2233
        %v2458 = vpack.c.b16 %v2238, %v2234
        %v2459 = vpack.c.b16 %v2243, %v2239
        %v2460 = vpack.c.b16 %v2244, %v2240
        %v2461 = vpack.c.b16 %v2245, %v2241
        %v2462 = vpack.c.b16 %v2246, %v2242
        %v2463 = vpack.c.b16 %v2251, %v2247
        %v2464 = vpack.c.b16 %v2252, %v2248
        %v2465 = vpack.c.b16 %v2253, %v2249
        %v2466 = vpack.c.b16 %v2254, %v2250
        %v2467 = vpack.c.b16 %v2259, %v2255
        %v2468 = vpack.c.b16 %v2260, %v2256
        %v2469 = vpack.c.b16 %v2261, %v2257
        %v2470 = vpack.c.b16 %v2262, %v2258
        %v2471 = vpack.c.b16 %v2267, %v2263
        %v2472 = vpack.c.b16 %v2268, %v2264
        %v2473 = vpack.c.b16 %v2269, %v2265
        %v2474 = vpack.c.b16 %v2270, %v2266
        %v2475 = vpack.c.b16 %v2275, %v2271
        %v2476 = vpack.c.b16 %v2276, %v2272
        %v2477 = vpack.c.b16 %v2277, %v2273
        %v2478 = vpack.c.b16 %v2278, %v2274
        %v2479 = vpack.c.b16 %v2283, %v2279
        %v2480 = vpack.c.b16 %v2284, %v2280
        %v2481 = vpack.c.b16 %v2285, %v2281
        %v2482 = vpack.c.b16 %v2286, %v2282
        %v2483 = vpack.c.b16 %v2291, %v2287
        %v2484 = vpack.c.b16 %v2292, %v2288
        %v2485 = vpack.c.b16 %v2293, %v2289
        %v2486 = vpack.c.b16 %v2294, %v2290
        %v2487 = vpack.c.b16 %v2299, %v2295
        %v2488 = vpack.c.b16 %v2300, %v2296
        %v2489 = vpack.c.b16 %v2301, %v2297
        %v2490 = vpack.c.b16 %v2302, %v2298
        %v2491 = vpack.c.b16 %v2307, %v2303
        %v2492 = vpack.c.b16 %v2308, %v2304
        %v2493 = vpack.c.b16 %v2309, %v2305
        %v2494 = vpack.c.b16 %v2310, %v2306
        %v2495 = vpack.c.b16 %v2315, %v2311
        %v2496 = vpack.c.b16 %v2316, %v2312
        %v2497 = vpack.c.b16 %v2317, %v2313
        %v2498 = vpack.c.b16 %v2318, %v2314
        %v2499 = vpack.c.b16 %v2323, %v2319
        %v2500 = vpack.c.b16 %v2324, %v2320
        %v2501 = vpack.c.b16 %v2325, %v2321
        %v2502 = vpack.c.b16 %v2326, %v2322
        %v2503 = vpack.c.b16 %v2331, %v2327
        %v2504 = vpack.c.b16 %v2332, %v2328
        %v2505 = vpack.c.b16 %v2333, %v2329
        %v2506 = vpack.c.b16 %v2334, %v2330
        %v2507 = vpack.c.b16 %v2339, %v2335
        %v2508 = vpack.c.b16 %v2340, %v2336
        %v2509 = vpack.c.b16 %v2341, %v2337
        %v2510 = vpack.c.b16 %v2342, %v2338
        %v2511 = vpack.c.b16 %v2347, %v2343
        %v2512 = vpack.c.b16 %v2348, %v2344
        %v2513 = vpack.c.b16 %v2349, %v2345
        %v2514 = vpack.c.b16 %v2350, %v2346
        %v2515 = vpack.c.b16 %v2355, %v2351
        %v2516 = vpack.c.b16 %v2356, %v2352
        %v2517 = vpack.c.b16 %v2357, %v2353
        %v2518 = vpack.c.b16 %v2358, %v2354
        %v2519 = vpack.c.b16 %v2363, %v2359
        %v2520 = vpack.c.b16 %v2364, %v2360
        %v2521 = vpack.c.b16 %v2365, %v2361
        %v2522 = vpack.c.b16 %v2366, %v2362
        %v2523 = vpack.c.b16 %v2371, %v2367
        %v2524 = vpack.c.b16 %v2372, %v2368
        %v2525 = vpack.c.b16 %v2373, %v2369
        %v2526 = vpack.c.b16 %v2374, %v2370
        %v2527 = vpack.c.b16 %v2379, %v2375
        %v2528 = vpack.c.b16 %v2380, %v2376
        %v2529 = vpack.c.b16 %v2381, %v2377
        %v2530 = vpack.c.b16 %v2382, %v2378
        %v2531 = vpack.c.b16 %v2387, %v2383
        %v2532 = vpack.c.b16 %v2388, %v2384
        %v2533 = vpack.c.b16 %v2389, %v2385
        %v2534 = vpack.c.b16 %v2390, %v2386
        %v2535 = vpack.c.b16 %v2395, %v2391
        %v2536 = vpack.c.b16 %v2396, %v2392
        %v2537 = vpack.c.b16 %v2397, %v2393
        %v2538 = vpack.c.b16 %v2398, %v2394
        %v2539 = vpack.c.b16 %v2403, %v2399
        %v2540 = vpack.c.b16 %v2404, %v2400
        %v2541 = vpack.c.b16 %v2405, %v2401
        %v2542 = vpack.c.b16 %v2406, %v2402
        %v2543 = vpack.c.b16 %v2411, %v2407
        %v2544 = vpack.c.b16 %v2412, %v2408
        %v2545 = vpack.c.b16 %v2413, %v2409
        %v2546 = vpack.c.b16 %v2414, %v2410
        %v2547 = vpack.c.b16 %v2419, %v2415
        %v2548 = vpack.c.b16 %v2420, %v2416
        %v2549 = vpack.c.b16 %v2421, %v2417
        %v2550 = vpack.c.b16 %v2422, %v2418
        %2679 = vmatprep.subr.bf16.mxu0 %v2452
        %2680 = vmatpush1.bf16.msra.mxu0 %v2451
        %2681 = vmatprep.subr.bf16.mxu0 %v2448
        %2682 = vmatpush1.bf16.msra.mxu0 %v2447
        %2683 = vmatprep.subr.bf16.mxu0 %v2444
        %2684 = vmatpush1.bf16.msra.mxu0 %v2443
        %2685 = vmatprep.subr.bf16.mxu0 %v2440
        %2686 = vmatpush1.bf16.msra.mxu0 %v2439
        %2687 = vmatprep.subr.bf16.mxu0 %v2436
        %2688 = vmatpush1.bf16.msra.mxu0 %v2435
        %2689 = vmatprep.subr.bf16.mxu0 %v2432
        %2690 = vmatpush1.bf16.msra.mxu0 %v2431
        %2691 = vmatprep.subr.bf16.mxu0 %v2428
        %2692 = vmatpush1.bf16.msra.mxu0 %v2427
        %2693 = vmatprep.subr.bf16.mxu0 %v2424
        %2694 = vmatpush1.bf16.msra.mxu0 %v2423
        %2695 = vmatprep.subr.bf16.mxu0 %v2484
        %2696 = vmatpush2.bf16.msra.mxu0 %v2483
        %2697 = vmatprep.subr.bf16.mxu0 %v2480
        %2698 = vmatpush2.bf16.msra.mxu0 %v2479
        %2699 = vmatprep.subr.bf16.mxu0 %v2476
        %2700 = vmatpush2.bf16.msra.mxu0 %v2475
        %2701 = vmatprep.subr.bf16.mxu0 %v2472
        %2702 = vmatpush2.bf16.msra.mxu0 %v2471
        %2703 = vmatprep.subr.bf16.mxu0 %v2468
        %2704 = vmatpush2.bf16.msra.mxu0 %v2467
        %2705 = vmatprep.subr.bf16.mxu0 %v2464
        %2706 = vmatpush2.bf16.msra.mxu0 %v2463
        %2707 = vmatprep.subr.bf16.mxu0 %v2460
        %2708 = vmatpush2.bf16.msra.mxu0 %v2459
        %2709 = vmatprep.subr.bf16.mxu0 %v2456
        %2710 = vmatpush2.bf16.msra.mxu0 %v2455
        %2711 = vmatprep.mubr.bf16.mxu0 %v1908
        %2712 = vmatmul.mubr.bf16.gmra.mxu0 %v1907
        %v2713 = vpop.f32.mrf.mxu0
        %v2714 = vadd.f32 0.0, %v2713
        %v2715 = vpop.f32.mrf.mxu0
        %v2716 = vadd.f32 0.0, %v2715
        %v2717 = vpop.f32.mrf.mxu0
        %v2718 = vpop.f32.mrf.mxu0
        %2719 = vdwg.mxu0
        %2720 = vmatprep.subr.bf16.mxu0 %v2516
        %2721 = vmatpush1.bf16.msra.mxu0 %v2515
        %2722 = vmatprep.subr.bf16.mxu0 %v2512
        %2723 = vmatpush1.bf16.msra.mxu0 %v2511
        %2724 = vmatprep.subr.bf16.mxu0 %v2508
        %2725 = vmatpush1.bf16.msra.mxu0 %v2507
        %2726 = vmatprep.subr.bf16.mxu0 %v2504
        %2727 = vmatpush1.bf16.msra.mxu0 %v2503
        %2728 = vmatprep.subr.bf16.mxu0 %v2500
        %2729 = vmatpush1.bf16.msra.mxu0 %v2499
        %2730 = vmatprep.subr.bf16.mxu0 %v2496
        %2731 = vmatpush1.bf16.msra.mxu0 %v2495
        %2732 = vmatprep.subr.bf16.mxu0 %v2492
        %2733 = vmatpush1.bf16.msra.mxu0 %v2491
        %2734 = vmatprep.subr.bf16.mxu0 %v2488
        %2735 = vmatpush1.bf16.msra.mxu0 %v2487
        %2736 = vmatprep.subr.bf16.mxu0 %v2548
        %2737 = vmatpush2.bf16.msra.mxu0 %v2547
        %2738 = vmatprep.subr.bf16.mxu0 %v2544
        %2739 = vmatpush2.bf16.msra.mxu0 %v2543
        %2740 = vmatprep.subr.bf16.mxu0 %v2540
        %2741 = vmatpush2.bf16.msra.mxu0 %v2539
        %2742 = vmatprep.subr.bf16.mxu0 %v2536
        %2743 = vmatpush2.bf16.msra.mxu0 %v2535
        %2744 = vmatprep.subr.bf16.mxu0 %v2532
        %2745 = vmatpush2.bf16.msra.mxu0 %v2531
        %2746 = vmatprep.subr.bf16.mxu0 %v2528
        %2747 = vmatpush2.bf16.msra.mxu0 %v2527
        %2748 = vmatprep.subr.bf16.mxu0 %v2524
        %2749 = vmatpush2.bf16.msra.mxu0 %v2523
        %2750 = vmatprep.subr.bf16.mxu0 %v2520
        %2751 = vmatpush2.bf16.msra.mxu0 %v2519
        %2752 = vmatprep.mubr.bf16.mxu0 %v1910
        %2753 = vmatmul.mubr.bf16.gmra.mxu0 %v1909
        %v2754 = vpop.f32.mrf.mxu0
        %v2755 = vadd.f32 %v2714, %v2754
        %v2756 = vpop.f32.mrf.mxu0
        %v2757 = vadd.f32 %v2716, %v2756
        %v2758 = vpop.f32.mrf.mxu0
        %v2759 = vpop.f32.mrf.mxu0
        %2760 = vdwg.mxu0
        %2761 = vmatprep.subr.bf16.mxu0 %v2454
        %2762 = vmatpush1.bf16.msra.mxu0 %v2453
        %2763 = vmatprep.subr.bf16.mxu0 %v2450
        %2764 = vmatpush1.bf16.msra.mxu0 %v2449
        %2765 = vmatprep.subr.bf16.mxu0 %v2446
        %2766 = vmatpush1.bf16.msra.mxu0 %v2445
        %2767 = vmatprep.subr.bf16.mxu0 %v2442
        %2768 = vmatpush1.bf16.msra.mxu0 %v2441
        %2769 = vmatprep.subr.bf16.mxu0 %v2438
        %2770 = vmatpush1.bf16.msra.mxu0 %v2437
        %2771 = vmatprep.subr.bf16.mxu0 %v2434
        %2772 = vmatpush1.bf16.msra.mxu0 %v2433
        %2773 = vmatprep.subr.bf16.mxu0 %v2430
        %2774 = vmatpush1.bf16.msra.mxu0 %v2429
        %2775 = vmatprep.subr.bf16.mxu0 %v2426
        %2776 = vmatpush1.bf16.msra.mxu0 %v2425
        %2777 = vmatprep.subr.bf16.mxu0 %v2486
        %2778 = vmatpush2.bf16.msra.mxu0 %v2485
        %2779 = vmatprep.subr.bf16.mxu0 %v2482
        %2780 = vmatpush2.bf16.msra.mxu0 %v2481
        %2781 = vmatprep.subr.bf16.mxu0 %v2478
        %2782 = vmatpush2.bf16.msra.mxu0 %v2477
        %2783 = vmatprep.subr.bf16.mxu0 %v2474
        %2784 = vmatpush2.bf16.msra.mxu0 %v2473
        %2785 = vmatprep.subr.bf16.mxu0 %v2470
        %2786 = vmatpush2.bf16.msra.mxu0 %v2469
        %2787 = vmatprep.subr.bf16.mxu0 %v2466
        %2788 = vmatpush2.bf16.msra.mxu0 %v2465
        %2789 = vmatprep.subr.bf16.mxu0 %v2462
        %2790 = vmatpush2.bf16.msra.mxu0 %v2461
        %2791 = vmatprep.subr.bf16.mxu0 %v2458
        %2792 = vmatpush2.bf16.msra.mxu0 %v2457
        %2793 = vmatprep.mubr.bf16.mxu0 %v1908
        %2794 = vmatmul.mubr.bf16.gmra.mxu0 %v1907
        %v2795 = vpop.f32.mrf.mxu0
        %v2796 = vadd.f32 0.0, %v2795
        %v2797 = vpop.f32.mrf.mxu0
        %v2798 = vadd.f32 0.0, %v2797
        %v2799 = vpop.f32.mrf.mxu0
        %v2800 = vpop.f32.mrf.mxu0
        %2801 = vdwg.mxu0
        %2802 = vmatprep.subr.bf16.mxu0 %v2518
        %2803 = vmatpush1.bf16.msra.mxu0 %v2517
        %2804 = vmatprep.subr.bf16.mxu0 %v2514
        %2805 = vmatpush1.bf16.msra.mxu0 %v2513
        %2806 = vmatprep.subr.bf16.mxu0 %v2510
        %2807 = vmatpush1.bf16.msra.mxu0 %v2509
        %2808 = vmatprep.subr.bf16.mxu0 %v2506
        %2809 = vmatpush1.bf16.msra.mxu0 %v2505
        %2810 = vmatprep.subr.bf16.mxu0 %v2502
        %2811 = vmatpush1.bf16.msra.mxu0 %v2501
        %2812 = vmatprep.subr.bf16.mxu0 %v2498
        %2813 = vmatpush1.bf16.msra.mxu0 %v2497
        %2814 = vmatprep.subr.bf16.mxu0 %v2494
        %2815 = vmatpush1.bf16.msra.mxu0 %v2493
        %2816 = vmatprep.subr.bf16.mxu0 %v2490
        %2817 = vmatpush1.bf16.msra.mxu0 %v2489
        %2818 = vmatprep.subr.bf16.mxu0 %v2550
        %2819 = vmatpush2.bf16.msra.mxu0 %v2549
        %2820 = vmatprep.subr.bf16.mxu0 %v2546
        %2821 = vmatpush2.bf16.msra.mxu0 %v2545
        %2822 = vmatprep.subr.bf16.mxu0 %v2542
        %2823 = vmatpush2.bf16.msra.mxu0 %v2541
        %2824 = vmatprep.subr.bf16.mxu0 %v2538
        %2825 = vmatpush2.bf16.msra.mxu0 %v2537
        %2826 = vmatprep.subr.bf16.mxu0 %v2534
        %2827 = vmatpush2.bf16.msra.mxu0 %v2533
        %2828 = vmatprep.subr.bf16.mxu0 %v2530
        %2829 = vmatpush2.bf16.msra.mxu0 %v2529
        %2830 = vmatprep.subr.bf16.mxu0 %v2526
        %2831 = vmatpush2.bf16.msra.mxu0 %v2525
        %2832 = vmatprep.subr.bf16.mxu0 %v2522
        %2833 = vmatpush2.bf16.msra.mxu0 %v2521
        %2834 = vmatprep.mubr.bf16.mxu0 %v1910
        %2835 = vmatmul.mubr.bf16.gmra.mxu0 %v1909
        %v2836 = vpop.f32.mrf.mxu0
        %v2837 = vadd.f32 %v2796, %v2836
        %v2838 = vpop.f32.mrf.mxu0
        %v2839 = vadd.f32 %v2798, %v2838
        %v2840 = vpop.f32.mrf.mxu0
        %v2841 = vpop.f32.mrf.mxu0
        %2842 = vdwg.mxu0
        %v2843 = vld [vmem:[%s7] sm:$0xf]
        %v2845 = vlaneseq
        %v2846 = vshrl.u32 %v2845, 7
        %v2847 = vsub.s32 0, %v2846
        %v2848 = vrot.slane %v2843, %v2847
        %v2849 = vlaneseq
        %v2850 = vshrl.u32 %v2849, 7
        %v2851 = vsub.s32 1, %v2850
        %v2852 = vrot.slane %v2843, %v2851
        %v2853 = vlaneseq
        %v2854 = vshrl.u32 %v2853, 7
        %v2855 = vsub.s32 2, %v2854
        %v2856 = vrot.slane %v2843, %v2855
        %v2857 = vlaneseq
        %v2858 = vshrl.u32 %v2857, 7
        %v2859 = vsub.s32 3, %v2858
        %v2860 = vrot.slane %v2843, %v2859
        %2865 = vmatprep.subr.mxu0 0.0
        %2866 = vmatpush1.msra.mxu0 0.0
        %2867 = vmatprep.subr.mxu0 0.0
        %2868 = vmatpush1.msra.mxu0 0.0
        %2869 = vmatprep.subr.mxu0 0.0
        %2870 = vmatpush1.msra.mxu0 0.0
        %2871 = vmatprep.subr.mxu0 0.0
        %2872 = vmatpush1.msra.mxu0 0.0
        %2873 = vmatprep.subr.mxu0 0.0
        %2874 = vmatpush1.msra.mxu0 0.0
        %2875 = vmatprep.subr.mxu0 0.0
        %2876 = vmatpush1.msra.mxu0 0.0
        %2877 = vmatprep.subr.mxu0 0.0
        %2878 = vmatpush1.msra.mxu0 0.0
        %2879 = vmatprep.subr.mxu0 0.0
        %2880 = vmatpush1.msra.mxu0 0.0
        %2881 = vmatprep.subr.mxu0 0.0
        %2882 = vmatpush1.msra.mxu0 0.0
        %2883 = vmatprep.subr.mxu0 0.0
        %2884 = vmatpush1.msra.mxu0 0.0
        %2885 = vmatprep.subr.mxu0 0.0
        %2886 = vmatpush1.msra.mxu0 0.0
        %2887 = vmatprep.subr.mxu0 0.0
        %2888 = vmatpush1.msra.mxu0 0.0
        %2889 = vmatprep.subr.mxu0 0.0
        %2890 = vmatpush1.msra.mxu0 0.0
        %2891 = vmatprep.subr.mxu0 0.0
        %2892 = vmatpush1.msra.mxu0 0.0
        %2893 = vmatprep.subr.mxu0 0.0
        %2894 = vmatpush1.msra.mxu0 0.0
        %2895 = vmatprep.subr.mxu0 %v2757
        %2896 = vmatpush1.msra.mxu0 %v2755
        %2897 = vmatprep.subr.mxu0 0.0
        %2898 = vmatpush2.msra.mxu0 0.0
        %2899 = vmatprep.subr.mxu0 0.0
        %2900 = vmatpush2.msra.mxu0 0.0
        %2901 = vmatprep.subr.mxu0 0.0
        %2902 = vmatpush2.msra.mxu0 0.0
        %2903 = vmatprep.subr.mxu0 0.0
        %2904 = vmatpush2.msra.mxu0 0.0
        %2905 = vmatprep.subr.mxu0 0.0
        %2906 = vmatpush2.msra.mxu0 0.0
        %2907 = vmatprep.subr.mxu0 0.0
        %2908 = vmatpush2.msra.mxu0 0.0
        %2909 = vmatprep.subr.mxu0 0.0
        %2910 = vmatpush2.msra.mxu0 0.0
        %2911 = vmatprep.subr.mxu0 0.0
        %2912 = vmatpush2.msra.mxu0 0.0
        %2913 = vmatprep.subr.mxu0 0.0
        %2914 = vmatpush2.msra.mxu0 0.0
        %2915 = vmatprep.subr.mxu0 0.0
        %2916 = vmatpush2.msra.mxu0 0.0
        %2917 = vmatprep.subr.mxu0 0.0
        %2918 = vmatpush2.msra.mxu0 0.0
        %2919 = vmatprep.subr.mxu0 0.0
        %2920 = vmatpush2.msra.mxu0 0.0
        %2921 = vmatprep.subr.mxu0 0.0
        %2922 = vmatpush2.msra.mxu0 0.0
        %2923 = vmatprep.subr.mxu0 0.0
        %2924 = vmatpush2.msra.mxu0 0.0
        %2925 = vmatprep.subr.mxu0 0.0
        %2926 = vmatpush2.msra.mxu0 0.0
        %2927 = vmatprep.subr.mxu0 0.0
        %2928 = vmatpush2.msra.mxu0 0.0
        %2929 = vmatprep.mubr.f32.mxu0 0.0
        %2930 = vmatmul.mubr.f32.gmra.mxu0 %v655
        %v2931 = vpop.f32.mrf.mxu0
        %v2932 = vadd.f32 %v2848, %v2931
        %v2933 = vpop.f32.mrf.mxu0
        %v2934 = vadd.f32 %v2852, %v2933
        %2935 = vdwg.mxu0
        %2936 = vmatprep.subr.mxu0 0.0
        %2937 = vmatpush1.msra.mxu0 0.0
        %2938 = vmatprep.subr.mxu0 0.0
        %2939 = vmatpush1.msra.mxu0 0.0
        %2940 = vmatprep.subr.mxu0 0.0
        %2941 = vmatpush1.msra.mxu0 0.0
        %2942 = vmatprep.subr.mxu0 0.0
        %2943 = vmatpush1.msra.mxu0 0.0
        %2944 = vmatprep.subr.mxu0 0.0
        %2945 = vmatpush1.msra.mxu0 0.0
        %2946 = vmatprep.subr.mxu0 0.0
        %2947 = vmatpush1.msra.mxu0 0.0
        %2948 = vmatprep.subr.mxu0 0.0
        %2949 = vmatpush1.msra.mxu0 0.0
        %2950 = vmatprep.subr.mxu0 0.0
        %2951 = vmatpush1.msra.mxu0 0.0
        %2952 = vmatprep.subr.mxu0 0.0
        %2953 = vmatpush1.msra.mxu0 0.0
        %2954 = vmatprep.subr.mxu0 0.0
        %2955 = vmatpush1.msra.mxu0 0.0
        %2956 = vmatprep.subr.mxu0 0.0
        %2957 = vmatpush1.msra.mxu0 0.0
        %2958 = vmatprep.subr.mxu0 0.0
        %2959 = vmatpush1.msra.mxu0 0.0
        %2960 = vmatprep.subr.mxu0 0.0
        %2961 = vmatpush1.msra.mxu0 0.0
        %2962 = vmatprep.subr.mxu0 0.0
        %2963 = vmatpush1.msra.mxu0 0.0
        %2964 = vmatprep.subr.mxu0 0.0
        %2965 = vmatpush1.msra.mxu0 0.0
        %2966 = vmatprep.subr.mxu0 %v2839
        %2967 = vmatpush1.msra.mxu0 %v2837
        %2968 = vmatprep.subr.mxu0 0.0
        %2969 = vmatpush2.msra.mxu0 0.0
        %2970 = vmatprep.subr.mxu0 0.0
        %2971 = vmatpush2.msra.mxu0 0.0
        %2972 = vmatprep.subr.mxu0 0.0
        %2973 = vmatpush2.msra.mxu0 0.0
        %2974 = vmatprep.subr.mxu0 0.0
        %2975 = vmatpush2.msra.mxu0 0.0
        %2976 = vmatprep.subr.mxu0 0.0
        %2977 = vmatpush2.msra.mxu0 0.0
        %2978 = vmatprep.subr.mxu0 0.0
        %2979 = vmatpush2.msra.mxu0 0.0
        %2980 = vmatprep.subr.mxu0 0.0
        %2981 = vmatpush2.msra.mxu0 0.0
        %2982 = vmatprep.subr.mxu0 0.0
        %2983 = vmatpush2.msra.mxu0 0.0
        %2984 = vmatprep.subr.mxu0 0.0
        %2985 = vmatpush2.msra.mxu0 0.0
        %2986 = vmatprep.subr.mxu0 0.0
        %2987 = vmatpush2.msra.mxu0 0.0
        %2988 = vmatprep.subr.mxu0 0.0
        %2989 = vmatpush2.msra.mxu0 0.0
        %2990 = vmatprep.subr.mxu0 0.0
        %2991 = vmatpush2.msra.mxu0 0.0
        %2992 = vmatprep.subr.mxu0 0.0
        %2993 = vmatpush2.msra.mxu0 0.0
        %2994 = vmatprep.subr.mxu0 0.0
        %2995 = vmatpush2.msra.mxu0 0.0
        %2996 = vmatprep.subr.mxu0 0.0
        %2997 = vmatpush2.msra.mxu0 0.0
        %2998 = vmatprep.subr.mxu0 0.0
        %2999 = vmatpush2.msra.mxu0 0.0
        %3000 = vmatprep.mubr.f32.mxu0 0.0
        %3001 = vmatmul.mubr.f32.gmra.mxu0 %v655
        %v3002 = vpop.f32.mrf.mxu0
        %v3003 = vadd.f32 %v2856, %v3002
        %v3004 = vpop.f32.mrf.mxu0
        %v3005 = vadd.f32 %v2860, %v3004
        %3006 = vdwg.mxu0
        %v3007 = vmax.f32 %v2932, 0.0
        %v3008 = vmax.f32 %v2934, 0.0
        %v3009 = vmax.f32 %v3003, 0.0
        %v3010 = vmax.f32 %v3005, 0.0
        %v3011 = vpack.c.bf16 %v3007, %v3007
        %v3012 = vpack.c.bf16 %v3008, %v3008
        %v3013 = vpack.c.bf16 %v3009, %v3009
        %v3014 = vpack.c.bf16 %v3010, %v3010
        %v3015 = vld [vmem:[%s9] sm:$0x1]
        %v3016 = vld [vmem:[%s8] sm:$0xf]
        %v3017 = vld [vmem:[%s8 + $0x4] sm:$0xf]
        %v3018 = vld [vmem:[%s8 + $0x8] sm:$0xf]
        %v3019 = vld [vmem:[%s8 + $0xc] sm:$0xf]
        %v3020 = vld [vmem:[%s8 + $0x10] sm:$0xf]
        %v3021 = vld [vmem:[%s8 + $0x14] sm:$0xf]
        %v3022 = vld [vmem:[%s8 + $0x18] sm:$0xf]
        %v3023 = vld [vmem:[%s8 + $0x1c] sm:$0xf]
        %v3024 = vld [vmem:[%s8 + $0x20] sm:$0xf]
        %v3025 = vld [vmem:[%s8 + $0x24] sm:$0xf]
        %v3026 = vld [vmem:[%s8 + $0x28] sm:$0xf]
        %v3027 = vld [vmem:[%s8 + $0x2c] sm:$0xf]
        %v3028 = vld [vmem:[%s8 + $0x30] sm:$0xf]
        %v3029 = vld [vmem:[%s8 + $0x34] sm:$0xf]
        %v3030 = vld [vmem:[%s8 + $0x38] sm:$0xf]
        %v3031 = vld [vmem:[%s8 + $0x3c] sm:$0xf]
        %v3032 = vld [vmem:[%s8 + $0x40] sm:$0xf]
        %v3033 = vld [vmem:[%s8 + $0x44] sm:$0xf]
        %v3034 = vld [vmem:[%s8 + $0x48] sm:$0xf]
        %v3035 = vld [vmem:[%s8 + $0x4c] sm:$0xf]
        %v3036 = vld [vmem:[%s8 + $0x50] sm:$0xf]
        %v3037 = vld [vmem:[%s8 + $0x54] sm:$0xf]
        %v3038 = vld [vmem:[%s8 + $0x58] sm:$0xf]
        %v3039 = vld [vmem:[%s8 + $0x5c] sm:$0xf]
        %v3040 = vld [vmem:[%s8 + $0x60] sm:$0xf]
        %v3041 = vld [vmem:[%s8 + $0x64] sm:$0xf]
        %v3042 = vld [vmem:[%s8 + $0x68] sm:$0xf]
        %v3043 = vld [vmem:[%s8 + $0x6c] sm:$0xf]
        %v3044 = vld [vmem:[%s8 + $0x70] sm:$0xf]
        %v3045 = vld [vmem:[%s8 + $0x74] sm:$0xf]
        %v3046 = vld [vmem:[%s8 + $0x78] sm:$0xf]
        %v3047 = vld [vmem:[%s8 + $0x7c] sm:$0xf]
        %v3048 = vld [vmem:[%s8 + $0x80] sm:$0xf]
        %v3049 = vld [vmem:[%s8 + $0x84] sm:$0xf]
        %v3050 = vld [vmem:[%s8 + $0x88] sm:$0xf]
        %v3051 = vld [vmem:[%s8 + $0x8c] sm:$0xf]
        %v3052 = vld [vmem:[%s8 + $0x90] sm:$0xf]
        %v3053 = vld [vmem:[%s8 + $0x94] sm:$0xf]
        %v3054 = vld [vmem:[%s8 + $0x98] sm:$0xf]
        %v3055 = vld [vmem:[%s8 + $0x9c] sm:$0xf]
        %v3056 = vld [vmem:[%s8 + $0xa0] sm:$0xf]
        %v3057 = vld [vmem:[%s8 + $0xa4] sm:$0xf]
        %v3058 = vld [vmem:[%s8 + $0xa8] sm:$0xf]
        %v3059 = vld [vmem:[%s8 + $0xac] sm:$0xf]
        %v3060 = vld [vmem:[%s8 + $0xb0] sm:$0xf]
        %v3061 = vld [vmem:[%s8 + $0xb4] sm:$0xf]
        %v3062 = vld [vmem:[%s8 + $0xb8] sm:$0xf]
        %v3063 = vld [vmem:[%s8 + $0xbc] sm:$0xf]
        %v3064 = vld [vmem:[%s8 + $0xc0] sm:$0xf]
        %v3065 = vld [vmem:[%s8 + $0xc4] sm:$0xf]
        %v3066 = vld [vmem:[%s8 + $0xc8] sm:$0xf]
        %v3067 = vld [vmem:[%s8 + $0xcc] sm:$0xf]
        %v3068 = vld [vmem:[%s8 + $0xd0] sm:$0xf]
        %v3069 = vld [vmem:[%s8 + $0xd4] sm:$0xf]
        %v3070 = vld [vmem:[%s8 + $0xd8] sm:$0xf]
        %v3071 = vld [vmem:[%s8 + $0xdc] sm:$0xf]
        %v3072 = vld [vmem:[%s8 + $0xe0] sm:$0xf]
        %v3073 = vld [vmem:[%s8 + $0xe4] sm:$0xf]
        %v3074 = vld [vmem:[%s8 + $0xe8] sm:$0xf]
        %v3075 = vld [vmem:[%s8 + $0xec] sm:$0xf]
        %v3076 = vld [vmem:[%s8 + $0xf0] sm:$0xf]
        %v3077 = vld [vmem:[%s8 + $0xf4] sm:$0xf]
        %v3078 = vld [vmem:[%s8 + $0xf8] sm:$0xf]
        %v3079 = vld [vmem:[%s8 + $0xfc] sm:$0xf]
        %v3144 = vunpack.c.l.b16 %v3016
        %v3145 = vunpack.c.l.b16 %v3017
        %v3146 = vunpack.c.l.b16 %v3018
        %v3147 = vunpack.c.l.b16 %v3019
        %v3148 = vunpack.c.l.b16 %v3020
        %v3149 = vunpack.c.l.b16 %v3021
        %v3150 = vunpack.c.l.b16 %v3022
        %v3151 = vunpack.c.l.b16 %v3023
        %v3152 = vunpack.c.l.b16 %v3024
        %v3153 = vunpack.c.l.b16 %v3025
        %v3154 = vunpack.c.l.b16 %v3026
        %v3155 = vunpack.c.l.b16 %v3027
        %v3156 = vunpack.c.l.b16 %v3028
        %v3157 = vunpack.c.l.b16 %v3029
        %v3158 = vunpack.c.l.b16 %v3030
        %v3159 = vunpack.c.l.b16 %v3031
        %v3160 = vunpack.c.l.b16 %v3032
        %v3161 = vunpack.c.l.b16 %v3033
        %v3162 = vunpack.c.l.b16 %v3034
        %v3163 = vunpack.c.l.b16 %v3035
        %v3164 = vunpack.c.l.b16 %v3036
        %v3165 = vunpack.c.l.b16 %v3037
        %v3166 = vunpack.c.l.b16 %v3038
        %v3167 = vunpack.c.l.b16 %v3039
        %v3168 = vunpack.c.l.b16 %v3040
        %v3169 = vunpack.c.l.b16 %v3041
        %v3170 = vunpack.c.l.b16 %v3042
        %v3171 = vunpack.c.l.b16 %v3043
        %v3172 = vunpack.c.l.b16 %v3044
        %v3173 = vunpack.c.l.b16 %v3045
        %v3174 = vunpack.c.l.b16 %v3046
        %v3175 = vunpack.c.l.b16 %v3047
        %v3176 = vunpack.c.l.b16 %v3048
        %v3177 = vunpack.c.l.b16 %v3049
        %v3178 = vunpack.c.l.b16 %v3050
        %v3179 = vunpack.c.l.b16 %v3051
        %v3180 = vunpack.c.l.b16 %v3052
        %v3181 = vunpack.c.l.b16 %v3053
        %v3182 = vunpack.c.l.b16 %v3054
        %v3183 = vunpack.c.l.b16 %v3055
        %v3184 = vunpack.c.l.b16 %v3056
        %v3185 = vunpack.c.l.b16 %v3057
        %v3186 = vunpack.c.l.b16 %v3058
        %v3187 = vunpack.c.l.b16 %v3059
        %v3188 = vunpack.c.l.b16 %v3060
        %v3189 = vunpack.c.l.b16 %v3061
        %v3190 = vunpack.c.l.b16 %v3062
        %v3191 = vunpack.c.l.b16 %v3063
        %v3192 = vunpack.c.l.b16 %v3064
        %v3193 = vunpack.c.l.b16 %v3065
        %v3194 = vunpack.c.l.b16 %v3066
        %v3195 = vunpack.c.l.b16 %v3067
        %v3196 = vunpack.c.l.b16 %v3068
        %v3197 = vunpack.c.l.b16 %v3069
        %v3198 = vunpack.c.l.b16 %v3070
        %v3199 = vunpack.c.l.b16 %v3071
        %v3200 = vunpack.c.l.b16 %v3072
        %v3201 = vunpack.c.l.b16 %v3073
        %v3202 = vunpack.c.l.b16 %v3074
        %v3203 = vunpack.c.l.b16 %v3075
        %v3204 = vunpack.c.l.b16 %v3076
        %v3205 = vunpack.c.l.b16 %v3077
        %v3206 = vunpack.c.l.b16 %v3078
        %v3207 = vunpack.c.l.b16 %v3079
        %v3208 = vpack.c.b16 %v3145, %v3144
        %v3209 = vpack.c.b16 %v3147, %v3146
        %v3210 = vpack.c.b16 %v3149, %v3148
        %v3211 = vpack.c.b16 %v3151, %v3150
        %v3212 = vpack.c.b16 %v3153, %v3152
        %v3213 = vpack.c.b16 %v3155, %v3154
        %v3214 = vpack.c.b16 %v3157, %v3156
        %v3215 = vpack.c.b16 %v3159, %v3158
        %v3216 = vpack.c.b16 %v3161, %v3160
        %v3217 = vpack.c.b16 %v3163, %v3162
        %v3218 = vpack.c.b16 %v3165, %v3164
        %v3219 = vpack.c.b16 %v3167, %v3166
        %v3220 = vpack.c.b16 %v3169, %v3168
        %v3221 = vpack.c.b16 %v3171, %v3170
        %v3222 = vpack.c.b16 %v3173, %v3172
        %v3223 = vpack.c.b16 %v3175, %v3174
        %v3224 = vpack.c.b16 %v3177, %v3176
        %v3225 = vpack.c.b16 %v3179, %v3178
        %v3226 = vpack.c.b16 %v3181, %v3180
        %v3227 = vpack.c.b16 %v3183, %v3182
        %v3228 = vpack.c.b16 %v3185, %v3184
        %v3229 = vpack.c.b16 %v3187, %v3186
        %v3230 = vpack.c.b16 %v3189, %v3188
        %v3231 = vpack.c.b16 %v3191, %v3190
        %v3232 = vpack.c.b16 %v3193, %v3192
        %v3233 = vpack.c.b16 %v3195, %v3194
        %v3234 = vpack.c.b16 %v3197, %v3196
        %v3235 = vpack.c.b16 %v3199, %v3198
        %v3236 = vpack.c.b16 %v3201, %v3200
        %v3237 = vpack.c.b16 %v3203, %v3202
        %v3238 = vpack.c.b16 %v3205, %v3204
        %v3239 = vpack.c.b16 %v3207, %v3206
        %3272 = vmatprep.subr.bf16.mxu0 0
        %3273 = vmatpush1.bf16.msra.mxu0 %v3215
        %3274 = vmatprep.subr.bf16.mxu0 0
        %3275 = vmatpush1.bf16.msra.mxu0 %v3214
        %3276 = vmatprep.subr.bf16.mxu0 0
        %3277 = vmatpush1.bf16.msra.mxu0 %v3213
        %3278 = vmatprep.subr.bf16.mxu0 0
        %3279 = vmatpush1.bf16.msra.mxu0 %v3212
        %3280 = vmatprep.subr.bf16.mxu0 0
        %3281 = vmatpush1.bf16.msra.mxu0 %v3211
        %3282 = vmatprep.subr.bf16.mxu0 0
        %3283 = vmatpush1.bf16.msra.mxu0 %v3210
        %3284 = vmatprep.subr.bf16.mxu0 0
        %3285 = vmatpush1.bf16.msra.mxu0 %v3209
        %3286 = vmatprep.subr.bf16.mxu0 0
        %3287 = vmatpush1.bf16.msra.mxu0 %v3208
        %3288 = vmatprep.subr.bf16.mxu0 0
        %3289 = vmatpush2.bf16.msra.mxu0 %v3223
        %3290 = vmatprep.subr.bf16.mxu0 0
        %3291 = vmatpush2.bf16.msra.mxu0 %v3222
        %3292 = vmatprep.subr.bf16.mxu0 0
        %3293 = vmatpush2.bf16.msra.mxu0 %v3221
        %3294 = vmatprep.subr.bf16.mxu0 0
        %3295 = vmatpush2.bf16.msra.mxu0 %v3220
        %3296 = vmatprep.subr.bf16.mxu0 0
        %3297 = vmatpush2.bf16.msra.mxu0 %v3219
        %3298 = vmatprep.subr.bf16.mxu0 0
        %3299 = vmatpush2.bf16.msra.mxu0 %v3218
        %3300 = vmatprep.subr.bf16.mxu0 0
        %3301 = vmatpush2.bf16.msra.mxu0 %v3217
        %3302 = vmatprep.subr.bf16.mxu0 0
        %3303 = vmatpush2.bf16.msra.mxu0 %v3216
        %3304 = vmatprep.mubr.bf16.mxu0 %v3012
        %3305 = vmatmul.mubr.bf16.gmra.mxu0 %v3011
        %v3306 = vpop.f32.mrf.mxu0
        %v3307 = vadd.f32 0.0, %v3306
        %v3308 = vpop.f32.mrf.mxu0
        %v3309 = vpop.f32.mrf.mxu0
        %v3310 = vpop.f32.mrf.mxu0
        %3311 = vdwg.mxu0
        %3312 = vmatprep.subr.bf16.mxu0 0
        %3313 = vmatpush1.bf16.msra.mxu0 %v3231
        %3314 = vmatprep.subr.bf16.mxu0 0
        %3315 = vmatpush1.bf16.msra.mxu0 %v3230
        %3316 = vmatprep.subr.bf16.mxu0 0
        %3317 = vmatpush1.bf16.msra.mxu0 %v3229
        %3318 = vmatprep.subr.bf16.mxu0 0
        %3319 = vmatpush1.bf16.msra.mxu0 %v3228
        %3320 = vmatprep.subr.bf16.mxu0 0
        %3321 = vmatpush1.bf16.msra.mxu0 %v3227
        %3322 = vmatprep.subr.bf16.mxu0 0
        %3323 = vmatpush1.bf16.msra.mxu0 %v3226
        %3324 = vmatprep.subr.bf16.mxu0 0
        %3325 = vmatpush1.bf16.msra.mxu0 %v3225
        %3326 = vmatprep.subr.bf16.mxu0 0
        %3327 = vmatpush1.bf16.msra.mxu0 %v3224
        %3328 = vmatprep.subr.bf16.mxu0 0
        %3329 = vmatpush2.bf16.msra.mxu0 %v3239
        %3330 = vmatprep.subr.bf16.mxu0 0
        %3331 = vmatpush2.bf16.msra.mxu0 %v3238
        %3332 = vmatprep.subr.bf16.mxu0 0
        %3333 = vmatpush2.bf16.msra.mxu0 %v3237
        %3334 = vmatprep.subr.bf16.mxu0 0
        %3335 = vmatpush2.bf16.msra.mxu0 %v3236
        %3336 = vmatprep.subr.bf16.mxu0 0
        %3337 = vmatpush2.bf16.msra.mxu0 %v3235
        %3338 = vmatprep.subr.bf16.mxu0 0
        %3339 = vmatpush2.bf16.msra.mxu0 %v3234
        %3340 = vmatprep.subr.bf16.mxu0 0
        %3341 = vmatpush2.bf16.msra.mxu0 %v3233
        %3342 = vmatprep.subr.bf16.mxu0 0
        %3343 = vmatpush2.bf16.msra.mxu0 %v3232
        %3344 = vmatprep.mubr.bf16.mxu0 %v3014
        %3345 = vmatmul.mubr.bf16.gmra.mxu0 %v3013
        %v3346 = vpop.f32.mrf.mxu0
        %v3347 = vadd.f32 %v3307, %v3346
        %v3348 = vpop.f32.mrf.mxu0
        %v3349 = vpop.f32.mrf.mxu0
        %v3350 = vpop.f32.mrf.mxu0
        %3351 = vdwg.mxu0
        %v3352 = vadd.f32 %v3015, %v3347
        %s3353 = scalar_lea.vmem %s8, 256
        %v3354 = vld [vmem:[%s3353] sm:$0xf]
        %v3355 = vld [vmem:[%s3353 + $0x4] sm:$0xf]
        %v3356 = vld [vmem:[%s3353 + $0x8] sm:$0xf]
        %v3357 = vld [vmem:[%s3353 + $0xc] sm:$0xf]
        %v3358 = vld [vmem:[%s3353 + $0x10] sm:$0xf]
        %v3359 = vld [vmem:[%s3353 + $0x14] sm:$0xf]
        %v3360 = vld [vmem:[%s3353 + $0x18] sm:$0xf]
        %v3361 = vld [vmem:[%s3353 + $0x1c] sm:$0xf]
        %v3362 = vld [vmem:[%s3353 + $0x20] sm:$0xf]
        %v3363 = vld [vmem:[%s3353 + $0x24] sm:$0xf]
        %v3364 = vld [vmem:[%s3353 + $0x28] sm:$0xf]
        %v3365 = vld [vmem:[%s3353 + $0x2c] sm:$0xf]
        %v3366 = vld [vmem:[%s3353 + $0x30] sm:$0xf]
        %v3367 = vld [vmem:[%s3353 + $0x34] sm:$0xf]
        %v3368 = vld [vmem:[%s3353 + $0x38] sm:$0xf]
        %v3369 = vld [vmem:[%s3353 + $0x3c] sm:$0xf]
        %v3370 = vld [vmem:[%s3353 + $0x40] sm:$0xf]
        %v3371 = vld [vmem:[%s3353 + $0x44] sm:$0xf]
        %v3372 = vld [vmem:[%s3353 + $0x48] sm:$0xf]
        %v3373 = vld [vmem:[%s3353 + $0x4c] sm:$0xf]
        %v3374 = vld [vmem:[%s3353 + $0x50] sm:$0xf]
        %v3375 = vld [vmem:[%s3353 + $0x54] sm:$0xf]
        %v3376 = vld [vmem:[%s3353 + $0x58] sm:$0xf]
        %v3377 = vld [vmem:[%s3353 + $0x5c] sm:$0xf]
        %v3378 = vld [vmem:[%s3353 + $0x60] sm:$0xf]
        %v3379 = vld [vmem:[%s3353 + $0x64] sm:$0xf]
        %v3380 = vld [vmem:[%s3353 + $0x68] sm:$0xf]
        %v3381 = vld [vmem:[%s3353 + $0x6c] sm:$0xf]
        %v3382 = vld [vmem:[%s3353 + $0x70] sm:$0xf]
        %v3383 = vld [vmem:[%s3353 + $0x74] sm:$0xf]
        %v3384 = vld [vmem:[%s3353 + $0x78] sm:$0xf]
        %v3385 = vld [vmem:[%s3353 + $0x7c] sm:$0xf]
        %v3386 = vld [vmem:[%s3353 + $0x80] sm:$0xf]
        %v3387 = vld [vmem:[%s3353 + $0x84] sm:$0xf]
        %v3388 = vld [vmem:[%s3353 + $0x88] sm:$0xf]
        %v3389 = vld [vmem:[%s3353 + $0x8c] sm:$0xf]
        %v3390 = vld [vmem:[%s3353 + $0x90] sm:$0xf]
        %v3391 = vld [vmem:[%s3353 + $0x94] sm:$0xf]
        %v3392 = vld [vmem:[%s3353 + $0x98] sm:$0xf]
        %v3393 = vld [vmem:[%s3353 + $0x9c] sm:$0xf]
        %v3394 = vld [vmem:[%s3353 + $0xa0] sm:$0xf]
        %v3395 = vld [vmem:[%s3353 + $0xa4] sm:$0xf]
        %v3396 = vld [vmem:[%s3353 + $0xa8] sm:$0xf]
        %v3397 = vld [vmem:[%s3353 + $0xac] sm:$0xf]
        %v3398 = vld [vmem:[%s3353 + $0xb0] sm:$0xf]
        %v3399 = vld [vmem:[%s3353 + $0xb4] sm:$0xf]
        %v3400 = vld [vmem:[%s3353 + $0xb8] sm:$0xf]
        %v3401 = vld [vmem:[%s3353 + $0xbc] sm:$0xf]
        %v3402 = vld [vmem:[%s3353 + $0xc0] sm:$0xf]
        %v3403 = vld [vmem:[%s3353 + $0xc4] sm:$0xf]
        %v3404 = vld [vmem:[%s3353 + $0xc8] sm:$0xf]
        %v3405 = vld [vmem:[%s3353 + $0xcc] sm:$0xf]
        %v3406 = vld [vmem:[%s3353 + $0xd0] sm:$0xf]
        %v3407 = vld [vmem:[%s3353 + $0xd4] sm:$0xf]
        %v3408 = vld [vmem:[%s3353 + $0xd8] sm:$0xf]
        %v3409 = vld [vmem:[%s3353 + $0xdc] sm:$0xf]
        %v3410 = vld [vmem:[%s3353 + $0xe0] sm:$0xf]
        %v3411 = vld [vmem:[%s3353 + $0xe4] sm:$0xf]
        %v3412 = vld [vmem:[%s3353 + $0xe8] sm:$0xf]
        %v3413 = vld [vmem:[%s3353 + $0xec] sm:$0xf]
        %v3414 = vld [vmem:[%s3353 + $0xf0] sm:$0xf]
        %v3415 = vld [vmem:[%s3353 + $0xf4] sm:$0xf]
        %v3416 = vld [vmem:[%s3353 + $0xf8] sm:$0xf]
        %v3417 = vld [vmem:[%s3353 + $0xfc] sm:$0xf]
        %v3419 = vshrl.u32 %v3011, 16
        %v3422 = vshrl.u32 %v3012, 16
        %v3425 = vshrl.u32 %v3013, 16
        %v3428 = vshrl.u32 %v3014, 16
        %v3498 = vunpack.c.l.b16 %v3354
        %v3499 = vunpack.c.l.b16 %v3355
        %v3500 = vunpack.c.l.b16 %v3356
        %v3501 = vunpack.c.l.b16 %v3357
        %v3502 = vunpack.c.l.b16 %v3358
        %v3503 = vunpack.c.l.b16 %v3359
        %v3504 = vunpack.c.l.b16 %v3360
        %v3505 = vunpack.c.l.b16 %v3361
        %v3506 = vunpack.c.l.b16 %v3362
        %v3507 = vunpack.c.l.b16 %v3363
        %v3508 = vunpack.c.l.b16 %v3364
        %v3509 = vunpack.c.l.b16 %v3365
        %v3510 = vunpack.c.l.b16 %v3366
        %v3511 = vunpack.c.l.b16 %v3367
        %v3512 = vunpack.c.l.b16 %v3368
        %v3513 = vunpack.c.l.b16 %v3369
        %v3514 = vunpack.c.l.b16 %v3370
        %v3515 = vunpack.c.l.b16 %v3371
        %v3516 = vunpack.c.l.b16 %v3372
        %v3517 = vunpack.c.l.b16 %v3373
        %v3518 = vunpack.c.l.b16 %v3374
        %v3519 = vunpack.c.l.b16 %v3375
        %v3520 = vunpack.c.l.b16 %v3376
        %v3521 = vunpack.c.l.b16 %v3377
        %v3522 = vunpack.c.l.b16 %v3378
        %v3523 = vunpack.c.l.b16 %v3379
        %v3524 = vunpack.c.l.b16 %v3380
        %v3525 = vunpack.c.l.b16 %v3381
        %v3526 = vunpack.c.l.b16 %v3382
        %v3527 = vunpack.c.l.b16 %v3383
        %v3528 = vunpack.c.l.b16 %v3384
        %v3529 = vunpack.c.l.b16 %v3385
        %v3530 = vunpack.c.l.b16 %v3386
        %v3531 = vunpack.c.l.b16 %v3387
        %v3532 = vunpack.c.l.b16 %v3388
        %v3533 = vunpack.c.l.b16 %v3389
        %v3534 = vunpack.c.l.b16 %v3390
        %v3535 = vunpack.c.l.b16 %v3391
        %v3536 = vunpack.c.l.b16 %v3392
        %v3537 = vunpack.c.l.b16 %v3393
        %v3538 = vunpack.c.l.b16 %v3394
        %v3539 = vunpack.c.l.b16 %v3395
        %v3540 = vunpack.c.l.b16 %v3396
        %v3541 = vunpack.c.l.b16 %v3397
        %v3542 = vunpack.c.l.b16 %v3398
        %v3543 = vunpack.c.l.b16 %v3399
        %v3544 = vunpack.c.l.b16 %v3400
        %v3545 = vunpack.c.l.b16 %v3401
        %v3546 = vunpack.c.l.b16 %v3402
        %v3547 = vunpack.c.l.b16 %v3403
        %v3548 = vunpack.c.l.b16 %v3404
        %v3549 = vunpack.c.l.b16 %v3405
        %v3550 = vunpack.c.l.b16 %v3406
        %v3551 = vunpack.c.l.b16 %v3407
        %v3552 = vunpack.c.l.b16 %v3408
        %v3553 = vunpack.c.l.b16 %v3409
        %v3554 = vunpack.c.l.b16 %v3410
        %v3555 = vunpack.c.l.b16 %v3411
        %v3556 = vunpack.c.l.b16 %v3412
        %v3557 = vunpack.c.l.b16 %v3413
        %v3558 = vunpack.c.l.b16 %v3414
        %v3559 = vunpack.c.l.b16 %v3415
        %v3560 = vunpack.c.l.b16 %v3416
        %v3561 = vunpack.c.l.b16 %v3417
        %v3562 = vpack.c.b16 %v3499, %v3498
        %v3563 = vpack.c.b16 %v3501, %v3500
        %v3564 = vpack.c.b16 %v3503, %v3502
        %v3565 = vpack.c.b16 %v3505, %v3504
        %v3566 = vpack.c.b16 %v3507, %v3506
        %v3567 = vpack.c.b16 %v3509, %v3508
        %v3568 = vpack.c.b16 %v3511, %v3510
        %v3569 = vpack.c.b16 %v3513, %v3512
        %v3570 = vpack.c.b16 %v3515, %v3514
        %v3571 = vpack.c.b16 %v3517, %v3516
        %v3572 = vpack.c.b16 %v3519, %v3518
        %v3573 = vpack.c.b16 %v3521, %v3520
        %v3574 = vpack.c.b16 %v3523, %v3522
        %v3575 = vpack.c.b16 %v3525, %v3524
        %v3576 = vpack.c.b16 %v3527, %v3526
        %v3577 = vpack.c.b16 %v3529, %v3528
        %v3578 = vpack.c.b16 %v3531, %v3530
        %v3579 = vpack.c.b16 %v3533, %v3532
        %v3580 = vpack.c.b16 %v3535, %v3534
        %v3581 = vpack.c.b16 %v3537, %v3536
        %v3582 = vpack.c.b16 %v3539, %v3538
        %v3583 = vpack.c.b16 %v3541, %v3540
        %v3584 = vpack.c.b16 %v3543, %v3542
        %v3585 = vpack.c.b16 %v3545, %v3544
        %v3586 = vpack.c.b16 %v3547, %v3546
        %v3587 = vpack.c.b16 %v3549, %v3548
        %v3588 = vpack.c.b16 %v3551, %v3550
        %v3589 = vpack.c.b16 %v3553, %v3552
        %v3590 = vpack.c.b16 %v3555, %v3554
        %v3591 = vpack.c.b16 %v3557, %v3556
        %v3592 = vpack.c.b16 %v3559, %v3558
        %v3593 = vpack.c.b16 %v3561, %v3560
        %3626 = vmatprep.subr.bf16.mxu0 0
        %3627 = vmatpush1.bf16.msra.mxu0 %v3569
        %3628 = vmatprep.subr.bf16.mxu0 0
        %3629 = vmatpush1.bf16.msra.mxu0 %v3568
        %3630 = vmatprep.subr.bf16.mxu0 0
        %3631 = vmatpush1.bf16.msra.mxu0 %v3567
        %3632 = vmatprep.subr.bf16.mxu0 0
        %3633 = vmatpush1.bf16.msra.mxu0 %v3566
        %3634 = vmatprep.subr.bf16.mxu0 0
        %3635 = vmatpush1.bf16.msra.mxu0 %v3565
        %3636 = vmatprep.subr.bf16.mxu0 0
        %3637 = vmatpush1.bf16.msra.mxu0 %v3564
        %3638 = vmatprep.subr.bf16.mxu0 0
        %3639 = vmatpush1.bf16.msra.mxu0 %v3563
        %3640 = vmatprep.subr.bf16.mxu0 0
        %3641 = vmatpush1.bf16.msra.mxu0 %v3562
        %3642 = vmatprep.subr.bf16.mxu0 0
        %3643 = vmatpush2.bf16.msra.mxu0 %v3577
        %3644 = vmatprep.subr.bf16.mxu0 0
        %3645 = vmatpush2.bf16.msra.mxu0 %v3576
        %3646 = vmatprep.subr.bf16.mxu0 0
        %3647 = vmatpush2.bf16.msra.mxu0 %v3575
        %3648 = vmatprep.subr.bf16.mxu0 0
        %3649 = vmatpush2.bf16.msra.mxu0 %v3574
        %3650 = vmatprep.subr.bf16.mxu0 0
        %3651 = vmatpush2.bf16.msra.mxu0 %v3573
        %3652 = vmatprep.subr.bf16.mxu0 0
        %3653 = vmatpush2.bf16.msra.mxu0 %v3572
        %3654 = vmatprep.subr.bf16.mxu0 0
        %3655 = vmatpush2.bf16.msra.mxu0 %v3571
        %3656 = vmatprep.subr.bf16.mxu0 0
        %3657 = vmatpush2.bf16.msra.mxu0 %v3570
        %3658 = vmatprep.mubr.bf16.mxu0 %v3422
        %3659 = vmatmul.mubr.bf16.gmra.mxu0 %v3419
        %v3660 = vpop.f32.mrf.mxu0
        %v3661 = vadd.f32 0.0, %v3660
        %v3662 = vpop.f32.mrf.mxu0
        %v3663 = vpop.f32.mrf.mxu0
        %v3664 = vpop.f32.mrf.mxu0
        %3665 = vdwg.mxu0
        %3666 = vmatprep.subr.bf16.mxu0 0
        %3667 = vmatpush1.bf16.msra.mxu0 %v3585
        %3668 = vmatprep.subr.bf16.mxu0 0
        %3669 = vmatpush1.bf16.msra.mxu0 %v3584
        %3670 = vmatprep.subr.bf16.mxu0 0
        %3671 = vmatpush1.bf16.msra.mxu0 %v3583
        %3672 = vmatprep.subr.bf16.mxu0 0
        %3673 = vmatpush1.bf16.msra.mxu0 %v3582
        %3674 = vmatprep.subr.bf16.mxu0 0
        %3675 = vmatpush1.bf16.msra.mxu0 %v3581
        %3676 = vmatprep.subr.bf16.mxu0 0
        %3677 = vmatpush1.bf16.msra.mxu0 %v3580
        %3678 = vmatprep.subr.bf16.mxu0 0
        %3679 = vmatpush1.bf16.msra.mxu0 %v3579
        %3680 = vmatprep.subr.bf16.mxu0 0
        %3681 = vmatpush1.bf16.msra.mxu0 %v3578
        %3682 = vmatprep.subr.bf16.mxu0 0
        %3683 = vmatpush2.bf16.msra.mxu0 %v3593
        %3684 = vmatprep.subr.bf16.mxu0 0
        %3685 = vmatpush2.bf16.msra.mxu0 %v3592
        %3686 = vmatprep.subr.bf16.mxu0 0
        %3687 = vmatpush2.bf16.msra.mxu0 %v3591
        %3688 = vmatprep.subr.bf16.mxu0 0
        %3689 = vmatpush2.bf16.msra.mxu0 %v3590
        %3690 = vmatprep.subr.bf16.mxu0 0
        %3691 = vmatpush2.bf16.msra.mxu0 %v3589
        %3692 = vmatprep.subr.bf16.mxu0 0
        %3693 = vmatpush2.bf16.msra.mxu0 %v3588
        %3694 = vmatprep.subr.bf16.mxu0 0
        %3695 = vmatpush2.bf16.msra.mxu0 %v3587
        %3696 = vmatprep.subr.bf16.mxu0 0
        %3697 = vmatpush2.bf16.msra.mxu0 %v3586
        %3698 = vmatprep.mubr.bf16.mxu0 %v3428
        %3699 = vmatmul.mubr.bf16.gmra.mxu0 %v3425
        %v3700 = vpop.f32.mrf.mxu0
        %v3701 = vadd.f32 %v3661, %v3700
        %v3702 = vpop.f32.mrf.mxu0
        %v3703 = vpop.f32.mrf.mxu0
        %v3704 = vpop.f32.mrf.mxu0
        %3705 = vdwg.mxu0
        %v3706 = vadd.f32 %v3352, %v3701
        %s3707 = scalar_lea.vmem %s8, 512
        %v3708 = vld [vmem:[%s3707] sm:$0xf]
        %v3709 = vld [vmem:[%s3707 + $0x4] sm:$0xf]
        %v3710 = vld [vmem:[%s3707 + $0x8] sm:$0xf]
        %v3711 = vld [vmem:[%s3707 + $0xc] sm:$0xf]
        %v3712 = vld [vmem:[%s3707 + $0x10] sm:$0xf]
        %v3713 = vld [vmem:[%s3707 + $0x14] sm:$0xf]
        %v3714 = vld [vmem:[%s3707 + $0x18] sm:$0xf]
        %v3715 = vld [vmem:[%s3707 + $0x1c] sm:$0xf]
        %v3716 = vld [vmem:[%s3707 + $0x20] sm:$0xf]
        %v3717 = vld [vmem:[%s3707 + $0x24] sm:$0xf]
        %v3718 = vld [vmem:[%s3707 + $0x28] sm:$0xf]
        %v3719 = vld [vmem:[%s3707 + $0x2c] sm:$0xf]
        %v3720 = vld [vmem:[%s3707 + $0x30] sm:$0xf]
        %v3721 = vld [vmem:[%s3707 + $0x34] sm:$0xf]
        %v3722 = vld [vmem:[%s3707 + $0x38] sm:$0xf]
        %v3723 = vld [vmem:[%s3707 + $0x3c] sm:$0xf]
        %v3724 = vld [vmem:[%s3707 + $0x40] sm:$0xf]
        %v3725 = vld [vmem:[%s3707 + $0x44] sm:$0xf]
        %v3726 = vld [vmem:[%s3707 + $0x48] sm:$0xf]
        %v3727 = vld [vmem:[%s3707 + $0x4c] sm:$0xf]
        %v3728 = vld [vmem:[%s3707 + $0x50] sm:$0xf]
        %v3729 = vld [vmem:[%s3707 + $0x54] sm:$0xf]
        %v3730 = vld [vmem:[%s3707 + $0x58] sm:$0xf]
        %v3731 = vld [vmem:[%s3707 + $0x5c] sm:$0xf]
        %v3732 = vld [vmem:[%s3707 + $0x60] sm:$0xf]
        %v3733 = vld [vmem:[%s3707 + $0x64] sm:$0xf]
        %v3734 = vld [vmem:[%s3707 + $0x68] sm:$0xf]
        %v3735 = vld [vmem:[%s3707 + $0x6c] sm:$0xf]
        %v3736 = vld [vmem:[%s3707 + $0x70] sm:$0xf]
        %v3737 = vld [vmem:[%s3707 + $0x74] sm:$0xf]
        %v3738 = vld [vmem:[%s3707 + $0x78] sm:$0xf]
        %v3739 = vld [vmem:[%s3707 + $0x7c] sm:$0xf]
        %v3740 = vld [vmem:[%s3707 + $0x80] sm:$0xf]
        %v3741 = vld [vmem:[%s3707 + $0x84] sm:$0xf]
        %v3742 = vld [vmem:[%s3707 + $0x88] sm:$0xf]
        %v3743 = vld [vmem:[%s3707 + $0x8c] sm:$0xf]
        %v3744 = vld [vmem:[%s3707 + $0x90] sm:$0xf]
        %v3745 = vld [vmem:[%s3707 + $0x94] sm:$0xf]
        %v3746 = vld [vmem:[%s3707 + $0x98] sm:$0xf]
        %v3747 = vld [vmem:[%s3707 + $0x9c] sm:$0xf]
        %v3748 = vld [vmem:[%s3707 + $0xa0] sm:$0xf]
        %v3749 = vld [vmem:[%s3707 + $0xa4] sm:$0xf]
        %v3750 = vld [vmem:[%s3707 + $0xa8] sm:$0xf]
        %v3751 = vld [vmem:[%s3707 + $0xac] sm:$0xf]
        %v3752 = vld [vmem:[%s3707 + $0xb0] sm:$0xf]
        %v3753 = vld [vmem:[%s3707 + $0xb4] sm:$0xf]
        %v3754 = vld [vmem:[%s3707 + $0xb8] sm:$0xf]
        %v3755 = vld [vmem:[%s3707 + $0xbc] sm:$0xf]
        %v3756 = vld [vmem:[%s3707 + $0xc0] sm:$0xf]
        %v3757 = vld [vmem:[%s3707 + $0xc4] sm:$0xf]
        %v3758 = vld [vmem:[%s3707 + $0xc8] sm:$0xf]
        %v3759 = vld [vmem:[%s3707 + $0xcc] sm:$0xf]
        %v3760 = vld [vmem:[%s3707 + $0xd0] sm:$0xf]
        %v3761 = vld [vmem:[%s3707 + $0xd4] sm:$0xf]
        %v3762 = vld [vmem:[%s3707 + $0xd8] sm:$0xf]
        %v3763 = vld [vmem:[%s3707 + $0xdc] sm:$0xf]
        %v3764 = vld [vmem:[%s3707 + $0xe0] sm:$0xf]
        %v3765 = vld [vmem:[%s3707 + $0xe4] sm:$0xf]
        %v3766 = vld [vmem:[%s3707 + $0xe8] sm:$0xf]
        %v3767 = vld [vmem:[%s3707 + $0xec] sm:$0xf]
        %v3768 = vld [vmem:[%s3707 + $0xf0] sm:$0xf]
        %v3769 = vld [vmem:[%s3707 + $0xf4] sm:$0xf]
        %v3770 = vld [vmem:[%s3707 + $0xf8] sm:$0xf]
        %v3771 = vld [vmem:[%s3707 + $0xfc] sm:$0xf]
        %v3776 = vrot.slane %v3011, 1
        %v3777 = vrot.slane %v3012, 1
        %v3778 = vrot.slane %v3013, 1
        %v3779 = vrot.slane %v3014, 1
        %v3848 = vunpack.c.l.b16 %v3708
        %v3849 = vunpack.c.l.b16 %v3709
        %v3850 = vunpack.c.l.b16 %v3710
        %v3851 = vunpack.c.l.b16 %v3711
        %v3852 = vunpack.c.l.b16 %v3712
        %v3853 = vunpack.c.l.b16 %v3713
        %v3854 = vunpack.c.l.b16 %v3714
        %v3855 = vunpack.c.l.b16 %v3715
        %v3856 = vunpack.c.l.b16 %v3716
        %v3857 = vunpack.c.l.b16 %v3717
        %v3858 = vunpack.c.l.b16 %v3718
        %v3859 = vunpack.c.l.b16 %v3719
        %v3860 = vunpack.c.l.b16 %v3720
        %v3861 = vunpack.c.l.b16 %v3721
        %v3862 = vunpack.c.l.b16 %v3722
        %v3863 = vunpack.c.l.b16 %v3723
        %v3864 = vunpack.c.l.b16 %v3724
        %v3865 = vunpack.c.l.b16 %v3725
        %v3866 = vunpack.c.l.b16 %v3726
        %v3867 = vunpack.c.l.b16 %v3727
        %v3868 = vunpack.c.l.b16 %v3728
        %v3869 = vunpack.c.l.b16 %v3729
        %v3870 = vunpack.c.l.b16 %v3730
        %v3871 = vunpack.c.l.b16 %v3731
        %v3872 = vunpack.c.l.b16 %v3732
        %v3873 = vunpack.c.l.b16 %v3733
        %v3874 = vunpack.c.l.b16 %v3734
        %v3875 = vunpack.c.l.b16 %v3735
        %v3876 = vunpack.c.l.b16 %v3736
        %v3877 = vunpack.c.l.b16 %v3737
        %v3878 = vunpack.c.l.b16 %v3738
        %v3879 = vunpack.c.l.b16 %v3739
        %v3880 = vunpack.c.l.b16 %v3740
        %v3881 = vunpack.c.l.b16 %v3741
        %v3882 = vunpack.c.l.b16 %v3742
        %v3883 = vunpack.c.l.b16 %v3743
        %v3884 = vunpack.c.l.b16 %v3744
        %v3885 = vunpack.c.l.b16 %v3745
        %v3886 = vunpack.c.l.b16 %v3746
        %v3887 = vunpack.c.l.b16 %v3747
        %v3888 = vunpack.c.l.b16 %v3748
        %v3889 = vunpack.c.l.b16 %v3749
        %v3890 = vunpack.c.l.b16 %v3750
        %v3891 = vunpack.c.l.b16 %v3751
        %v3892 = vunpack.c.l.b16 %v3752
        %v3893 = vunpack.c.l.b16 %v3753
        %v3894 = vunpack.c.l.b16 %v3754
        %v3895 = vunpack.c.l.b16 %v3755
        %v3896 = vunpack.c.l.b16 %v3756
        %v3897 = vunpack.c.l.b16 %v3757
        %v3898 = vunpack.c.l.b16 %v3758
        %v3899 = vunpack.c.l.b16 %v3759
        %v3900 = vunpack.c.l.b16 %v3760
        %v3901 = vunpack.c.l.b16 %v3761
        %v3902 = vunpack.c.l.b16 %v3762
        %v3903 = vunpack.c.l.b16 %v3763
        %v3904 = vunpack.c.l.b16 %v3764
        %v3905 = vunpack.c.l.b16 %v3765
        %v3906 = vunpack.c.l.b16 %v3766
        %v3907 = vunpack.c.l.b16 %v3767
        %v3908 = vunpack.c.l.b16 %v3768
        %v3909 = vunpack.c.l.b16 %v3769
        %v3910 = vunpack.c.l.b16 %v3770
        %v3911 = vunpack.c.l.b16 %v3771
        %v3912 = vpack.c.b16 %v3849, %v3848
        %v3913 = vpack.c.b16 %v3851, %v3850
        %v3914 = vpack.c.b16 %v3853, %v3852
        %v3915 = vpack.c.b16 %v3855, %v3854
        %v3916 = vpack.c.b16 %v3857, %v3856
        %v3917 = vpack.c.b16 %v3859, %v3858
        %v3918 = vpack.c.b16 %v3861, %v3860
        %v3919 = vpack.c.b16 %v3863, %v3862
        %v3920 = vpack.c.b16 %v3865, %v3864
        %v3921 = vpack.c.b16 %v3867, %v3866
        %v3922 = vpack.c.b16 %v3869, %v3868
        %v3923 = vpack.c.b16 %v3871, %v3870
        %v3924 = vpack.c.b16 %v3873, %v3872
        %v3925 = vpack.c.b16 %v3875, %v3874
        %v3926 = vpack.c.b16 %v3877, %v3876
        %v3927 = vpack.c.b16 %v3879, %v3878
        %v3928 = vpack.c.b16 %v3881, %v3880
        %v3929 = vpack.c.b16 %v3883, %v3882
        %v3930 = vpack.c.b16 %v3885, %v3884
        %v3931 = vpack.c.b16 %v3887, %v3886
        %v3932 = vpack.c.b16 %v3889, %v3888
        %v3933 = vpack.c.b16 %v3891, %v3890
        %v3934 = vpack.c.b16 %v3893, %v3892
        %v3935 = vpack.c.b16 %v3895, %v3894
        %v3936 = vpack.c.b16 %v3897, %v3896
        %v3937 = vpack.c.b16 %v3899, %v3898
        %v3938 = vpack.c.b16 %v3901, %v3900
        %v3939 = vpack.c.b16 %v3903, %v3902
        %v3940 = vpack.c.b16 %v3905, %v3904
        %v3941 = vpack.c.b16 %v3907, %v3906
        %v3942 = vpack.c.b16 %v3909, %v3908
        %v3943 = vpack.c.b16 %v3911, %v3910
        %3976 = vmatprep.subr.bf16.mxu0 0
        %3977 = vmatpush1.bf16.msra.mxu0 %v3919
        %3978 = vmatprep.subr.bf16.mxu0 0
        %3979 = vmatpush1.bf16.msra.mxu0 %v3918
        %3980 = vmatprep.subr.bf16.mxu0 0
        %3981 = vmatpush1.bf16.msra.mxu0 %v3917
        %3982 = vmatprep.subr.bf16.mxu0 0
        %3983 = vmatpush1.bf16.msra.mxu0 %v3916
        %3984 = vmatprep.subr.bf16.mxu0 0
        %3985 = vmatpush1.bf16.msra.mxu0 %v3915
        %3986 = vmatprep.subr.bf16.mxu0 0
        %3987 = vmatpush1.bf16.msra.mxu0 %v3914
        %3988 = vmatprep.subr.bf16.mxu0 0
        %3989 = vmatpush1.bf16.msra.mxu0 %v3913
        %3990 = vmatprep.subr.bf16.mxu0 0
        %3991 = vmatpush1.bf16.msra.mxu0 %v3912
        %3992 = vmatprep.subr.bf16.mxu0 0
        %3993 = vmatpush2.bf16.msra.mxu0 %v3927
        %3994 = vmatprep.subr.bf16.mxu0 0
        %3995 = vmatpush2.bf16.msra.mxu0 %v3926
        %3996 = vmatprep.subr.bf16.mxu0 0
        %3997 = vmatpush2.bf16.msra.mxu0 %v3925
        %3998 = vmatprep.subr.bf16.mxu0 0
        %3999 = vmatpush2.bf16.msra.mxu0 %v3924
        %4000 = vmatprep.subr.bf16.mxu0 0
        %4001 = vmatpush2.bf16.msra.mxu0 %v3923
        %4002 = vmatprep.subr.bf16.mxu0 0
        %4003 = vmatpush2.bf16.msra.mxu0 %v3922
        %4004 = vmatprep.subr.bf16.mxu0 0
        %4005 = vmatpush2.bf16.msra.mxu0 %v3921
        %4006 = vmatprep.subr.bf16.mxu0 0
        %4007 = vmatpush2.bf16.msra.mxu0 %v3920
        %4008 = vmatprep.mubr.bf16.mxu0 %v3777
        %4009 = vmatmul.mubr.bf16.gmra.mxu0 %v3776
        %v4010 = vpop.f32.mrf.mxu0
        %v4011 = vadd.f32 0.0, %v4010
        %v4012 = vpop.f32.mrf.mxu0
        %v4013 = vpop.f32.mrf.mxu0
        %v4014 = vpop.f32.mrf.mxu0
        %4015 = vdwg.mxu0
        %4016 = vmatprep.subr.bf16.mxu0 0
        %4017 = vmatpush1.bf16.msra.mxu0 %v3935
        %4018 = vmatprep.subr.bf16.mxu0 0
        %4019 = vmatpush1.bf16.msra.mxu0 %v3934
        %4020 = vmatprep.subr.bf16.mxu0 0
        %4021 = vmatpush1.bf16.msra.mxu0 %v3933
        %4022 = vmatprep.subr.bf16.mxu0 0
        %4023 = vmatpush1.bf16.msra.mxu0 %v3932
        %4024 = vmatprep.subr.bf16.mxu0 0
        %4025 = vmatpush1.bf16.msra.mxu0 %v3931
        %4026 = vmatprep.subr.bf16.mxu0 0
        %4027 = vmatpush1.bf16.msra.mxu0 %v3930
        %4028 = vmatprep.subr.bf16.mxu0 0
        %4029 = vmatpush1.bf16.msra.mxu0 %v3929
        %4030 = vmatprep.subr.bf16.mxu0 0
        %4031 = vmatpush1.bf16.msra.mxu0 %v3928
        %4032 = vmatprep.subr.bf16.mxu0 0
        %4033 = vmatpush2.bf16.msra.mxu0 %v3943
        %4034 = vmatprep.subr.bf16.mxu0 0
        %4035 = vmatpush2.bf16.msra.mxu0 %v3942
        %4036 = vmatprep.subr.bf16.mxu0 0
        %4037 = vmatpush2.bf16.msra.mxu0 %v3941
        %4038 = vmatprep.subr.bf16.mxu0 0
        %4039 = vmatpush2.bf16.msra.mxu0 %v3940
        %4040 = vmatprep.subr.bf16.mxu0 0
        %4041 = vmatpush2.bf16.msra.mxu0 %v3939
        %4042 = vmatprep.subr.bf16.mxu0 0
        %4043 = vmatpush2.bf16.msra.mxu0 %v3938
        %4044 = vmatprep.subr.bf16.mxu0 0
        %4045 = vmatpush2.bf16.msra.mxu0 %v3937
        %4046 = vmatprep.subr.bf16.mxu0 0
        %4047 = vmatpush2.bf16.msra.mxu0 %v3936
        %4048 = vmatprep.mubr.bf16.mxu0 %v3779
        %4049 = vmatmul.mubr.bf16.gmra.mxu0 %v3778
        %v4050 = vpop.f32.mrf.mxu0
        %v4051 = vadd.f32 %v4011, %v4050
        %v4052 = vpop.f32.mrf.mxu0
        %v4053 = vpop.f32.mrf.mxu0
        %v4054 = vpop.f32.mrf.mxu0
        %4055 = vdwg.mxu0
        %v4056 = vadd.f32 %v3706, %v4051
        %s4057 = scalar_lea.vmem %s8, 768
        %v4058 = vld [vmem:[%s4057] sm:$0xf]
        %v4059 = vld [vmem:[%s4057 + $0x4] sm:$0xf]
        %v4060 = vld [vmem:[%s4057 + $0x8] sm:$0xf]
        %v4061 = vld [vmem:[%s4057 + $0xc] sm:$0xf]
        %v4062 = vld [vmem:[%s4057 + $0x10] sm:$0xf]
        %v4063 = vld [vmem:[%s4057 + $0x14] sm:$0xf]
        %v4064 = vld [vmem:[%s4057 + $0x18] sm:$0xf]
        %v4065 = vld [vmem:[%s4057 + $0x1c] sm:$0xf]
        %v4066 = vld [vmem:[%s4057 + $0x20] sm:$0xf]
        %v4067 = vld [vmem:[%s4057 + $0x24] sm:$0xf]
        %v4068 = vld [vmem:[%s4057 + $0x28] sm:$0xf]
        %v4069 = vld [vmem:[%s4057 + $0x2c] sm:$0xf]
        %v4070 = vld [vmem:[%s4057 + $0x30] sm:$0xf]
        %v4071 = vld [vmem:[%s4057 + $0x34] sm:$0xf]
        %v4072 = vld [vmem:[%s4057 + $0x38] sm:$0xf]
        %v4073 = vld [vmem:[%s4057 + $0x3c] sm:$0xf]
        %v4074 = vld [vmem:[%s4057 + $0x40] sm:$0xf]
        %v4075 = vld [vmem:[%s4057 + $0x44] sm:$0xf]
        %v4076 = vld [vmem:[%s4057 + $0x48] sm:$0xf]
        %v4077 = vld [vmem:[%s4057 + $0x4c] sm:$0xf]
        %v4078 = vld [vmem:[%s4057 + $0x50] sm:$0xf]
        %v4079 = vld [vmem:[%s4057 + $0x54] sm:$0xf]
        %v4080 = vld [vmem:[%s4057 + $0x58] sm:$0xf]
        %v4081 = vld [vmem:[%s4057 + $0x5c] sm:$0xf]
        %v4082 = vld [vmem:[%s4057 + $0x60] sm:$0xf]
        %v4083 = vld [vmem:[%s4057 + $0x64] sm:$0xf]
        %v4084 = vld [vmem:[%s4057 + $0x68] sm:$0xf]
        %v4085 = vld [vmem:[%s4057 + $0x6c] sm:$0xf]
        %v4086 = vld [vmem:[%s4057 + $0x70] sm:$0xf]
        %v4087 = vld [vmem:[%s4057 + $0x74] sm:$0xf]
        %v4088 = vld [vmem:[%s4057 + $0x78] sm:$0xf]
        %v4089 = vld [vmem:[%s4057 + $0x7c] sm:$0xf]
        %v4090 = vld [vmem:[%s4057 + $0x80] sm:$0xf]
        %v4091 = vld [vmem:[%s4057 + $0x84] sm:$0xf]
        %v4092 = vld [vmem:[%s4057 + $0x88] sm:$0xf]
        %v4093 = vld [vmem:[%s4057 + $0x8c] sm:$0xf]
        %v4094 = vld [vmem:[%s4057 + $0x90] sm:$0xf]
        %v4095 = vld [vmem:[%s4057 + $0x94] sm:$0xf]
        %v4096 = vld [vmem:[%s4057 + $0x98] sm:$0xf]
        %v4097 = vld [vmem:[%s4057 + $0x9c] sm:$0xf]
        %v4098 = vld [vmem:[%s4057 + $0xa0] sm:$0xf]
        %v4099 = vld [vmem:[%s4057 + $0xa4] sm:$0xf]
        %v4100 = vld [vmem:[%s4057 + $0xa8] sm:$0xf]
        %v4101 = vld [vmem:[%s4057 + $0xac] sm:$0xf]
        %v4102 = vld [vmem:[%s4057 + $0xb0] sm:$0xf]
        %v4103 = vld [vmem:[%s4057 + $0xb4] sm:$0xf]
        %v4104 = vld [vmem:[%s4057 + $0xb8] sm:$0xf]
        %v4105 = vld [vmem:[%s4057 + $0xbc] sm:$0xf]
        %v4106 = vld [vmem:[%s4057 + $0xc0] sm:$0xf]
        %v4107 = vld [vmem:[%s4057 + $0xc4] sm:$0xf]
        %v4108 = vld [vmem:[%s4057 + $0xc8] sm:$0xf]
        %v4109 = vld [vmem:[%s4057 + $0xcc] sm:$0xf]
        %v4110 = vld [vmem:[%s4057 + $0xd0] sm:$0xf]
        %v4111 = vld [vmem:[%s4057 + $0xd4] sm:$0xf]
        %v4112 = vld [vmem:[%s4057 + $0xd8] sm:$0xf]
        %v4113 = vld [vmem:[%s4057 + $0xdc] sm:$0xf]
        %v4114 = vld [vmem:[%s4057 + $0xe0] sm:$0xf]
        %v4115 = vld [vmem:[%s4057 + $0xe4] sm:$0xf]
        %v4116 = vld [vmem:[%s4057 + $0xe8] sm:$0xf]
        %v4117 = vld [vmem:[%s4057 + $0xec] sm:$0xf]
        %v4118 = vld [vmem:[%s4057 + $0xf0] sm:$0xf]
        %v4119 = vld [vmem:[%s4057 + $0xf4] sm:$0xf]
        %v4120 = vld [vmem:[%s4057 + $0xf8] sm:$0xf]
        %v4121 = vld [vmem:[%s4057 + $0xfc] sm:$0xf]
        %v4122 = vrot.slane %v3419, 1
        %v4123 = vrot.slane %v3422, 1
        %v4124 = vrot.slane %v3425, 1
        %v4125 = vrot.slane %v3428, 1
        %v4194 = vunpack.c.l.b16 %v4058
        %v4195 = vunpack.c.l.b16 %v4059
        %v4196 = vunpack.c.l.b16 %v4060
        %v4197 = vunpack.c.l.b16 %v4061
        %v4198 = vunpack.c.l.b16 %v4062
        %v4199 = vunpack.c.l.b16 %v4063
        %v4200 = vunpack.c.l.b16 %v4064
        %v4201 = vunpack.c.l.b16 %v4065
        %v4202 = vunpack.c.l.b16 %v4066
        %v4203 = vunpack.c.l.b16 %v4067
        %v4204 = vunpack.c.l.b16 %v4068
        %v4205 = vunpack.c.l.b16 %v4069
        %v4206 = vunpack.c.l.b16 %v4070
        %v4207 = vunpack.c.l.b16 %v4071
        %v4208 = vunpack.c.l.b16 %v4072
        %v4209 = vunpack.c.l.b16 %v4073
        %v4210 = vunpack.c.l.b16 %v4074
        %v4211 = vunpack.c.l.b16 %v4075
        %v4212 = vunpack.c.l.b16 %v4076
        %v4213 = vunpack.c.l.b16 %v4077
        %v4214 = vunpack.c.l.b16 %v4078
        %v4215 = vunpack.c.l.b16 %v4079
        %v4216 = vunpack.c.l.b16 %v4080
        %v4217 = vunpack.c.l.b16 %v4081
        %v4218 = vunpack.c.l.b16 %v4082
        %v4219 = vunpack.c.l.b16 %v4083
        %v4220 = vunpack.c.l.b16 %v4084
        %v4221 = vunpack.c.l.b16 %v4085
        %v4222 = vunpack.c.l.b16 %v4086
        %v4223 = vunpack.c.l.b16 %v4087
        %v4224 = vunpack.c.l.b16 %v4088
        %v4225 = vunpack.c.l.b16 %v4089
        %v4226 = vunpack.c.l.b16 %v4090
        %v4227 = vunpack.c.l.b16 %v4091
        %v4228 = vunpack.c.l.b16 %v4092
        %v4229 = vunpack.c.l.b16 %v4093
        %v4230 = vunpack.c.l.b16 %v4094
        %v4231 = vunpack.c.l.b16 %v4095
        %v4232 = vunpack.c.l.b16 %v4096
        %v4233 = vunpack.c.l.b16 %v4097
        %v4234 = vunpack.c.l.b16 %v4098
        %v4235 = vunpack.c.l.b16 %v4099
        %v4236 = vunpack.c.l.b16 %v4100
        %v4237 = vunpack.c.l.b16 %v4101
        %v4238 = vunpack.c.l.b16 %v4102
        %v4239 = vunpack.c.l.b16 %v4103
        %v4240 = vunpack.c.l.b16 %v4104
        %v4241 = vunpack.c.l.b16 %v4105
        %v4242 = vunpack.c.l.b16 %v4106
        %v4243 = vunpack.c.l.b16 %v4107
        %v4244 = vunpack.c.l.b16 %v4108
        %v4245 = vunpack.c.l.b16 %v4109
        %v4246 = vunpack.c.l.b16 %v4110
        %v4247 = vunpack.c.l.b16 %v4111
        %v4248 = vunpack.c.l.b16 %v4112
        %v4249 = vunpack.c.l.b16 %v4113
        %v4250 = vunpack.c.l.b16 %v4114
        %v4251 = vunpack.c.l.b16 %v4115
        %v4252 = vunpack.c.l.b16 %v4116
        %v4253 = vunpack.c.l.b16 %v4117
        %v4254 = vunpack.c.l.b16 %v4118
        %v4255 = vunpack.c.l.b16 %v4119
        %v4256 = vunpack.c.l.b16 %v4120
        %v4257 = vunpack.c.l.b16 %v4121
        %v4258 = vpack.c.b16 %v4195, %v4194
        %v4259 = vpack.c.b16 %v4197, %v4196
        %v4260 = vpack.c.b16 %v4199, %v4198
        %v4261 = vpack.c.b16 %v4201, %v4200
        %v4262 = vpack.c.b16 %v4203, %v4202
        %v4263 = vpack.c.b16 %v4205, %v4204
        %v4264 = vpack.c.b16 %v4207, %v4206
        %v4265 = vpack.c.b16 %v4209, %v4208
        %v4266 = vpack.c.b16 %v4211, %v4210
        %v4267 = vpack.c.b16 %v4213, %v4212
        %v4268 = vpack.c.b16 %v4215, %v4214
        %v4269 = vpack.c.b16 %v4217, %v4216
        %v4270 = vpack.c.b16 %v4219, %v4218
        %v4271 = vpack.c.b16 %v4221, %v4220
        %v4272 = vpack.c.b16 %v4223, %v4222
        %v4273 = vpack.c.b16 %v4225, %v4224
        %v4274 = vpack.c.b16 %v4227, %v4226
        %v4275 = vpack.c.b16 %v4229, %v4228
        %v4276 = vpack.c.b16 %v4231, %v4230
        %v4277 = vpack.c.b16 %v4233, %v4232
        %v4278 = vpack.c.b16 %v4235, %v4234
        %v4279 = vpack.c.b16 %v4237, %v4236
        %v4280 = vpack.c.b16 %v4239, %v4238
        %v4281 = vpack.c.b16 %v4241, %v4240
        %v4282 = vpack.c.b16 %v4243, %v4242
        %v4283 = vpack.c.b16 %v4245, %v4244
        %v4284 = vpack.c.b16 %v4247, %v4246
        %v4285 = vpack.c.b16 %v4249, %v4248
        %v4286 = vpack.c.b16 %v4251, %v4250
        %v4287 = vpack.c.b16 %v4253, %v4252
        %v4288 = vpack.c.b16 %v4255, %v4254
        %v4289 = vpack.c.b16 %v4257, %v4256
        %4322 = vmatprep.subr.bf16.mxu0 0
        %4323 = vmatpush1.bf16.msra.mxu0 %v4265
        %4324 = vmatprep.subr.bf16.mxu0 0
        %4325 = vmatpush1.bf16.msra.mxu0 %v4264
        %4326 = vmatprep.subr.bf16.mxu0 0
        %4327 = vmatpush1.bf16.msra.mxu0 %v4263
        %4328 = vmatprep.subr.bf16.mxu0 0
        %4329 = vmatpush1.bf16.msra.mxu0 %v4262
        %4330 = vmatprep.subr.bf16.mxu0 0
        %4331 = vmatpush1.bf16.msra.mxu0 %v4261
        %4332 = vmatprep.subr.bf16.mxu0 0
        %4333 = vmatpush1.bf16.msra.mxu0 %v4260
        %4334 = vmatprep.subr.bf16.mxu0 0
        %4335 = vmatpush1.bf16.msra.mxu0 %v4259
        %4336 = vmatprep.subr.bf16.mxu0 0
        %4337 = vmatpush1.bf16.msra.mxu0 %v4258
        %4338 = vmatprep.subr.bf16.mxu0 0
        %4339 = vmatpush2.bf16.msra.mxu0 %v4273
        %4340 = vmatprep.subr.bf16.mxu0 0
        %4341 = vmatpush2.bf16.msra.mxu0 %v4272
        %4342 = vmatprep.subr.bf16.mxu0 0
        %4343 = vmatpush2.bf16.msra.mxu0 %v4271
        %4344 = vmatprep.subr.bf16.mxu0 0
        %4345 = vmatpush2.bf16.msra.mxu0 %v4270
        %4346 = vmatprep.subr.bf16.mxu0 0
        %4347 = vmatpush2.bf16.msra.mxu0 %v4269
        %4348 = vmatprep.subr.bf16.mxu0 0
        %4349 = vmatpush2.bf16.msra.mxu0 %v4268
        %4350 = vmatprep.subr.bf16.mxu0 0
        %4351 = vmatpush2.bf16.msra.mxu0 %v4267
        %4352 = vmatprep.subr.bf16.mxu0 0
        %4353 = vmatpush2.bf16.msra.mxu0 %v4266
        %4354 = vmatprep.mubr.bf16.mxu0 %v4123
        %4355 = vmatmul.mubr.bf16.gmra.mxu0 %v4122
        %v4356 = vpop.f32.mrf.mxu0
        %v4357 = vadd.f32 0.0, %v4356
        %v4358 = vpop.f32.mrf.mxu0
        %v4359 = vpop.f32.mrf.mxu0
        %v4360 = vpop.f32.mrf.mxu0
        %4361 = vdwg.mxu0
        %4362 = vmatprep.subr.bf16.mxu0 0
        %4363 = vmatpush1.bf16.msra.mxu0 %v4281
        %4364 = vmatprep.subr.bf16.mxu0 0
        %4365 = vmatpush1.bf16.msra.mxu0 %v4280
        %4366 = vmatprep.subr.bf16.mxu0 0
        %4367 = vmatpush1.bf16.msra.mxu0 %v4279
        %4368 = vmatprep.subr.bf16.mxu0 0
        %4369 = vmatpush1.bf16.msra.mxu0 %v4278
        %4370 = vmatprep.subr.bf16.mxu0 0
        %4371 = vmatpush1.bf16.msra.mxu0 %v4277
        %4372 = vmatprep.subr.bf16.mxu0 0
        %4373 = vmatpush1.bf16.msra.mxu0 %v4276
        %4374 = vmatprep.subr.bf16.mxu0 0
        %4375 = vmatpush1.bf16.msra.mxu0 %v4275
        %4376 = vmatprep.subr.bf16.mxu0 0
        %4377 = vmatpush1.bf16.msra.mxu0 %v4274
        %4378 = vmatprep.subr.bf16.mxu0 0
        %4379 = vmatpush2.bf16.msra.mxu0 %v4289
        %4380 = vmatprep.subr.bf16.mxu0 0
        %4381 = vmatpush2.bf16.msra.mxu0 %v4288
        %4382 = vmatprep.subr.bf16.mxu0 0
        %4383 = vmatpush2.bf16.msra.mxu0 %v4287
        %4384 = vmatprep.subr.bf16.mxu0 0
        %4385 = vmatpush2.bf16.msra.mxu0 %v4286
        %4386 = vmatprep.subr.bf16.mxu0 0
        %4387 = vmatpush2.bf16.msra.mxu0 %v4285
        %4388 = vmatprep.subr.bf16.mxu0 0
        %4389 = vmatpush2.bf16.msra.mxu0 %v4284
        %4390 = vmatprep.subr.bf16.mxu0 0
        %4391 = vmatpush2.bf16.msra.mxu0 %v4283
        %4392 = vmatprep.subr.bf16.mxu0 0
        %4393 = vmatpush2.bf16.msra.mxu0 %v4282
        %4394 = vmatprep.mubr.bf16.mxu0 %v4125
        %4395 = vmatmul.mubr.bf16.gmra.mxu0 %v4124
        %v4396 = vpop.f32.mrf.mxu0
        %v4397 = vadd.f32 %v4357, %v4396
        %v4398 = vpop.f32.mrf.mxu0
        %v4399 = vpop.f32.mrf.mxu0
        %v4400 = vpop.f32.mrf.mxu0
        %4401 = vdwg.mxu0
        %v4402 = vadd.f32 %v4056, %v4397
        %s4403 = scalar_lea.vmem %s8, 1024
        %v4404 = vld [vmem:[%s4403] sm:$0xf]
        %v4405 = vld [vmem:[%s4403 + $0x4] sm:$0xf]
        %v4406 = vld [vmem:[%s4403 + $0x8] sm:$0xf]
        %v4407 = vld [vmem:[%s4403 + $0xc] sm:$0xf]
        %v4408 = vld [vmem:[%s4403 + $0x10] sm:$0xf]
        %v4409 = vld [vmem:[%s4403 + $0x14] sm:$0xf]
        %v4410 = vld [vmem:[%s4403 + $0x18] sm:$0xf]
        %v4411 = vld [vmem:[%s4403 + $0x1c] sm:$0xf]
        %v4412 = vld [vmem:[%s4403 + $0x20] sm:$0xf]
        %v4413 = vld [vmem:[%s4403 + $0x24] sm:$0xf]
        %v4414 = vld [vmem:[%s4403 + $0x28] sm:$0xf]
        %v4415 = vld [vmem:[%s4403 + $0x2c] sm:$0xf]
        %v4416 = vld [vmem:[%s4403 + $0x30] sm:$0xf]
        %v4417 = vld [vmem:[%s4403 + $0x34] sm:$0xf]
        %v4418 = vld [vmem:[%s4403 + $0x38] sm:$0xf]
        %v4419 = vld [vmem:[%s4403 + $0x3c] sm:$0xf]
        %v4420 = vld [vmem:[%s4403 + $0x40] sm:$0xf]
        %v4421 = vld [vmem:[%s4403 + $0x44] sm:$0xf]
        %v4422 = vld [vmem:[%s4403 + $0x48] sm:$0xf]
        %v4423 = vld [vmem:[%s4403 + $0x4c] sm:$0xf]
        %v4424 = vld [vmem:[%s4403 + $0x50] sm:$0xf]
        %v4425 = vld [vmem:[%s4403 + $0x54] sm:$0xf]
        %v4426 = vld [vmem:[%s4403 + $0x58] sm:$0xf]
        %v4427 = vld [vmem:[%s4403 + $0x5c] sm:$0xf]
        %v4428 = vld [vmem:[%s4403 + $0x60] sm:$0xf]
        %v4429 = vld [vmem:[%s4403 + $0x64] sm:$0xf]
        %v4430 = vld [vmem:[%s4403 + $0x68] sm:$0xf]
        %v4431 = vld [vmem:[%s4403 + $0x6c] sm:$0xf]
        %v4432 = vld [vmem:[%s4403 + $0x70] sm:$0xf]
        %v4433 = vld [vmem:[%s4403 + $0x74] sm:$0xf]
        %v4434 = vld [vmem:[%s4403 + $0x78] sm:$0xf]
        %v4435 = vld [vmem:[%s4403 + $0x7c] sm:$0xf]
        %v4436 = vld [vmem:[%s4403 + $0x80] sm:$0xf]
        %v4437 = vld [vmem:[%s4403 + $0x84] sm:$0xf]
        %v4438 = vld [vmem:[%s4403 + $0x88] sm:$0xf]
        %v4439 = vld [vmem:[%s4403 + $0x8c] sm:$0xf]
        %v4440 = vld [vmem:[%s4403 + $0x90] sm:$0xf]
        %v4441 = vld [vmem:[%s4403 + $0x94] sm:$0xf]
        %v4442 = vld [vmem:[%s4403 + $0x98] sm:$0xf]
        %v4443 = vld [vmem:[%s4403 + $0x9c] sm:$0xf]
        %v4444 = vld [vmem:[%s4403 + $0xa0] sm:$0xf]
        %v4445 = vld [vmem:[%s4403 + $0xa4] sm:$0xf]
        %v4446 = vld [vmem:[%s4403 + $0xa8] sm:$0xf]
        %v4447 = vld [vmem:[%s4403 + $0xac] sm:$0xf]
        %v4448 = vld [vmem:[%s4403 + $0xb0] sm:$0xf]
        %v4449 = vld [vmem:[%s4403 + $0xb4] sm:$0xf]
        %v4450 = vld [vmem:[%s4403 + $0xb8] sm:$0xf]
        %v4451 = vld [vmem:[%s4403 + $0xbc] sm:$0xf]
        %v4452 = vld [vmem:[%s4403 + $0xc0] sm:$0xf]
        %v4453 = vld [vmem:[%s4403 + $0xc4] sm:$0xf]
        %v4454 = vld [vmem:[%s4403 + $0xc8] sm:$0xf]
        %v4455 = vld [vmem:[%s4403 + $0xcc] sm:$0xf]
        %v4456 = vld [vmem:[%s4403 + $0xd0] sm:$0xf]
        %v4457 = vld [vmem:[%s4403 + $0xd4] sm:$0xf]
        %v4458 = vld [vmem:[%s4403 + $0xd8] sm:$0xf]
        %v4459 = vld [vmem:[%s4403 + $0xdc] sm:$0xf]
        %v4460 = vld [vmem:[%s4403 + $0xe0] sm:$0xf]
        %v4461 = vld [vmem:[%s4403 + $0xe4] sm:$0xf]
        %v4462 = vld [vmem:[%s4403 + $0xe8] sm:$0xf]
        %v4463 = vld [vmem:[%s4403 + $0xec] sm:$0xf]
        %v4464 = vld [vmem:[%s4403 + $0xf0] sm:$0xf]
        %v4465 = vld [vmem:[%s4403 + $0xf4] sm:$0xf]
        %v4466 = vld [vmem:[%s4403 + $0xf8] sm:$0xf]
        %v4467 = vld [vmem:[%s4403 + $0xfc] sm:$0xf]
        %v4468 = vrot.slane %v3011, 2
        %v4469 = vrot.slane %v3012, 2
        %v4470 = vrot.slane %v3013, 2
        %v4471 = vrot.slane %v3014, 2
        %v4540 = vunpack.c.l.b16 %v4404
        %v4541 = vunpack.c.l.b16 %v4405
        %v4542 = vunpack.c.l.b16 %v4406
        %v4543 = vunpack.c.l.b16 %v4407
        %v4544 = vunpack.c.l.b16 %v4408
        %v4545 = vunpack.c.l.b16 %v4409
        %v4546 = vunpack.c.l.b16 %v4410
        %v4547 = vunpack.c.l.b16 %v4411
        %v4548 = vunpack.c.l.b16 %v4412
        %v4549 = vunpack.c.l.b16 %v4413
        %v4550 = vunpack.c.l.b16 %v4414
        %v4551 = vunpack.c.l.b16 %v4415
        %v4552 = vunpack.c.l.b16 %v4416
        %v4553 = vunpack.c.l.b16 %v4417
        %v4554 = vunpack.c.l.b16 %v4418
        %v4555 = vunpack.c.l.b16 %v4419
        %v4556 = vunpack.c.l.b16 %v4420
        %v4557 = vunpack.c.l.b16 %v4421
        %v4558 = vunpack.c.l.b16 %v4422
        %v4559 = vunpack.c.l.b16 %v4423
        %v4560 = vunpack.c.l.b16 %v4424
        %v4561 = vunpack.c.l.b16 %v4425
        %v4562 = vunpack.c.l.b16 %v4426
        %v4563 = vunpack.c.l.b16 %v4427
        %v4564 = vunpack.c.l.b16 %v4428
        %v4565 = vunpack.c.l.b16 %v4429
        %v4566 = vunpack.c.l.b16 %v4430
        %v4567 = vunpack.c.l.b16 %v4431
        %v4568 = vunpack.c.l.b16 %v4432
        %v4569 = vunpack.c.l.b16 %v4433
        %v4570 = vunpack.c.l.b16 %v4434
        %v4571 = vunpack.c.l.b16 %v4435
        %v4572 = vunpack.c.l.b16 %v4436
        %v4573 = vunpack.c.l.b16 %v4437
        %v4574 = vunpack.c.l.b16 %v4438
        %v4575 = vunpack.c.l.b16 %v4439
        %v4576 = vunpack.c.l.b16 %v4440
        %v4577 = vunpack.c.l.b16 %v4441
        %v4578 = vunpack.c.l.b16 %v4442
        %v4579 = vunpack.c.l.b16 %v4443
        %v4580 = vunpack.c.l.b16 %v4444
        %v4581 = vunpack.c.l.b16 %v4445
        %v4582 = vunpack.c.l.b16 %v4446
        %v4583 = vunpack.c.l.b16 %v4447
        %v4584 = vunpack.c.l.b16 %v4448
        %v4585 = vunpack.c.l.b16 %v4449
        %v4586 = vunpack.c.l.b16 %v4450
        %v4587 = vunpack.c.l.b16 %v4451
        %v4588 = vunpack.c.l.b16 %v4452
        %v4589 = vunpack.c.l.b16 %v4453
        %v4590 = vunpack.c.l.b16 %v4454
        %v4591 = vunpack.c.l.b16 %v4455
        %v4592 = vunpack.c.l.b16 %v4456
        %v4593 = vunpack.c.l.b16 %v4457
        %v4594 = vunpack.c.l.b16 %v4458
        %v4595 = vunpack.c.l.b16 %v4459
        %v4596 = vunpack.c.l.b16 %v4460
        %v4597 = vunpack.c.l.b16 %v4461
        %v4598 = vunpack.c.l.b16 %v4462
        %v4599 = vunpack.c.l.b16 %v4463
        %v4600 = vunpack.c.l.b16 %v4464
        %v4601 = vunpack.c.l.b16 %v4465
        %v4602 = vunpack.c.l.b16 %v4466
        %v4603 = vunpack.c.l.b16 %v4467
        %v4604 = vpack.c.b16 %v4541, %v4540
        %v4605 = vpack.c.b16 %v4543, %v4542
        %v4606 = vpack.c.b16 %v4545, %v4544
        %v4607 = vpack.c.b16 %v4547, %v4546
        %v4608 = vpack.c.b16 %v4549, %v4548
        %v4609 = vpack.c.b16 %v4551, %v4550
        %v4610 = vpack.c.b16 %v4553, %v4552
        %v4611 = vpack.c.b16 %v4555, %v4554
        %v4612 = vpack.c.b16 %v4557, %v4556
        %v4613 = vpack.c.b16 %v4559, %v4558
        %v4614 = vpack.c.b16 %v4561, %v4560
        %v4615 = vpack.c.b16 %v4563, %v4562
        %v4616 = vpack.c.b16 %v4565, %v4564
        %v4617 = vpack.c.b16 %v4567, %v4566
        %v4618 = vpack.c.b16 %v4569, %v4568
        %v4619 = vpack.c.b16 %v4571, %v4570
        %v4620 = vpack.c.b16 %v4573, %v4572
        %v4621 = vpack.c.b16 %v4575, %v4574
        %v4622 = vpack.c.b16 %v4577, %v4576
        %v4623 = vpack.c.b16 %v4579, %v4578
        %v4624 = vpack.c.b16 %v4581, %v4580
        %v4625 = vpack.c.b16 %v4583, %v4582
        %v4626 = vpack.c.b16 %v4585, %v4584
        %v4627 = vpack.c.b16 %v4587, %v4586
        %v4628 = vpack.c.b16 %v4589, %v4588
        %v4629 = vpack.c.b16 %v4591, %v4590
        %v4630 = vpack.c.b16 %v4593, %v4592
        %v4631 = vpack.c.b16 %v4595, %v4594
        %v4632 = vpack.c.b16 %v4597, %v4596
        %v4633 = vpack.c.b16 %v4599, %v4598
        %v4634 = vpack.c.b16 %v4601, %v4600
        %v4635 = vpack.c.b16 %v4603, %v4602
        %4668 = vmatprep.subr.bf16.mxu0 0
        %4669 = vmatpush1.bf16.msra.mxu0 %v4611
        %4670 = vmatprep.subr.bf16.mxu0 0
        %4671 = vmatpush1.bf16.msra.mxu0 %v4610
        %4672 = vmatprep.subr.bf16.mxu0 0
        %4673 = vmatpush1.bf16.msra.mxu0 %v4609
        %4674 = vmatprep.subr.bf16.mxu0 0
        %4675 = vmatpush1.bf16.msra.mxu0 %v4608
        %4676 = vmatprep.subr.bf16.mxu0 0
        %4677 = vmatpush1.bf16.msra.mxu0 %v4607
        %4678 = vmatprep.subr.bf16.mxu0 0
        %4679 = vmatpush1.bf16.msra.mxu0 %v4606
        %4680 = vmatprep.subr.bf16.mxu0 0
        %4681 = vmatpush1.bf16.msra.mxu0 %v4605
        %4682 = vmatprep.subr.bf16.mxu0 0
        %4683 = vmatpush1.bf16.msra.mxu0 %v4604
        %4684 = vmatprep.subr.bf16.mxu0 0
        %4685 = vmatpush2.bf16.msra.mxu0 %v4619
        %4686 = vmatprep.subr.bf16.mxu0 0
        %4687 = vmatpush2.bf16.msra.mxu0 %v4618
        %4688 = vmatprep.subr.bf16.mxu0 0
        %4689 = vmatpush2.bf16.msra.mxu0 %v4617
        %4690 = vmatprep.subr.bf16.mxu0 0
        %4691 = vmatpush2.bf16.msra.mxu0 %v4616
        %4692 = vmatprep.subr.bf16.mxu0 0
        %4693 = vmatpush2.bf16.msra.mxu0 %v4615
        %4694 = vmatprep.subr.bf16.mxu0 0
        %4695 = vmatpush2.bf16.msra.mxu0 %v4614
        %4696 = vmatprep.subr.bf16.mxu0 0
        %4697 = vmatpush2.bf16.msra.mxu0 %v4613
        %4698 = vmatprep.subr.bf16.mxu0 0
        %4699 = vmatpush2.bf16.msra.mxu0 %v4612
        %4700 = vmatprep.mubr.bf16.mxu0 %v4469
        %4701 = vmatmul.mubr.bf16.gmra.mxu0 %v4468
        %v4702 = vpop.f32.mrf.mxu0
        %v4703 = vadd.f32 0.0, %v4702
        %v4704 = vpop.f32.mrf.mxu0
        %v4705 = vpop.f32.mrf.mxu0
        %v4706 = vpop.f32.mrf.mxu0
        %4707 = vdwg.mxu0
        %4708 = vmatprep.subr.bf16.mxu0 0
        %4709 = vmatpush1.bf16.msra.mxu0 %v4627
        %4710 = vmatprep.subr.bf16.mxu0 0
        %4711 = vmatpush1.bf16.msra.mxu0 %v4626
        %4712 = vmatprep.subr.bf16.mxu0 0
        %4713 = vmatpush1.bf16.msra.mxu0 %v4625
        %4714 = vmatprep.subr.bf16.mxu0 0
        %4715 = vmatpush1.bf16.msra.mxu0 %v4624
        %4716 = vmatprep.subr.bf16.mxu0 0
        %4717 = vmatpush1.bf16.msra.mxu0 %v4623
        %4718 = vmatprep.subr.bf16.mxu0 0
        %4719 = vmatpush1.bf16.msra.mxu0 %v4622
        %4720 = vmatprep.subr.bf16.mxu0 0
        %4721 = vmatpush1.bf16.msra.mxu0 %v4621
        %4722 = vmatprep.subr.bf16.mxu0 0
        %4723 = vmatpush1.bf16.msra.mxu0 %v4620
        %4724 = vmatprep.subr.bf16.mxu0 0
        %4725 = vmatpush2.bf16.msra.mxu0 %v4635
        %4726 = vmatprep.subr.bf16.mxu0 0
        %4727 = vmatpush2.bf16.msra.mxu0 %v4634
        %4728 = vmatprep.subr.bf16.mxu0 0
        %4729 = vmatpush2.bf16.msra.mxu0 %v4633
        %4730 = vmatprep.subr.bf16.mxu0 0
        %4731 = vmatpush2.bf16.msra.mxu0 %v4632
        %4732 = vmatprep.subr.bf16.mxu0 0
        %4733 = vmatpush2.bf16.msra.mxu0 %v4631
        %4734 = vmatprep.subr.bf16.mxu0 0
        %4735 = vmatpush2.bf16.msra.mxu0 %v4630
        %4736 = vmatprep.subr.bf16.mxu0 0
        %4737 = vmatpush2.bf16.msra.mxu0 %v4629
        %4738 = vmatprep.subr.bf16.mxu0 0
        %4739 = vmatpush2.bf16.msra.mxu0 %v4628
        %4740 = vmatprep.mubr.bf16.mxu0 %v4471
        %4741 = vmatmul.mubr.bf16.gmra.mxu0 %v4470
        %v4742 = vpop.f32.mrf.mxu0
        %v4743 = vadd.f32 %v4703, %v4742
        %v4744 = vpop.f32.mrf.mxu0
        %v4745 = vpop.f32.mrf.mxu0
        %v4746 = vpop.f32.mrf.mxu0
        %4747 = vdwg.mxu0
        %v4748 = vadd.f32 %v4402, %v4743
        %s4749 = scalar_lea.vmem %s8, 1280
        %v4750 = vld [vmem:[%s4749] sm:$0xf]
        %v4751 = vld [vmem:[%s4749 + $0x4] sm:$0xf]
        %v4752 = vld [vmem:[%s4749 + $0x8] sm:$0xf]
        %v4753 = vld [vmem:[%s4749 + $0xc] sm:$0xf]
        %v4754 = vld [vmem:[%s4749 + $0x10] sm:$0xf]
        %v4755 = vld [vmem:[%s4749 + $0x14] sm:$0xf]
        %v4756 = vld [vmem:[%s4749 + $0x18] sm:$0xf]
        %v4757 = vld [vmem:[%s4749 + $0x1c] sm:$0xf]
        %v4758 = vld [vmem:[%s4749 + $0x20] sm:$0xf]
        %v4759 = vld [vmem:[%s4749 + $0x24] sm:$0xf]
        %v4760 = vld [vmem:[%s4749 + $0x28] sm:$0xf]
        %v4761 = vld [vmem:[%s4749 + $0x2c] sm:$0xf]
        %v4762 = vld [vmem:[%s4749 + $0x30] sm:$0xf]
        %v4763 = vld [vmem:[%s4749 + $0x34] sm:$0xf]
        %v4764 = vld [vmem:[%s4749 + $0x38] sm:$0xf]
        %v4765 = vld [vmem:[%s4749 + $0x3c] sm:$0xf]
        %v4766 = vld [vmem:[%s4749 + $0x40] sm:$0xf]
        %v4767 = vld [vmem:[%s4749 + $0x44] sm:$0xf]
        %v4768 = vld [vmem:[%s4749 + $0x48] sm:$0xf]
        %v4769 = vld [vmem:[%s4749 + $0x4c] sm:$0xf]
        %v4770 = vld [vmem:[%s4749 + $0x50] sm:$0xf]
        %v4771 = vld [vmem:[%s4749 + $0x54] sm:$0xf]
        %v4772 = vld [vmem:[%s4749 + $0x58] sm:$0xf]
        %v4773 = vld [vmem:[%s4749 + $0x5c] sm:$0xf]
        %v4774 = vld [vmem:[%s4749 + $0x60] sm:$0xf]
        %v4775 = vld [vmem:[%s4749 + $0x64] sm:$0xf]
        %v4776 = vld [vmem:[%s4749 + $0x68] sm:$0xf]
        %v4777 = vld [vmem:[%s4749 + $0x6c] sm:$0xf]
        %v4778 = vld [vmem:[%s4749 + $0x70] sm:$0xf]
        %v4779 = vld [vmem:[%s4749 + $0x74] sm:$0xf]
        %v4780 = vld [vmem:[%s4749 + $0x78] sm:$0xf]
        %v4781 = vld [vmem:[%s4749 + $0x7c] sm:$0xf]
        %v4782 = vld [vmem:[%s4749 + $0x80] sm:$0xf]
        %v4783 = vld [vmem:[%s4749 + $0x84] sm:$0xf]
        %v4784 = vld [vmem:[%s4749 + $0x88] sm:$0xf]
        %v4785 = vld [vmem:[%s4749 + $0x8c] sm:$0xf]
        %v4786 = vld [vmem:[%s4749 + $0x90] sm:$0xf]
        %v4787 = vld [vmem:[%s4749 + $0x94] sm:$0xf]
        %v4788 = vld [vmem:[%s4749 + $0x98] sm:$0xf]
        %v4789 = vld [vmem:[%s4749 + $0x9c] sm:$0xf]
        %v4790 = vld [vmem:[%s4749 + $0xa0] sm:$0xf]
        %v4791 = vld [vmem:[%s4749 + $0xa4] sm:$0xf]
        %v4792 = vld [vmem:[%s4749 + $0xa8] sm:$0xf]
        %v4793 = vld [vmem:[%s4749 + $0xac] sm:$0xf]
        %v4794 = vld [vmem:[%s4749 + $0xb0] sm:$0xf]
        %v4795 = vld [vmem:[%s4749 + $0xb4] sm:$0xf]
        %v4796 = vld [vmem:[%s4749 + $0xb8] sm:$0xf]
        %v4797 = vld [vmem:[%s4749 + $0xbc] sm:$0xf]
        %v4798 = vld [vmem:[%s4749 + $0xc0] sm:$0xf]
        %v4799 = vld [vmem:[%s4749 + $0xc4] sm:$0xf]
        %v4800 = vld [vmem:[%s4749 + $0xc8] sm:$0xf]
        %v4801 = vld [vmem:[%s4749 + $0xcc] sm:$0xf]
        %v4802 = vld [vmem:[%s4749 + $0xd0] sm:$0xf]
        %v4803 = vld [vmem:[%s4749 + $0xd4] sm:$0xf]
        %v4804 = vld [vmem:[%s4749 + $0xd8] sm:$0xf]
        %v4805 = vld [vmem:[%s4749 + $0xdc] sm:$0xf]
        %v4806 = vld [vmem:[%s4749 + $0xe0] sm:$0xf]
        %v4807 = vld [vmem:[%s4749 + $0xe4] sm:$0xf]
        %v4808 = vld [vmem:[%s4749 + $0xe8] sm:$0xf]
        %v4809 = vld [vmem:[%s4749 + $0xec] sm:$0xf]
        %v4810 = vld [vmem:[%s4749 + $0xf0] sm:$0xf]
        %v4811 = vld [vmem:[%s4749 + $0xf4] sm:$0xf]
        %v4812 = vld [vmem:[%s4749 + $0xf8] sm:$0xf]
        %v4813 = vld [vmem:[%s4749 + $0xfc] sm:$0xf]
        %v4814 = vrot.slane %v3419, 2
        %v4815 = vrot.slane %v3422, 2
        %v4816 = vrot.slane %v3425, 2
        %v4817 = vrot.slane %v3428, 2
        %v4886 = vunpack.c.l.b16 %v4750
        %v4887 = vunpack.c.l.b16 %v4751
        %v4888 = vunpack.c.l.b16 %v4752
        %v4889 = vunpack.c.l.b16 %v4753
        %v4890 = vunpack.c.l.b16 %v4754
        %v4891 = vunpack.c.l.b16 %v4755
        %v4892 = vunpack.c.l.b16 %v4756
        %v4893 = vunpack.c.l.b16 %v4757
        %v4894 = vunpack.c.l.b16 %v4758
        %v4895 = vunpack.c.l.b16 %v4759
        %v4896 = vunpack.c.l.b16 %v4760
        %v4897 = vunpack.c.l.b16 %v4761
        %v4898 = vunpack.c.l.b16 %v4762
        %v4899 = vunpack.c.l.b16 %v4763
        %v4900 = vunpack.c.l.b16 %v4764
        %v4901 = vunpack.c.l.b16 %v4765
        %v4902 = vunpack.c.l.b16 %v4766
        %v4903 = vunpack.c.l.b16 %v4767
        %v4904 = vunpack.c.l.b16 %v4768
        %v4905 = vunpack.c.l.b16 %v4769
        %v4906 = vunpack.c.l.b16 %v4770
        %v4907 = vunpack.c.l.b16 %v4771
        %v4908 = vunpack.c.l.b16 %v4772
        %v4909 = vunpack.c.l.b16 %v4773
        %v4910 = vunpack.c.l.b16 %v4774
        %v4911 = vunpack.c.l.b16 %v4775
        %v4912 = vunpack.c.l.b16 %v4776
        %v4913 = vunpack.c.l.b16 %v4777
        %v4914 = vunpack.c.l.b16 %v4778
        %v4915 = vunpack.c.l.b16 %v4779
        %v4916 = vunpack.c.l.b16 %v4780
        %v4917 = vunpack.c.l.b16 %v4781
        %v4918 = vunpack.c.l.b16 %v4782
        %v4919 = vunpack.c.l.b16 %v4783
        %v4920 = vunpack.c.l.b16 %v4784
        %v4921 = vunpack.c.l.b16 %v4785
        %v4922 = vunpack.c.l.b16 %v4786
        %v4923 = vunpack.c.l.b16 %v4787
        %v4924 = vunpack.c.l.b16 %v4788
        %v4925 = vunpack.c.l.b16 %v4789
        %v4926 = vunpack.c.l.b16 %v4790
        %v4927 = vunpack.c.l.b16 %v4791
        %v4928 = vunpack.c.l.b16 %v4792
        %v4929 = vunpack.c.l.b16 %v4793
        %v4930 = vunpack.c.l.b16 %v4794
        %v4931 = vunpack.c.l.b16 %v4795
        %v4932 = vunpack.c.l.b16 %v4796
        %v4933 = vunpack.c.l.b16 %v4797
        %v4934 = vunpack.c.l.b16 %v4798
        %v4935 = vunpack.c.l.b16 %v4799
        %v4936 = vunpack.c.l.b16 %v4800
        %v4937 = vunpack.c.l.b16 %v4801
        %v4938 = vunpack.c.l.b16 %v4802
        %v4939 = vunpack.c.l.b16 %v4803
        %v4940 = vunpack.c.l.b16 %v4804
        %v4941 = vunpack.c.l.b16 %v4805
        %v4942 = vunpack.c.l.b16 %v4806
        %v4943 = vunpack.c.l.b16 %v4807
        %v4944 = vunpack.c.l.b16 %v4808
        %v4945 = vunpack.c.l.b16 %v4809
        %v4946 = vunpack.c.l.b16 %v4810
        %v4947 = vunpack.c.l.b16 %v4811
        %v4948 = vunpack.c.l.b16 %v4812
        %v4949 = vunpack.c.l.b16 %v4813
        %v4950 = vpack.c.b16 %v4887, %v4886
        %v4951 = vpack.c.b16 %v4889, %v4888
        %v4952 = vpack.c.b16 %v4891, %v4890
        %v4953 = vpack.c.b16 %v4893, %v4892
        %v4954 = vpack.c.b16 %v4895, %v4894
        %v4955 = vpack.c.b16 %v4897, %v4896
        %v4956 = vpack.c.b16 %v4899, %v4898
        %v4957 = vpack.c.b16 %v4901, %v4900
        %v4958 = vpack.c.b16 %v4903, %v4902
        %v4959 = vpack.c.b16 %v4905, %v4904
        %v4960 = vpack.c.b16 %v4907, %v4906
        %v4961 = vpack.c.b16 %v4909, %v4908
        %v4962 = vpack.c.b16 %v4911, %v4910
        %v4963 = vpack.c.b16 %v4913, %v4912
        %v4964 = vpack.c.b16 %v4915, %v4914
        %v4965 = vpack.c.b16 %v4917, %v4916
        %v4966 = vpack.c.b16 %v4919, %v4918
        %v4967 = vpack.c.b16 %v4921, %v4920
        %v4968 = vpack.c.b16 %v4923, %v4922
        %v4969 = vpack.c.b16 %v4925, %v4924
        %v4970 = vpack.c.b16 %v4927, %v4926
        %v4971 = vpack.c.b16 %v4929, %v4928
        %v4972 = vpack.c.b16 %v4931, %v4930
        %v4973 = vpack.c.b16 %v4933, %v4932
        %v4974 = vpack.c.b16 %v4935, %v4934
        %v4975 = vpack.c.b16 %v4937, %v4936
        %v4976 = vpack.c.b16 %v4939, %v4938
        %v4977 = vpack.c.b16 %v4941, %v4940
        %v4978 = vpack.c.b16 %v4943, %v4942
        %v4979 = vpack.c.b16 %v4945, %v4944
        %v4980 = vpack.c.b16 %v4947, %v4946
        %v4981 = vpack.c.b16 %v4949, %v4948
        %5014 = vmatprep.subr.bf16.mxu0 0
        %5015 = vmatpush1.bf16.msra.mxu0 %v4957
        %5016 = vmatprep.subr.bf16.mxu0 0
        %5017 = vmatpush1.bf16.msra.mxu0 %v4956
        %5018 = vmatprep.subr.bf16.mxu0 0
        %5019 = vmatpush1.bf16.msra.mxu0 %v4955
        %5020 = vmatprep.subr.bf16.mxu0 0
        %5021 = vmatpush1.bf16.msra.mxu0 %v4954
        %5022 = vmatprep.subr.bf16.mxu0 0
        %5023 = vmatpush1.bf16.msra.mxu0 %v4953
        %5024 = vmatprep.subr.bf16.mxu0 0
        %5025 = vmatpush1.bf16.msra.mxu0 %v4952
        %5026 = vmatprep.subr.bf16.mxu0 0
        %5027 = vmatpush1.bf16.msra.mxu0 %v4951
        %5028 = vmatprep.subr.bf16.mxu0 0
        %5029 = vmatpush1.bf16.msra.mxu0 %v4950
        %5030 = vmatprep.subr.bf16.mxu0 0
        %5031 = vmatpush2.bf16.msra.mxu0 %v4965
        %5032 = vmatprep.subr.bf16.mxu0 0
        %5033 = vmatpush2.bf16.msra.mxu0 %v4964
        %5034 = vmatprep.subr.bf16.mxu0 0
        %5035 = vmatpush2.bf16.msra.mxu0 %v4963
        %5036 = vmatprep.subr.bf16.mxu0 0
        %5037 = vmatpush2.bf16.msra.mxu0 %v4962
        %5038 = vmatprep.subr.bf16.mxu0 0
        %5039 = vmatpush2.bf16.msra.mxu0 %v4961
        %5040 = vmatprep.subr.bf16.mxu0 0
        %5041 = vmatpush2.bf16.msra.mxu0 %v4960
        %5042 = vmatprep.subr.bf16.mxu0 0
        %5043 = vmatpush2.bf16.msra.mxu0 %v4959
        %5044 = vmatprep.subr.bf16.mxu0 0
        %5045 = vmatpush2.bf16.msra.mxu0 %v4958
        %5046 = vmatprep.mubr.bf16.mxu0 %v4815
        %5047 = vmatmul.mubr.bf16.gmra.mxu0 %v4814
        %v5048 = vpop.f32.mrf.mxu0
        %v5049 = vadd.f32 0.0, %v5048
        %v5050 = vpop.f32.mrf.mxu0
        %v5051 = vpop.f32.mrf.mxu0
        %v5052 = vpop.f32.mrf.mxu0
        %5053 = vdwg.mxu0
        %5054 = vmatprep.subr.bf16.mxu0 0
        %5055 = vmatpush1.bf16.msra.mxu0 %v4973
        %5056 = vmatprep.subr.bf16.mxu0 0
        %5057 = vmatpush1.bf16.msra.mxu0 %v4972
        %5058 = vmatprep.subr.bf16.mxu0 0
        %5059 = vmatpush1.bf16.msra.mxu0 %v4971
        %5060 = vmatprep.subr.bf16.mxu0 0
        %5061 = vmatpush1.bf16.msra.mxu0 %v4970
        %5062 = vmatprep.subr.bf16.mxu0 0
        %5063 = vmatpush1.bf16.msra.mxu0 %v4969
        %5064 = vmatprep.subr.bf16.mxu0 0
        %5065 = vmatpush1.bf16.msra.mxu0 %v4968
        %5066 = vmatprep.subr.bf16.mxu0 0
        %5067 = vmatpush1.bf16.msra.mxu0 %v4967
        %5068 = vmatprep.subr.bf16.mxu0 0
        %5069 = vmatpush1.bf16.msra.mxu0 %v4966
        %5070 = vmatprep.subr.bf16.mxu0 0
        %5071 = vmatpush2.bf16.msra.mxu0 %v4981
        %5072 = vmatprep.subr.bf16.mxu0 0
        %5073 = vmatpush2.bf16.msra.mxu0 %v4980
        %5074 = vmatprep.subr.bf16.mxu0 0
        %5075 = vmatpush2.bf16.msra.mxu0 %v4979
        %5076 = vmatprep.subr.bf16.mxu0 0
        %5077 = vmatpush2.bf16.msra.mxu0 %v4978
        %5078 = vmatprep.subr.bf16.mxu0 0
        %5079 = vmatpush2.bf16.msra.mxu0 %v4977
        %5080 = vmatprep.subr.bf16.mxu0 0
        %5081 = vmatpush2.bf16.msra.mxu0 %v4976
        %5082 = vmatprep.subr.bf16.mxu0 0
        %5083 = vmatpush2.bf16.msra.mxu0 %v4975
        %5084 = vmatprep.subr.bf16.mxu0 0
        %5085 = vmatpush2.bf16.msra.mxu0 %v4974
        %5086 = vmatprep.mubr.bf16.mxu0 %v4817
        %5087 = vmatmul.mubr.bf16.gmra.mxu0 %v4816
        %v5088 = vpop.f32.mrf.mxu0
        %v5089 = vadd.f32 %v5049, %v5088
        %v5090 = vpop.f32.mrf.mxu0
        %v5091 = vpop.f32.mrf.mxu0
        %v5092 = vpop.f32.mrf.mxu0
        %5093 = vdwg.mxu0
        %v5094 = vadd.f32 %v4748, %v5089
        %s5095 = scalar_lea.vmem %s8, 1536
        %v5096 = vld [vmem:[%s5095] sm:$0xf]
        %v5097 = vld [vmem:[%s5095 + $0x4] sm:$0xf]
        %v5098 = vld [vmem:[%s5095 + $0x8] sm:$0xf]
        %v5099 = vld [vmem:[%s5095 + $0xc] sm:$0xf]
        %v5100 = vld [vmem:[%s5095 + $0x10] sm:$0xf]
        %v5101 = vld [vmem:[%s5095 + $0x14] sm:$0xf]
        %v5102 = vld [vmem:[%s5095 + $0x18] sm:$0xf]
        %v5103 = vld [vmem:[%s5095 + $0x1c] sm:$0xf]
        %v5104 = vld [vmem:[%s5095 + $0x20] sm:$0xf]
        %v5105 = vld [vmem:[%s5095 + $0x24] sm:$0xf]
        %v5106 = vld [vmem:[%s5095 + $0x28] sm:$0xf]
        %v5107 = vld [vmem:[%s5095 + $0x2c] sm:$0xf]
        %v5108 = vld [vmem:[%s5095 + $0x30] sm:$0xf]
        %v5109 = vld [vmem:[%s5095 + $0x34] sm:$0xf]
        %v5110 = vld [vmem:[%s5095 + $0x38] sm:$0xf]
        %v5111 = vld [vmem:[%s5095 + $0x3c] sm:$0xf]
        %v5112 = vld [vmem:[%s5095 + $0x40] sm:$0xf]
        %v5113 = vld [vmem:[%s5095 + $0x44] sm:$0xf]
        %v5114 = vld [vmem:[%s5095 + $0x48] sm:$0xf]
        %v5115 = vld [vmem:[%s5095 + $0x4c] sm:$0xf]
        %v5116 = vld [vmem:[%s5095 + $0x50] sm:$0xf]
        %v5117 = vld [vmem:[%s5095 + $0x54] sm:$0xf]
        %v5118 = vld [vmem:[%s5095 + $0x58] sm:$0xf]
        %v5119 = vld [vmem:[%s5095 + $0x5c] sm:$0xf]
        %v5120 = vld [vmem:[%s5095 + $0x60] sm:$0xf]
        %v5121 = vld [vmem:[%s5095 + $0x64] sm:$0xf]
        %v5122 = vld [vmem:[%s5095 + $0x68] sm:$0xf]
        %v5123 = vld [vmem:[%s5095 + $0x6c] sm:$0xf]
        %v5124 = vld [vmem:[%s5095 + $0x70] sm:$0xf]
        %v5125 = vld [vmem:[%s5095 + $0x74] sm:$0xf]
        %v5126 = vld [vmem:[%s5095 + $0x78] sm:$0xf]
        %v5127 = vld [vmem:[%s5095 + $0x7c] sm:$0xf]
        %v5128 = vld [vmem:[%s5095 + $0x80] sm:$0xf]
        %v5129 = vld [vmem:[%s5095 + $0x84] sm:$0xf]
        %v5130 = vld [vmem:[%s5095 + $0x88] sm:$0xf]
        %v5131 = vld [vmem:[%s5095 + $0x8c] sm:$0xf]
        %v5132 = vld [vmem:[%s5095 + $0x90] sm:$0xf]
        %v5133 = vld [vmem:[%s5095 + $0x94] sm:$0xf]
        %v5134 = vld [vmem:[%s5095 + $0x98] sm:$0xf]
        %v5135 = vld [vmem:[%s5095 + $0x9c] sm:$0xf]
        %v5136 = vld [vmem:[%s5095 + $0xa0] sm:$0xf]
        %v5137 = vld [vmem:[%s5095 + $0xa4] sm:$0xf]
        %v5138 = vld [vmem:[%s5095 + $0xa8] sm:$0xf]
        %v5139 = vld [vmem:[%s5095 + $0xac] sm:$0xf]
        %v5140 = vld [vmem:[%s5095 + $0xb0] sm:$0xf]
        %v5141 = vld [vmem:[%s5095 + $0xb4] sm:$0xf]
        %v5142 = vld [vmem:[%s5095 + $0xb8] sm:$0xf]
        %v5143 = vld [vmem:[%s5095 + $0xbc] sm:$0xf]
        %v5144 = vld [vmem:[%s5095 + $0xc0] sm:$0xf]
        %v5145 = vld [vmem:[%s5095 + $0xc4] sm:$0xf]
        %v5146 = vld [vmem:[%s5095 + $0xc8] sm:$0xf]
        %v5147 = vld [vmem:[%s5095 + $0xcc] sm:$0xf]
        %v5148 = vld [vmem:[%s5095 + $0xd0] sm:$0xf]
        %v5149 = vld [vmem:[%s5095 + $0xd4] sm:$0xf]
        %v5150 = vld [vmem:[%s5095 + $0xd8] sm:$0xf]
        %v5151 = vld [vmem:[%s5095 + $0xdc] sm:$0xf]
        %v5152 = vld [vmem:[%s5095 + $0xe0] sm:$0xf]
        %v5153 = vld [vmem:[%s5095 + $0xe4] sm:$0xf]
        %v5154 = vld [vmem:[%s5095 + $0xe8] sm:$0xf]
        %v5155 = vld [vmem:[%s5095 + $0xec] sm:$0xf]
        %v5156 = vld [vmem:[%s5095 + $0xf0] sm:$0xf]
        %v5157 = vld [vmem:[%s5095 + $0xf4] sm:$0xf]
        %v5158 = vld [vmem:[%s5095 + $0xf8] sm:$0xf]
        %v5159 = vld [vmem:[%s5095 + $0xfc] sm:$0xf]
        %v5160 = vrot.slane %v3011, 3
        %v5161 = vrot.slane %v3012, 3
        %v5162 = vrot.slane %v3013, 3
        %v5163 = vrot.slane %v3014, 3
        %v5232 = vunpack.c.l.b16 %v5096
        %v5233 = vunpack.c.l.b16 %v5097
        %v5234 = vunpack.c.l.b16 %v5098
        %v5235 = vunpack.c.l.b16 %v5099
        %v5236 = vunpack.c.l.b16 %v5100
        %v5237 = vunpack.c.l.b16 %v5101
        %v5238 = vunpack.c.l.b16 %v5102
        %v5239 = vunpack.c.l.b16 %v5103
        %v5240 = vunpack.c.l.b16 %v5104
        %v5241 = vunpack.c.l.b16 %v5105
        %v5242 = vunpack.c.l.b16 %v5106
        %v5243 = vunpack.c.l.b16 %v5107
        %v5244 = vunpack.c.l.b16 %v5108
        %v5245 = vunpack.c.l.b16 %v5109
        %v5246 = vunpack.c.l.b16 %v5110
        %v5247 = vunpack.c.l.b16 %v5111
        %v5248 = vunpack.c.l.b16 %v5112
        %v5249 = vunpack.c.l.b16 %v5113
        %v5250 = vunpack.c.l.b16 %v5114
        %v5251 = vunpack.c.l.b16 %v5115
        %v5252 = vunpack.c.l.b16 %v5116
        %v5253 = vunpack.c.l.b16 %v5117
        %v5254 = vunpack.c.l.b16 %v5118
        %v5255 = vunpack.c.l.b16 %v5119
        %v5256 = vunpack.c.l.b16 %v5120
        %v5257 = vunpack.c.l.b16 %v5121
        %v5258 = vunpack.c.l.b16 %v5122
        %v5259 = vunpack.c.l.b16 %v5123
        %v5260 = vunpack.c.l.b16 %v5124
        %v5261 = vunpack.c.l.b16 %v5125
        %v5262 = vunpack.c.l.b16 %v5126
        %v5263 = vunpack.c.l.b16 %v5127
        %v5264 = vunpack.c.l.b16 %v5128
        %v5265 = vunpack.c.l.b16 %v5129
        %v5266 = vunpack.c.l.b16 %v5130
        %v5267 = vunpack.c.l.b16 %v5131
        %v5268 = vunpack.c.l.b16 %v5132
        %v5269 = vunpack.c.l.b16 %v5133
        %v5270 = vunpack.c.l.b16 %v5134
        %v5271 = vunpack.c.l.b16 %v5135
        %v5272 = vunpack.c.l.b16 %v5136
        %v5273 = vunpack.c.l.b16 %v5137
        %v5274 = vunpack.c.l.b16 %v5138
        %v5275 = vunpack.c.l.b16 %v5139
        %v5276 = vunpack.c.l.b16 %v5140
        %v5277 = vunpack.c.l.b16 %v5141
        %v5278 = vunpack.c.l.b16 %v5142
        %v5279 = vunpack.c.l.b16 %v5143
        %v5280 = vunpack.c.l.b16 %v5144
        %v5281 = vunpack.c.l.b16 %v5145
        %v5282 = vunpack.c.l.b16 %v5146
        %v5283 = vunpack.c.l.b16 %v5147
        %v5284 = vunpack.c.l.b16 %v5148
        %v5285 = vunpack.c.l.b16 %v5149
        %v5286 = vunpack.c.l.b16 %v5150
        %v5287 = vunpack.c.l.b16 %v5151
        %v5288 = vunpack.c.l.b16 %v5152
        %v5289 = vunpack.c.l.b16 %v5153
        %v5290 = vunpack.c.l.b16 %v5154
        %v5291 = vunpack.c.l.b16 %v5155
        %v5292 = vunpack.c.l.b16 %v5156
        %v5293 = vunpack.c.l.b16 %v5157
        %v5294 = vunpack.c.l.b16 %v5158
        %v5295 = vunpack.c.l.b16 %v5159
        %v5296 = vpack.c.b16 %v5233, %v5232
        %v5297 = vpack.c.b16 %v5235, %v5234
        %v5298 = vpack.c.b16 %v5237, %v5236
        %v5299 = vpack.c.b16 %v5239, %v5238
        %v5300 = vpack.c.b16 %v5241, %v5240
        %v5301 = vpack.c.b16 %v5243, %v5242
        %v5302 = vpack.c.b16 %v5245, %v5244
        %v5303 = vpack.c.b16 %v5247, %v5246
        %v5304 = vpack.c.b16 %v5249, %v5248
        %v5305 = vpack.c.b16 %v5251, %v5250
        %v5306 = vpack.c.b16 %v5253, %v5252
        %v5307 = vpack.c.b16 %v5255, %v5254
        %v5308 = vpack.c.b16 %v5257, %v5256
        %v5309 = vpack.c.b16 %v5259, %v5258
        %v5310 = vpack.c.b16 %v5261, %v5260
        %v5311 = vpack.c.b16 %v5263, %v5262
        %v5312 = vpack.c.b16 %v5265, %v5264
        %v5313 = vpack.c.b16 %v5267, %v5266
        %v5314 = vpack.c.b16 %v5269, %v5268
        %v5315 = vpack.c.b16 %v5271, %v5270
        %v5316 = vpack.c.b16 %v5273, %v5272
        %v5317 = vpack.c.b16 %v5275, %v5274
        %v5318 = vpack.c.b16 %v5277, %v5276
        %v5319 = vpack.c.b16 %v5279, %v5278
        %v5320 = vpack.c.b16 %v5281, %v5280
        %v5321 = vpack.c.b16 %v5283, %v5282
        %v5322 = vpack.c.b16 %v5285, %v5284
        %v5323 = vpack.c.b16 %v5287, %v5286
        %v5324 = vpack.c.b16 %v5289, %v5288
        %v5325 = vpack.c.b16 %v5291, %v5290
        %v5326 = vpack.c.b16 %v5293, %v5292
        %v5327 = vpack.c.b16 %v5295, %v5294
        %5360 = vmatprep.subr.bf16.mxu0 0
        %5361 = vmatpush1.bf16.msra.mxu0 %v5303
        %5362 = vmatprep.subr.bf16.mxu0 0
        %5363 = vmatpush1.bf16.msra.mxu0 %v5302
        %5364 = vmatprep.subr.bf16.mxu0 0
        %5365 = vmatpush1.bf16.msra.mxu0 %v5301
        %5366 = vmatprep.subr.bf16.mxu0 0
        %5367 = vmatpush1.bf16.msra.mxu0 %v5300
        %5368 = vmatprep.subr.bf16.mxu0 0
        %5369 = vmatpush1.bf16.msra.mxu0 %v5299
        %5370 = vmatprep.subr.bf16.mxu0 0
        %5371 = vmatpush1.bf16.msra.mxu0 %v5298
        %5372 = vmatprep.subr.bf16.mxu0 0
        %5373 = vmatpush1.bf16.msra.mxu0 %v5297
        %5374 = vmatprep.subr.bf16.mxu0 0
        %5375 = vmatpush1.bf16.msra.mxu0 %v5296
        %5376 = vmatprep.subr.bf16.mxu0 0
        %5377 = vmatpush2.bf16.msra.mxu0 %v5311
        %5378 = vmatprep.subr.bf16.mxu0 0
        %5379 = vmatpush2.bf16.msra.mxu0 %v5310
        %5380 = vmatprep.subr.bf16.mxu0 0
        %5381 = vmatpush2.bf16.msra.mxu0 %v5309
        %5382 = vmatprep.subr.bf16.mxu0 0
        %5383 = vmatpush2.bf16.msra.mxu0 %v5308
        %5384 = vmatprep.subr.bf16.mxu0 0
        %5385 = vmatpush2.bf16.msra.mxu0 %v5307
        %5386 = vmatprep.subr.bf16.mxu0 0
        %5387 = vmatpush2.bf16.msra.mxu0 %v5306
        %5388 = vmatprep.subr.bf16.mxu0 0
        %5389 = vmatpush2.bf16.msra.mxu0 %v5305
        %5390 = vmatprep.subr.bf16.mxu0 0
        %5391 = vmatpush2.bf16.msra.mxu0 %v5304
        %5392 = vmatprep.mubr.bf16.mxu0 %v5161
        %5393 = vmatmul.mubr.bf16.gmra.mxu0 %v5160
        %v5394 = vpop.f32.mrf.mxu0
        %v5395 = vadd.f32 0.0, %v5394
        %v5396 = vpop.f32.mrf.mxu0
        %v5397 = vpop.f32.mrf.mxu0
        %v5398 = vpop.f32.mrf.mxu0
        %5399 = vdwg.mxu0
        %5400 = vmatprep.subr.bf16.mxu0 0
        %5401 = vmatpush1.bf16.msra.mxu0 %v5319
        %5402 = vmatprep.subr.bf16.mxu0 0
        %5403 = vmatpush1.bf16.msra.mxu0 %v5318
        %5404 = vmatprep.subr.bf16.mxu0 0
        %5405 = vmatpush1.bf16.msra.mxu0 %v5317
        %5406 = vmatprep.subr.bf16.mxu0 0
        %5407 = vmatpush1.bf16.msra.mxu0 %v5316
        %5408 = vmatprep.subr.bf16.mxu0 0
        %5409 = vmatpush1.bf16.msra.mxu0 %v5315
        %5410 = vmatprep.subr.bf16.mxu0 0
        %5411 = vmatpush1.bf16.msra.mxu0 %v5314
        %5412 = vmatprep.subr.bf16.mxu0 0
        %5413 = vmatpush1.bf16.msra.mxu0 %v5313
        %5414 = vmatprep.subr.bf16.mxu0 0
        %5415 = vmatpush1.bf16.msra.mxu0 %v5312
        %5416 = vmatprep.subr.bf16.mxu0 0
        %5417 = vmatpush2.bf16.msra.mxu0 %v5327
        %5418 = vmatprep.subr.bf16.mxu0 0
        %5419 = vmatpush2.bf16.msra.mxu0 %v5326
        %5420 = vmatprep.subr.bf16.mxu0 0
        %5421 = vmatpush2.bf16.msra.mxu0 %v5325
        %5422 = vmatprep.subr.bf16.mxu0 0
        %5423 = vmatpush2.bf16.msra.mxu0 %v5324
        %5424 = vmatprep.subr.bf16.mxu0 0
        %5425 = vmatpush2.bf16.msra.mxu0 %v5323
        %5426 = vmatprep.subr.bf16.mxu0 0
        %5427 = vmatpush2.bf16.msra.mxu0 %v5322
        %5428 = vmatprep.subr.bf16.mxu0 0
        %5429 = vmatpush2.bf16.msra.mxu0 %v5321
        %5430 = vmatprep.subr.bf16.mxu0 0
        %5431 = vmatpush2.bf16.msra.mxu0 %v5320
        %5432 = vmatprep.mubr.bf16.mxu0 %v5163
        %5433 = vmatmul.mubr.bf16.gmra.mxu0 %v5162
        %v5434 = vpop.f32.mrf.mxu0
        %v5435 = vadd.f32 %v5395, %v5434
        %v5436 = vpop.f32.mrf.mxu0
        %v5437 = vpop.f32.mrf.mxu0
        %v5438 = vpop.f32.mrf.mxu0
        %5439 = vdwg.mxu0
        %v5440 = vadd.f32 %v5094, %v5435
        %s5441 = scalar_lea.vmem %s8, 1792
        %v5442 = vld [vmem:[%s5441] sm:$0xf]
        %v5443 = vld [vmem:[%s5441 + $0x4] sm:$0xf]
        %v5444 = vld [vmem:[%s5441 + $0x8] sm:$0xf]
        %v5445 = vld [vmem:[%s5441 + $0xc] sm:$0xf]
        %v5446 = vld [vmem:[%s5441 + $0x10] sm:$0xf]
        %v5447 = vld [vmem:[%s5441 + $0x14] sm:$0xf]
        %v5448 = vld [vmem:[%s5441 + $0x18] sm:$0xf]
        %v5449 = vld [vmem:[%s5441 + $0x1c] sm:$0xf]
        %v5450 = vld [vmem:[%s5441 + $0x20] sm:$0xf]
        %v5451 = vld [vmem:[%s5441 + $0x24] sm:$0xf]
        %v5452 = vld [vmem:[%s5441 + $0x28] sm:$0xf]
        %v5453 = vld [vmem:[%s5441 + $0x2c] sm:$0xf]
        %v5454 = vld [vmem:[%s5441 + $0x30] sm:$0xf]
        %v5455 = vld [vmem:[%s5441 + $0x34] sm:$0xf]
        %v5456 = vld [vmem:[%s5441 + $0x38] sm:$0xf]
        %v5457 = vld [vmem:[%s5441 + $0x3c] sm:$0xf]
        %v5458 = vld [vmem:[%s5441 + $0x40] sm:$0xf]
        %v5459 = vld [vmem:[%s5441 + $0x44] sm:$0xf]
        %v5460 = vld [vmem:[%s5441 + $0x48] sm:$0xf]
        %v5461 = vld [vmem:[%s5441 + $0x4c] sm:$0xf]
        %v5462 = vld [vmem:[%s5441 + $0x50] sm:$0xf]
        %v5463 = vld [vmem:[%s5441 + $0x54] sm:$0xf]
        %v5464 = vld [vmem:[%s5441 + $0x58] sm:$0xf]
        %v5465 = vld [vmem:[%s5441 + $0x5c] sm:$0xf]
        %v5466 = vld [vmem:[%s5441 + $0x60] sm:$0xf]
        %v5467 = vld [vmem:[%s5441 + $0x64] sm:$0xf]
        %v5468 = vld [vmem:[%s5441 + $0x68] sm:$0xf]
        %v5469 = vld [vmem:[%s5441 + $0x6c] sm:$0xf]
        %v5470 = vld [vmem:[%s5441 + $0x70] sm:$0xf]
        %v5471 = vld [vmem:[%s5441 + $0x74] sm:$0xf]
        %v5472 = vld [vmem:[%s5441 + $0x78] sm:$0xf]
        %v5473 = vld [vmem:[%s5441 + $0x7c] sm:$0xf]
        %v5474 = vld [vmem:[%s5441 + $0x80] sm:$0xf]
        %v5475 = vld [vmem:[%s5441 + $0x84] sm:$0xf]
        %v5476 = vld [vmem:[%s5441 + $0x88] sm:$0xf]
        %v5477 = vld [vmem:[%s5441 + $0x8c] sm:$0xf]
        %v5478 = vld [vmem:[%s5441 + $0x90] sm:$0xf]
        %v5479 = vld [vmem:[%s5441 + $0x94] sm:$0xf]
        %v5480 = vld [vmem:[%s5441 + $0x98] sm:$0xf]
        %v5481 = vld [vmem:[%s5441 + $0x9c] sm:$0xf]
        %v5482 = vld [vmem:[%s5441 + $0xa0] sm:$0xf]
        %v5483 = vld [vmem:[%s5441 + $0xa4] sm:$0xf]
        %v5484 = vld [vmem:[%s5441 + $0xa8] sm:$0xf]
        %v5485 = vld [vmem:[%s5441 + $0xac] sm:$0xf]
        %v5486 = vld [vmem:[%s5441 + $0xb0] sm:$0xf]
        %v5487 = vld [vmem:[%s5441 + $0xb4] sm:$0xf]
        %v5488 = vld [vmem:[%s5441 + $0xb8] sm:$0xf]
        %v5489 = vld [vmem:[%s5441 + $0xbc] sm:$0xf]
        %v5490 = vld [vmem:[%s5441 + $0xc0] sm:$0xf]
        %v5491 = vld [vmem:[%s5441 + $0xc4] sm:$0xf]
        %v5492 = vld [vmem:[%s5441 + $0xc8] sm:$0xf]
        %v5493 = vld [vmem:[%s5441 + $0xcc] sm:$0xf]
        %v5494 = vld [vmem:[%s5441 + $0xd0] sm:$0xf]
        %v5495 = vld [vmem:[%s5441 + $0xd4] sm:$0xf]
        %v5496 = vld [vmem:[%s5441 + $0xd8] sm:$0xf]
        %v5497 = vld [vmem:[%s5441 + $0xdc] sm:$0xf]
        %v5498 = vld [vmem:[%s5441 + $0xe0] sm:$0xf]
        %v5499 = vld [vmem:[%s5441 + $0xe4] sm:$0xf]
        %v5500 = vld [vmem:[%s5441 + $0xe8] sm:$0xf]
        %v5501 = vld [vmem:[%s5441 + $0xec] sm:$0xf]
        %v5502 = vld [vmem:[%s5441 + $0xf0] sm:$0xf]
        %v5503 = vld [vmem:[%s5441 + $0xf4] sm:$0xf]
        %v5504 = vld [vmem:[%s5441 + $0xf8] sm:$0xf]
        %v5505 = vld [vmem:[%s5441 + $0xfc] sm:$0xf]
        %v5506 = vrot.slane %v3419, 3
        %v5507 = vrot.slane %v3422, 3
        %v5508 = vrot.slane %v3425, 3
        %v5509 = vrot.slane %v3428, 3
        %v5578 = vunpack.c.l.b16 %v5442
        %v5579 = vunpack.c.l.b16 %v5443
        %v5580 = vunpack.c.l.b16 %v5444
        %v5581 = vunpack.c.l.b16 %v5445
        %v5582 = vunpack.c.l.b16 %v5446
        %v5583 = vunpack.c.l.b16 %v5447
        %v5584 = vunpack.c.l.b16 %v5448
        %v5585 = vunpack.c.l.b16 %v5449
        %v5586 = vunpack.c.l.b16 %v5450
        %v5587 = vunpack.c.l.b16 %v5451
        %v5588 = vunpack.c.l.b16 %v5452
        %v5589 = vunpack.c.l.b16 %v5453
        %v5590 = vunpack.c.l.b16 %v5454
        %v5591 = vunpack.c.l.b16 %v5455
        %v5592 = vunpack.c.l.b16 %v5456
        %v5593 = vunpack.c.l.b16 %v5457
        %v5594 = vunpack.c.l.b16 %v5458
        %v5595 = vunpack.c.l.b16 %v5459
        %v5596 = vunpack.c.l.b16 %v5460
        %v5597 = vunpack.c.l.b16 %v5461
        %v5598 = vunpack.c.l.b16 %v5462
        %v5599 = vunpack.c.l.b16 %v5463
        %v5600 = vunpack.c.l.b16 %v5464
        %v5601 = vunpack.c.l.b16 %v5465
        %v5602 = vunpack.c.l.b16 %v5466
        %v5603 = vunpack.c.l.b16 %v5467
        %v5604 = vunpack.c.l.b16 %v5468
        %v5605 = vunpack.c.l.b16 %v5469
        %v5606 = vunpack.c.l.b16 %v5470
        %v5607 = vunpack.c.l.b16 %v5471
        %v5608 = vunpack.c.l.b16 %v5472
        %v5609 = vunpack.c.l.b16 %v5473
        %v5610 = vunpack.c.l.b16 %v5474
        %v5611 = vunpack.c.l.b16 %v5475
        %v5612 = vunpack.c.l.b16 %v5476
        %v5613 = vunpack.c.l.b16 %v5477
        %v5614 = vunpack.c.l.b16 %v5478
        %v5615 = vunpack.c.l.b16 %v5479
        %v5616 = vunpack.c.l.b16 %v5480
        %v5617 = vunpack.c.l.b16 %v5481
        %v5618 = vunpack.c.l.b16 %v5482
        %v5619 = vunpack.c.l.b16 %v5483
        %v5620 = vunpack.c.l.b16 %v5484
        %v5621 = vunpack.c.l.b16 %v5485
        %v5622 = vunpack.c.l.b16 %v5486
        %v5623 = vunpack.c.l.b16 %v5487
        %v5624 = vunpack.c.l.b16 %v5488
        %v5625 = vunpack.c.l.b16 %v5489
        %v5626 = vunpack.c.l.b16 %v5490
        %v5627 = vunpack.c.l.b16 %v5491
        %v5628 = vunpack.c.l.b16 %v5492
        %v5629 = vunpack.c.l.b16 %v5493
        %v5630 = vunpack.c.l.b16 %v5494
        %v5631 = vunpack.c.l.b16 %v5495
        %v5632 = vunpack.c.l.b16 %v5496
        %v5633 = vunpack.c.l.b16 %v5497
        %v5634 = vunpack.c.l.b16 %v5498
        %v5635 = vunpack.c.l.b16 %v5499
        %v5636 = vunpack.c.l.b16 %v5500
        %v5637 = vunpack.c.l.b16 %v5501
        %v5638 = vunpack.c.l.b16 %v5502
        %v5639 = vunpack.c.l.b16 %v5503
        %v5640 = vunpack.c.l.b16 %v5504
        %v5641 = vunpack.c.l.b16 %v5505
        %v5642 = vpack.c.b16 %v5579, %v5578
        %v5643 = vpack.c.b16 %v5581, %v5580
        %v5644 = vpack.c.b16 %v5583, %v5582
        %v5645 = vpack.c.b16 %v5585, %v5584
        %v5646 = vpack.c.b16 %v5587, %v5586
        %v5647 = vpack.c.b16 %v5589, %v5588
        %v5648 = vpack.c.b16 %v5591, %v5590
        %v5649 = vpack.c.b16 %v5593, %v5592
        %v5650 = vpack.c.b16 %v5595, %v5594
        %v5651 = vpack.c.b16 %v5597, %v5596
        %v5652 = vpack.c.b16 %v5599, %v5598
        %v5653 = vpack.c.b16 %v5601, %v5600
        %v5654 = vpack.c.b16 %v5603, %v5602
        %v5655 = vpack.c.b16 %v5605, %v5604
        %v5656 = vpack.c.b16 %v5607, %v5606
        %v5657 = vpack.c.b16 %v5609, %v5608
        %v5658 = vpack.c.b16 %v5611, %v5610
        %v5659 = vpack.c.b16 %v5613, %v5612
        %v5660 = vpack.c.b16 %v5615, %v5614
        %v5661 = vpack.c.b16 %v5617, %v5616
        %v5662 = vpack.c.b16 %v5619, %v5618
        %v5663 = vpack.c.b16 %v5621, %v5620
        %v5664 = vpack.c.b16 %v5623, %v5622
        %v5665 = vpack.c.b16 %v5625, %v5624
        %v5666 = vpack.c.b16 %v5627, %v5626
        %v5667 = vpack.c.b16 %v5629, %v5628
        %v5668 = vpack.c.b16 %v5631, %v5630
        %v5669 = vpack.c.b16 %v5633, %v5632
        %v5670 = vpack.c.b16 %v5635, %v5634
        %v5671 = vpack.c.b16 %v5637, %v5636
        %v5672 = vpack.c.b16 %v5639, %v5638
        %v5673 = vpack.c.b16 %v5641, %v5640
        %5706 = vmatprep.subr.bf16.mxu0 0
        %5707 = vmatpush1.bf16.msra.mxu0 %v5649
        %5708 = vmatprep.subr.bf16.mxu0 0
        %5709 = vmatpush1.bf16.msra.mxu0 %v5648
        %5710 = vmatprep.subr.bf16.mxu0 0
        %5711 = vmatpush1.bf16.msra.mxu0 %v5647
        %5712 = vmatprep.subr.bf16.mxu0 0
        %5713 = vmatpush1.bf16.msra.mxu0 %v5646
        %5714 = vmatprep.subr.bf16.mxu0 0
        %5715 = vmatpush1.bf16.msra.mxu0 %v5645
        %5716 = vmatprep.subr.bf16.mxu0 0
        %5717 = vmatpush1.bf16.msra.mxu0 %v5644
        %5718 = vmatprep.subr.bf16.mxu0 0
        %5719 = vmatpush1.bf16.msra.mxu0 %v5643
        %5720 = vmatprep.subr.bf16.mxu0 0
        %5721 = vmatpush1.bf16.msra.mxu0 %v5642
        %5722 = vmatprep.subr.bf16.mxu0 0
        %5723 = vmatpush2.bf16.msra.mxu0 %v5657
        %5724 = vmatprep.subr.bf16.mxu0 0
        %5725 = vmatpush2.bf16.msra.mxu0 %v5656
        %5726 = vmatprep.subr.bf16.mxu0 0
        %5727 = vmatpush2.bf16.msra.mxu0 %v5655
        %5728 = vmatprep.subr.bf16.mxu0 0
        %5729 = vmatpush2.bf16.msra.mxu0 %v5654
        %5730 = vmatprep.subr.bf16.mxu0 0
        %5731 = vmatpush2.bf16.msra.mxu0 %v5653
        %5732 = vmatprep.subr.bf16.mxu0 0
        %5733 = vmatpush2.bf16.msra.mxu0 %v5652
        %5734 = vmatprep.subr.bf16.mxu0 0
        %5735 = vmatpush2.bf16.msra.mxu0 %v5651
        %5736 = vmatprep.subr.bf16.mxu0 0
        %5737 = vmatpush2.bf16.msra.mxu0 %v5650
        %5738 = vmatprep.mubr.bf16.mxu0 %v5507
        %5739 = vmatmul.mubr.bf16.gmra.mxu0 %v5506
        %v5740 = vpop.f32.mrf.mxu0
        %v5741 = vadd.f32 0.0, %v5740
        %v5742 = vpop.f32.mrf.mxu0
        %v5743 = vpop.f32.mrf.mxu0
        %v5744 = vpop.f32.mrf.mxu0
        %5745 = vdwg.mxu0
        %5746 = vmatprep.subr.bf16.mxu0 0
        %5747 = vmatpush1.bf16.msra.mxu0 %v5665
        %5748 = vmatprep.subr.bf16.mxu0 0
        %5749 = vmatpush1.bf16.msra.mxu0 %v5664
        %5750 = vmatprep.subr.bf16.mxu0 0
        %5751 = vmatpush1.bf16.msra.mxu0 %v5663
        %5752 = vmatprep.subr.bf16.mxu0 0
        %5753 = vmatpush1.bf16.msra.mxu0 %v5662
        %5754 = vmatprep.subr.bf16.mxu0 0
        %5755 = vmatpush1.bf16.msra.mxu0 %v5661
        %5756 = vmatprep.subr.bf16.mxu0 0
        %5757 = vmatpush1.bf16.msra.mxu0 %v5660
        %5758 = vmatprep.subr.bf16.mxu0 0
        %5759 = vmatpush1.bf16.msra.mxu0 %v5659
        %5760 = vmatprep.subr.bf16.mxu0 0
        %5761 = vmatpush1.bf16.msra.mxu0 %v5658
        %5762 = vmatprep.subr.bf16.mxu0 0
        %5763 = vmatpush2.bf16.msra.mxu0 %v5673
        %5764 = vmatprep.subr.bf16.mxu0 0
        %5765 = vmatpush2.bf16.msra.mxu0 %v5672
        %5766 = vmatprep.subr.bf16.mxu0 0
        %5767 = vmatpush2.bf16.msra.mxu0 %v5671
        %5768 = vmatprep.subr.bf16.mxu0 0
        %5769 = vmatpush2.bf16.msra.mxu0 %v5670
        %5770 = vmatprep.subr.bf16.mxu0 0
        %5771 = vmatpush2.bf16.msra.mxu0 %v5669
        %5772 = vmatprep.subr.bf16.mxu0 0
        %5773 = vmatpush2.bf16.msra.mxu0 %v5668
        %5774 = vmatprep.subr.bf16.mxu0 0
        %5775 = vmatpush2.bf16.msra.mxu0 %v5667
        %5776 = vmatprep.subr.bf16.mxu0 0
        %5777 = vmatpush2.bf16.msra.mxu0 %v5666
        %5778 = vmatprep.mubr.bf16.mxu0 %v5509
        %5779 = vmatmul.mubr.bf16.gmra.mxu0 %v5508
        %v5780 = vpop.f32.mrf.mxu0
        %v5781 = vadd.f32 %v5741, %v5780
        %v5782 = vpop.f32.mrf.mxu0
        %v5783 = vpop.f32.mrf.mxu0
        %v5784 = vpop.f32.mrf.mxu0
        %5785 = vdwg.mxu0
        %v5786 = vadd.f32 %v5440, %v5781
        %v5787 = vsub.f32 0.0, %v5786
        %v5788 = vmul.f32 %v5787, 1.442695
        %v5789 = vpow.pop %v5788
        %v5790 = vadd.f32 %v5789, 1.0
        %v5791 = vrcp.pop %v5790
        %v5792 = vmul.f32 1.0, %v5791
        %vm5793 = vcmask 57344
        %5794 = vst.msk [vmem:[%s349] sm:$0x1] %vm5793, %v5792
        %s5795 = sand.u32 %s247, 1
        %s5796 = scalar_lea.sflag [#allocation3], %s5795
        %s5797 = sand.u32 %s247, 1
        %s5798 = scalar_lea.vmem [#allocation2], %s5797
        // Predicated region
        $region61: #{gcn_forward_batched.1} parent=59 // pred_check
          %p5799 = pneg %p257
        $region62: #{gcn_forward_batched.1} parent=59 // pred_check_branch
          %5801 = sbr.rel (%p5799) target = $region64
        $region63: #{gcn_forward_batched.1} parent=59 // pred_region
          %s5803 = ssub.s32 16, 16
          %5804 = vsyncadd %s5796, %s5803
          %s5805 = smul.addr %s24, 16
          %s5806 = scalar_lea.hbm %s10, %s5805
          %s5808 = sshll.u32 %s5798, 4
          %s5809 = int_to_ptr.vmem [resolvable:$true] %s5808
          %5811 = dma.vmem_to_hbm [thread:$0]  %s5809, 16, %s5806, %s5796
        $region64: #{gcn_forward_batched.1} parent=59 // pred_fallthru
          _
      $region60: #{gcn_forward_batched.1} parent=5 // pred_fallthru
        _
      %p5812 = scmp.le.s32.totalorder 2, %s19
      // Predicated region
      $region65: #{gcn_forward_batched.1} parent=5 // pred_check
        %p5813 = pneg %p5812
      $region66: #{gcn_forward_batched.1} parent=5 // pred_check_branch
        %5815 = sbr.rel (%p5813) target = $region68
      $region67: #{gcn_forward_batched.1} parent=5 // pred_region
        %s5816 = ssub.s32 %s19, 2
        // Predicated region
        $region69: #{gcn_forward_batched.1} parent=67 // pred_check
          %p5817 = pneg %p263
        $region70: #{gcn_forward_batched.1} parent=67 // pred_check_branch
          %5819 = sbr.rel (%p5817) target = $region72
        $region71: #{gcn_forward_batched.1} parent=67 // pred_region
          %s5820 = sand.u32 %s248, 1
          %s5821 = scalar_lea.sflag [#allocation3], %s5820
          %s5822 = sand.u32 %s248, 1
          %s5823 = scalar_lea.vmem [#allocation2], %s5822
          %5824 = dma.done %s5821, 16
        $region72: #{gcn_forward_batched.1} parent=67 // pred_fallthru
          _
      $region68: #{gcn_forward_batched.1} parent=5 // pred_fallthru
        _
    $region6: #{gcn_forward_batched.1} parent=1 // loop_footer
      %s23 = sadd.s32 1, %s19
    $region7: #{gcn_forward_batched.1} parent=1 // loop_footer_branch
      %18 = sbr.rel target = $region3
    $region8: #{gcn_forward_batched.1} parent=1 // loop_exit
      _
    %5825 = vsyncpa [#allocation3], 1
    %s5826 = scalar_lea.sflag [#allocation3], 1
    %5827 = vsyncpa %s5826, 1

</llo_original>
